<compile_context>
chip_gen: v7x
topology: tpu7x:2x2x1
jax: 0.10.0
libtpu: 0.0.40
codegen_flags: <defaults>
</compile_context>

<pallas_src>
import jax
import jax.numpy as jnp
from jax.experimental import pallas as pl
from jax.experimental.pallas import tpu as pltpu

C_OUT = 3
KSIZE = 85
STRIDE = 32
L_OUT = 37
L_IN = (L_OUT - 1) * STRIDE + KSIZE      # 1237
FLAT = C_OUT * L_OUT                     # 111
BN_EPS = 1e-5


# ---------------- fused Pallas kernel ----------------

def _fused_kernel(x_ref, wc_ref, shift_ref, w1_ref, b1_ref, w2_ref, b2_ref,
                  w3_ref, b3_ref, o_ref):
  # x_ref:     (bn, 1237)  raw signal tile
  # wc_ref:    (85, 3)     conv weight (transposed), BN scale folded in
  # shift_ref: (1, 111)    BN shift (+conv bias) tiled to flatten order
  # w1_ref:    (111, 20)   fc1 weight, rows pre-permuted to kernel flatten order
  # b*_ref:    (1, K)      fc biases
  # o_ref:     (bn, 2)     logits
  wc = wc_ref[...]

  # In-kernel im2col: one small MXU dot per conv output position.  Pieces are
  # concatenated along lanes in (position-major, channel-minor) order.
  pieces = []
  for j in range(L_OUT):                                  # static unroll (37)
    patch = x_ref[:, j * STRIDE:j * STRIDE + KSIZE]       # (bn, 85) static slice
    pieces.append(jnp.dot(patch, wc, preferred_element_type=jnp.float32))
  conv = jnp.concatenate(pieces, axis=1)                  # (bn, 111)

  h = jnp.maximum(conv + shift_ref[...], 0.0)             # BN shift + ReLU
  # dropout1 / dropout2 are identity in eval mode.
  h = jnp.maximum(
      jnp.dot(h, w1_ref[...], preferred_element_type=jnp.float32) + b1_ref[...],
      0.0)
  h = jnp.maximum(
      jnp.dot(h, w2_ref[...], preferred_element_type=jnp.float32) + b2_ref[...],
      0.0)
  o_ref[...] = (jnp.dot(h, w3_ref[...], preferred_element_type=jnp.float32)
                + b3_ref[...])


# ---------------- one-time weight preprocessing ----------------

def prepare_params(params):
  """Fold BN, transpose/permute weights.  Call once, outside the hot path."""
  scale = params["bn_gamma"] / jnp.sqrt(params["bn_var"] + BN_EPS)        # (3,)
  shift = params["bn_beta"] + (params["conv_b"] - params["bn_mean"]) * scale

  # Conv weight (out,in,k) -> (k, out), with BN scale folded in.
  wc = jnp.transpose(params["conv_w"][:, 0, :] * scale[:, None])          # (85,3)
  # Kernel flatten order is j-major / c-minor: shift[j*3 + c] = shift[c].
  shift_row = jnp.tile(shift, (L_OUT,)).reshape(1, FLAT)                  # (1,111)

  # fc1 rows: PyTorch flatten index is c*37+j; kernel produces j*3+c.
  w1p = (jnp.transpose(params["fc1_w"])            # (111,20), rows = c*37+j
         .reshape(C_OUT, L_OUT, 20)
         .transpose(1, 0, 2)
         .reshape(FLAT, 20))                       # rows = j*3+c

  return {
      "wc": wc, "shift": shift_row,
      "w1": w1p, "b1": params["fc1_b"].reshape(1, 20),
      "w2": jnp.transpose(params["fc2_w"]), "b2": params["fc2_b"].reshape(1, 10),
      "w3": jnp.transpose(params["fc3_w"]), "b3": params["fc3_b"].reshape(1, 2),
  }


# ---------------- wrapper ----------------

def _pick_batch_tile(n):
  # multiples of 8 rows (sublane-aligned); whole batch if it is small/odd.
  for cand in (512, 256, 128, 64, 32, 16, 8):
    if n % cand == 0:
      return cand
  return n


def iegm_forward(x, kp):
  """x: (N, 1, 1237) float32 (PyTorch NCW).  Returns (N, 2) logits."""
  n = x.shape[0]
  x2d = x.reshape(n, L_IN)                     # drop singleton channel (no-op)
  bn = _pick_batch_tile(n)
  grid = (n // bn,)

  def batch_spec(shape):                       # tiled over the batch axis
    return pl.BlockSpec((bn,) + shape[1:],
                        lambda i: (i,) + (0,) * (len(shape) - 1))

  def rep_spec(shape):                         # whole array, resident weights
    return pl.BlockSpec(shape, lambda i: (0,) * len(shape))

  return pl.pallas_call(
      _fused_kernel,
      out_shape=jax.ShapeDtypeStruct((n, 2), jnp.float32),
      grid=grid,
      in_specs=[
          batch_spec((n, L_IN)),
          rep_spec((KSIZE, C_OUT)),
          rep_spec((1, FLAT)),
          rep_spec((FLAT, 20)), rep_spec((1, 20)),
          rep_spec((20, 10)), rep_spec((1, 10)),
          rep_spec((10, 2)), rep_spec((1, 2)),
      ],
      out_specs=batch_spec((n, 2)),
      compiler_params=pltpu.CompilerParams(
          dimension_semantics=("parallel",)),
  )(x2d, kp["wc"], kp["shift"], kp["w1"], kp["b1"],
    kp["w2"], kp["b2"], kp["w3"], kp["b3"])


# ---------------- deterministic parameter init ----------------

def init_params(key):
  ks = jax.random.split(key, 12)

  def u(k, shape, fan_in):
    bound = 1.0 / jnp.sqrt(fan_in)
    return jax.random.uniform(k, shape, jnp.float32, -bound, bound)

  return {
      # Conv1d(1, 3, kernel_size=85): weight (out, in, k)
      "conv_w": u(ks[0], (C_OUT, 1, KSIZE), 1 * KSIZE),
      "conv_b": u(ks[1], (C_OUT,), 1 * KSIZE),
      # BatchNorm1d(3) — eval-mode running stats (non-trivial, to test folding)
      "bn_gamma": 1.0 + 0.1 * jax.random.normal(ks[2], (C_OUT,), jnp.float32),
      "bn_beta": 0.1 * jax.random.normal(ks[3], (C_OUT,), jnp.float32),
      "bn_mean": 0.1 * jax.random.normal(ks[4], (C_OUT,), jnp.float32),
      "bn_var": jax.random.uniform(ks[5], (C_OUT,), jnp.float32, 0.5, 1.5),
      # Linear layers, PyTorch layout (out, in)
      "fc1_w": u(ks[6], (20, FLAT), FLAT), "fc1_b": u(ks[7], (20,), FLAT),
      "fc2_w": u(ks[8], (10, 20), 20),     "fc2_b": u(ks[9], (10,), 20),
      "fc3_w": u(ks[10], (2, 10), 10),     "fc3_b": u(ks[11], (2,), 10),
  }


# ---------------- pure-JAX reference (for verification) ----------------

def reference_forward(x, params):
  conv = jax.lax.conv_general_dilated(
      x, params["conv_w"], window_strides=(STRIDE,), padding="VALID",
      dimension_numbers=("NCH", "OIH", "NCH"))
  conv = conv + params["conv_b"][None, :, None]
  bn = ((conv - params["bn_mean"][None, :, None])
        / jnp.sqrt(params["bn_var"][None, :, None] + BN_EPS)
        * params["bn_gamma"][None, :, None]
        + params["bn_beta"][None, :, None])
  h = jnp.maximum(bn, 0.0).reshape(x.shape[0], FLAT)   # PyTorch channel-major flatten
  h = jnp.maximum(h @ params["fc1_w"].T + params["fc1_b"], 0.0)
  h = jnp.maximum(h @ params["fc2_w"].T + params["fc2_b"], 0.0)
  return h @ params["fc3_w"].T + params["fc3_b"]


if __name__ == "__main__":
  key = jax.random.PRNGKey(0)
  k_x, k_p = jax.random.split(key)

  # Input length is fixed by the module: (37-1)*32 + 85 = 1237.  Batch = 2.
  x = jax.random.normal(k_x, (2, 1, L_IN), dtype=jnp.float32)
  params = init_params(k_p)

  kparams = prepare_params(params)        # one-time weight preprocessing
  fwd = jax.jit(iegm_forward)

  out = jax.block_until_ready(fwd(x, kparams))
  ref = jax.block_until_ready(reference_forward(x, params))

  assert out.shape == (2, 2), out.shape
  assert jnp.allclose(out, ref, atol=5e-4, rtol=5e-4), (out, ref)
  print("KERNEL_OK")
</pallas_src>

<mosaic_0001>
module attributes {stable_mosaic.version = 11 : i64} {
  func.func @_fused_kernel(%arg0: i32, %arg1: memref<2x1237xf32, #tpu.memory_space<vmem>>, %arg2: memref<85x3xf32, #tpu.memory_space<vmem>>, %arg3: memref<1x111xf32, #tpu.memory_space<vmem>>, %arg4: memref<111x20xf32, #tpu.memory_space<vmem>>, %arg5: memref<1x20xf32, #tpu.memory_space<vmem>>, %arg6: memref<20x10xf32, #tpu.memory_space<vmem>>, %arg7: memref<1x10xf32, #tpu.memory_space<vmem>>, %arg8: memref<10x2xf32, #tpu.memory_space<vmem>>, %arg9: memref<1x2xf32, #tpu.memory_space<vmem>>, %arg10: memref<2x2xf32, #tpu.memory_space<vmem>>) attributes {dimension_semantics = [#tpu.dimension_semantics<parallel>], iteration_bounds = array<i64: 1>, scalar_prefetch = 0 : i64, scratch_operands = 0 : i64, tpu.core_type = #tpu.core_type<tc>, window_params = [{transform_indices = @transform_0, window_bounds = array<i64: 2, 1237>}, {pipeline_mode = #tpu.pipeline_mode<synchronous>, transform_indices = @transform_1, window_bounds = array<i64: 85, 3>}, {pipeline_mode = #tpu.pipeline_mode<synchronous>, transform_indices = @transform_2, window_bounds = array<i64: 1, 111>}, {pipeline_mode = #tpu.pipeline_mode<synchronous>, transform_indices = @transform_3, window_bounds = array<i64: 111, 20>}, {pipeline_mode = #tpu.pipeline_mode<synchronous>, transform_indices = @transform_4, window_bounds = array<i64: 1, 20>}, {pipeline_mode = #tpu.pipeline_mode<synchronous>, transform_indices = @transform_5, window_bounds = array<i64: 20, 10>}, {pipeline_mode = #tpu.pipeline_mode<synchronous>, transform_indices = @transform_6, window_bounds = array<i64: 1, 10>}, {pipeline_mode = #tpu.pipeline_mode<synchronous>, transform_indices = @transform_7, window_bounds = array<i64: 10, 2>}, {pipeline_mode = #tpu.pipeline_mode<synchronous>, transform_indices = @transform_8, window_bounds = array<i64: 1, 2>}, {transform_indices = @transform_9, window_bounds = array<i64: 2, 2>}]} {
    %c0 = arith.constant 0 : index
    %c0_0 = arith.constant 0 : index
    %0 = vector.load %arg2[%c0, %c0_0] : memref<85x3xf32, #tpu.memory_space<vmem>>, vector<85x3xf32>
    %c0_1 = arith.constant 0 : index
    %c0_2 = arith.constant 0 : index
    %1 = vector.load %arg1[%c0_1, %c0_2] : memref<2x1237xf32, #tpu.memory_space<vmem>>, vector<2x85xf32>
    %cst = arith.constant dense<0.000000e+00> : vector<2x3xf32>
    %2 = tpu.matmul %1, %0, %cst {dimension_numbers = #tpu.dot_dimension_numbers<[1], [0], [0], [1], [0, 0, 1, 1], [], []>} : vector<2x85xf32>, vector<85x3xf32>, vector<2x3xf32> -> vector<2x3xf32>
    %c0_3 = arith.constant 0 : index
    %c32 = arith.constant 32 : index
    %3 = vector.load %arg1[%c0_3, %c32] : memref<2x1237xf32, #tpu.memory_space<vmem>>, vector<2x85xf32>
    %cst_4 = arith.constant dense<0.000000e+00> : vector<2x3xf32>
    %4 = tpu.matmul %3, %0, %cst_4 {dimension_numbers = #tpu.dot_dimension_numbers<[1], [0], [0], [1], [0, 0, 1, 1], [], []>} : vector<2x85xf32>, vector<85x3xf32>, vector<2x3xf32> -> vector<2x3xf32>
    %c0_5 = arith.constant 0 : index
    %c64 = arith.constant 64 : index
    %5 = vector.load %arg1[%c0_5, %c64] : memref<2x1237xf32, #tpu.memory_space<vmem>>, vector<2x85xf32>
    %cst_6 = arith.constant dense<0.000000e+00> : vector<2x3xf32>
    %6 = tpu.matmul %5, %0, %cst_6 {dimension_numbers = #tpu.dot_dimension_numbers<[1], [0], [0], [1], [0, 0, 1, 1], [], []>} : vector<2x85xf32>, vector<85x3xf32>, vector<2x3xf32> -> vector<2x3xf32>
    %c0_7 = arith.constant 0 : index
    %c96 = arith.constant 96 : index
    %7 = vector.load %arg1[%c0_7, %c96] : memref<2x1237xf32, #tpu.memory_space<vmem>>, vector<2x85xf32>
    %cst_8 = arith.constant dense<0.000000e+00> : vector<2x3xf32>
    %8 = tpu.matmul %7, %0, %cst_8 {dimension_numbers = #tpu.dot_dimension_numbers<[1], [0], [0], [1], [0, 0, 1, 1], [], []>} : vector<2x85xf32>, vector<85x3xf32>, vector<2x3xf32> -> vector<2x3xf32>
    %c0_9 = arith.constant 0 : index
    %c128 = arith.constant 128 : index
    %9 = vector.load %arg1[%c0_9, %c128] : memref<2x1237xf32, #tpu.memory_space<vmem>>, vector<2x85xf32>
    %cst_10 = arith.constant dense<0.000000e+00> : vector<2x3xf32>
    %10 = tpu.matmul %9, %0, %cst_10 {dimension_numbers = #tpu.dot_dimension_numbers<[1], [0], [0], [1], [0, 0, 1, 1], [], []>} : vector<2x85xf32>, vector<85x3xf32>, vector<2x3xf32> -> vector<2x3xf32>
    %c0_11 = arith.constant 0 : index
    %c160 = arith.constant 160 : index
    %11 = vector.load %arg1[%c0_11, %c160] : memref<2x1237xf32, #tpu.memory_space<vmem>>, vector<2x85xf32>
    %cst_12 = arith.constant dense<0.000000e+00> : vector<2x3xf32>
    %12 = tpu.matmul %11, %0, %cst_12 {dimension_numbers = #tpu.dot_dimension_numbers<[1], [0], [0], [1], [0, 0, 1, 1], [], []>} : vector<2x85xf32>, vector<85x3xf32>, vector<2x3xf32> -> vector<2x3xf32>
    %c0_13 = arith.constant 0 : index
    %c192 = arith.constant 192 : index
    %13 = vector.load %arg1[%c0_13, %c192] : memref<2x1237xf32, #tpu.memory_space<vmem>>, vector<2x85xf32>
    %cst_14 = arith.constant dense<0.000000e+00> : vector<2x3xf32>
    %14 = tpu.matmul %13, %0, %cst_14 {dimension_numbers = #tpu.dot_dimension_numbers<[1], [0], [0], [1], [0, 0, 1, 1], [], []>} : vector<2x85xf32>, vector<85x3xf32>, vector<2x3xf32> -> vector<2x3xf32>
    %c0_15 = arith.constant 0 : index
    %c224 = arith.constant 224 : index
    %15 = vector.load %arg1[%c0_15, %c224] : memref<2x1237xf32, #tpu.memory_space<vmem>>, vector<2x85xf32>
    %cst_16 = arith.constant dense<0.000000e+00> : vector<2x3xf32>
    %16 = tpu.matmul %15, %0, %cst_16 {dimension_numbers = #tpu.dot_dimension_numbers<[1], [0], [0], [1], [0, 0, 1, 1], [], []>} : vector<2x85xf32>, vector<85x3xf32>, vector<2x3xf32> -> vector<2x3xf32>
    %c0_17 = arith.constant 0 : index
    %c256 = arith.constant 256 : index
    %17 = vector.load %arg1[%c0_17, %c256] : memref<2x1237xf32, #tpu.memory_space<vmem>>, vector<2x85xf32>
    %cst_18 = arith.constant dense<0.000000e+00> : vector<2x3xf32>
    %18 = tpu.matmul %17, %0, %cst_18 {dimension_numbers = #tpu.dot_dimension_numbers<[1], [0], [0], [1], [0, 0, 1, 1], [], []>} : vector<2x85xf32>, vector<85x3xf32>, vector<2x3xf32> -> vector<2x3xf32>
    %c0_19 = arith.constant 0 : index
    %c288 = arith.constant 288 : index
    %19 = vector.load %arg1[%c0_19, %c288] : memref<2x1237xf32, #tpu.memory_space<vmem>>, vector<2x85xf32>
    %cst_20 = arith.constant dense<0.000000e+00> : vector<2x3xf32>
    %20 = tpu.matmul %19, %0, %cst_20 {dimension_numbers = #tpu.dot_dimension_numbers<[1], [0], [0], [1], [0, 0, 1, 1], [], []>} : vector<2x85xf32>, vector<85x3xf32>, vector<2x3xf32> -> vector<2x3xf32>
    %c0_21 = arith.constant 0 : index
    %c320 = arith.constant 320 : index
    %21 = vector.load %arg1[%c0_21, %c320] : memref<2x1237xf32, #tpu.memory_space<vmem>>, vector<2x85xf32>
    %cst_22 = arith.constant dense<0.000000e+00> : vector<2x3xf32>
    %22 = tpu.matmul %21, %0, %cst_22 {dimension_numbers = #tpu.dot_dimension_numbers<[1], [0], [0], [1], [0, 0, 1, 1], [], []>} : vector<2x85xf32>, vector<85x3xf32>, vector<2x3xf32> -> vector<2x3xf32>
    %c0_23 = arith.constant 0 : index
    %c352 = arith.constant 352 : index
    %23 = vector.load %arg1[%c0_23, %c352] : memref<2x1237xf32, #tpu.memory_space<vmem>>, vector<2x85xf32>
    %cst_24 = arith.constant dense<0.000000e+00> : vector<2x3xf32>
    %24 = tpu.matmul %23, %0, %cst_24 {dimension_numbers = #tpu.dot_dimension_numbers<[1], [0], [0], [1], [0, 0, 1, 1], [], []>} : vector<2x85xf32>, vector<85x3xf32>, vector<2x3xf32> -> vector<2x3xf32>
    %c0_25 = arith.constant 0 : index
    %c384 = arith.constant 384 : index
    %25 = vector.load %arg1[%c0_25, %c384] : memref<2x1237xf32, #tpu.memory_space<vmem>>, vector<2x85xf32>
    %cst_26 = arith.constant dense<0.000000e+00> : vector<2x3xf32>
    %26 = tpu.matmul %25, %0, %cst_26 {dimension_numbers = #tpu.dot_dimension_numbers<[1], [0], [0], [1], [0, 0, 1, 1], [], []>} : vector<2x85xf32>, vector<85x3xf32>, vector<2x3xf32> -> vector<2x3xf32>
    %c0_27 = arith.constant 0 : index
    %c416 = arith.constant 416 : index
    %27 = vector.load %arg1[%c0_27, %c416] : memref<2x1237xf32, #tpu.memory_space<vmem>>, vector<2x85xf32>
    %cst_28 = arith.constant dense<0.000000e+00> : vector<2x3xf32>
    %28 = tpu.matmul %27, %0, %cst_28 {dimension_numbers = #tpu.dot_dimension_numbers<[1], [0], [0], [1], [0, 0, 1, 1], [], []>} : vector<2x85xf32>, vector<85x3xf32>, vector<2x3xf32> -> vector<2x3xf32>
    %c0_29 = arith.constant 0 : index
    %c448 = arith.constant 448 : index
    %29 = vector.load %arg1[%c0_29, %c448] : memref<2x1237xf32, #tpu.memory_space<vmem>>, vector<2x85xf32>
    %cst_30 = arith.constant dense<0.000000e+00> : vector<2x3xf32>
    %30 = tpu.matmul %29, %0, %cst_30 {dimension_numbers = #tpu.dot_dimension_numbers<[1], [0], [0], [1], [0, 0, 1, 1], [], []>} : vector<2x85xf32>, vector<85x3xf32>, vector<2x3xf32> -> vector<2x3xf32>
    %c0_31 = arith.constant 0 : index
    %c480 = arith.constant 480 : index
    %31 = vector.load %arg1[%c0_31, %c480] : memref<2x1237xf32, #tpu.memory_space<vmem>>, vector<2x85xf32>
    %cst_32 = arith.constant dense<0.000000e+00> : vector<2x3xf32>
    %32 = tpu.matmul %31, %0, %cst_32 {dimension_numbers = #tpu.dot_dimension_numbers<[1], [0], [0], [1], [0, 0, 1, 1], [], []>} : vector<2x85xf32>, vector<85x3xf32>, vector<2x3xf32> -> vector<2x3xf32>
    %c0_33 = arith.constant 0 : index
    %c512 = arith.constant 512 : index
    %33 = vector.load %arg1[%c0_33, %c512] : memref<2x1237xf32, #tpu.memory_space<vmem>>, vector<2x85xf32>
    %cst_34 = arith.constant dense<0.000000e+00> : vector<2x3xf32>
    %34 = tpu.matmul %33, %0, %cst_34 {dimension_numbers = #tpu.dot_dimension_numbers<[1], [0], [0], [1], [0, 0, 1, 1], [], []>} : vector<2x85xf32>, vector<85x3xf32>, vector<2x3xf32> -> vector<2x3xf32>
    %c0_35 = arith.constant 0 : index
    %c544 = arith.constant 544 : index
    %35 = vector.load %arg1[%c0_35, %c544] : memref<2x1237xf32, #tpu.memory_space<vmem>>, vector<2x85xf32>
    %cst_36 = arith.constant dense<0.000000e+00> : vector<2x3xf32>
    %36 = tpu.matmul %35, %0, %cst_36 {dimension_numbers = #tpu.dot_dimension_numbers<[1], [0], [0], [1], [0, 0, 1, 1], [], []>} : vector<2x85xf32>, vector<85x3xf32>, vector<2x3xf32> -> vector<2x3xf32>
    %c0_37 = arith.constant 0 : index
    %c576 = arith.constant 576 : index
    %37 = vector.load %arg1[%c0_37, %c576] : memref<2x1237xf32, #tpu.memory_space<vmem>>, vector<2x85xf32>
    %cst_38 = arith.constant dense<0.000000e+00> : vector<2x3xf32>
    %38 = tpu.matmul %37, %0, %cst_38 {dimension_numbers = #tpu.dot_dimension_numbers<[1], [0], [0], [1], [0, 0, 1, 1], [], []>} : vector<2x85xf32>, vector<85x3xf32>, vector<2x3xf32> -> vector<2x3xf32>
    %c0_39 = arith.constant 0 : index
    %c608 = arith.constant 608 : index
    %39 = vector.load %arg1[%c0_39, %c608] : memref<2x1237xf32, #tpu.memory_space<vmem>>, vector<2x85xf32>
    %cst_40 = arith.constant dense<0.000000e+00> : vector<2x3xf32>
    %40 = tpu.matmul %39, %0, %cst_40 {dimension_numbers = #tpu.dot_dimension_numbers<[1], [0], [0], [1], [0, 0, 1, 1], [], []>} : vector<2x85xf32>, vector<85x3xf32>, vector<2x3xf32> -> vector<2x3xf32>
    %c0_41 = arith.constant 0 : index
    %c640 = arith.constant 640 : index
    %41 = vector.load %arg1[%c0_41, %c640] : memref<2x1237xf32, #tpu.memory_space<vmem>>, vector<2x85xf32>
    %cst_42 = arith.constant dense<0.000000e+00> : vector<2x3xf32>
    %42 = tpu.matmul %41, %0, %cst_42 {dimension_numbers = #tpu.dot_dimension_numbers<[1], [0], [0], [1], [0, 0, 1, 1], [], []>} : vector<2x85xf32>, vector<85x3xf32>, vector<2x3xf32> -> vector<2x3xf32>
    %c0_43 = arith.constant 0 : index
    %c672 = arith.constant 672 : index
    %43 = vector.load %arg1[%c0_43, %c672] : memref<2x1237xf32, #tpu.memory_space<vmem>>, vector<2x85xf32>
    %cst_44 = arith.constant dense<0.000000e+00> : vector<2x3xf32>
    %44 = tpu.matmul %43, %0, %cst_44 {dimension_numbers = #tpu.dot_dimension_numbers<[1], [0], [0], [1], [0, 0, 1, 1], [], []>} : vector<2x85xf32>, vector<85x3xf32>, vector<2x3xf32> -> vector<2x3xf32>
    %c0_45 = arith.constant 0 : index
    %c704 = arith.constant 704 : index
    %45 = vector.load %arg1[%c0_45, %c704] : memref<2x1237xf32, #tpu.memory_space<vmem>>, vector<2x85xf32>
    %cst_46 = arith.constant dense<0.000000e+00> : vector<2x3xf32>
    %46 = tpu.matmul %45, %0, %cst_46 {dimension_numbers = #tpu.dot_dimension_numbers<[1], [0], [0], [1], [0, 0, 1, 1], [], []>} : vector<2x85xf32>, vector<85x3xf32>, vector<2x3xf32> -> vector<2x3xf32>
    %c0_47 = arith.constant 0 : index
    %c736 = arith.constant 736 : index
    %47 = vector.load %arg1[%c0_47, %c736] : memref<2x1237xf32, #tpu.memory_space<vmem>>, vector<2x85xf32>
    %cst_48 = arith.constant dense<0.000000e+00> : vector<2x3xf32>
    %48 = tpu.matmul %47, %0, %cst_48 {dimension_numbers = #tpu.dot_dimension_numbers<[1], [0], [0], [1], [0, 0, 1, 1], [], []>} : vector<2x85xf32>, vector<85x3xf32>, vector<2x3xf32> -> vector<2x3xf32>
    %c0_49 = arith.constant 0 : index
    %c768 = arith.constant 768 : index
    %49 = vector.load %arg1[%c0_49, %c768] : memref<2x1237xf32, #tpu.memory_space<vmem>>, vector<2x85xf32>
    %cst_50 = arith.constant dense<0.000000e+00> : vector<2x3xf32>
    %50 = tpu.matmul %49, %0, %cst_50 {dimension_numbers = #tpu.dot_dimension_numbers<[1], [0], [0], [1], [0, 0, 1, 1], [], []>} : vector<2x85xf32>, vector<85x3xf32>, vector<2x3xf32> -> vector<2x3xf32>
    %c0_51 = arith.constant 0 : index
    %c800 = arith.constant 800 : index
    %51 = vector.load %arg1[%c0_51, %c800] : memref<2x1237xf32, #tpu.memory_space<vmem>>, vector<2x85xf32>
    %cst_52 = arith.constant dense<0.000000e+00> : vector<2x3xf32>
    %52 = tpu.matmul %51, %0, %cst_52 {dimension_numbers = #tpu.dot_dimension_numbers<[1], [0], [0], [1], [0, 0, 1, 1], [], []>} : vector<2x85xf32>, vector<85x3xf32>, vector<2x3xf32> -> vector<2x3xf32>
    %c0_53 = arith.constant 0 : index
    %c832 = arith.constant 832 : index
    %53 = vector.load %arg1[%c0_53, %c832] : memref<2x1237xf32, #tpu.memory_space<vmem>>, vector<2x85xf32>
    %cst_54 = arith.constant dense<0.000000e+00> : vector<2x3xf32>
    %54 = tpu.matmul %53, %0, %cst_54 {dimension_numbers = #tpu.dot_dimension_numbers<[1], [0], [0], [1], [0, 0, 1, 1], [], []>} : vector<2x85xf32>, vector<85x3xf32>, vector<2x3xf32> -> vector<2x3xf32>
    %c0_55 = arith.constant 0 : index
    %c864 = arith.constant 864 : index
    %55 = vector.load %arg1[%c0_55, %c864] : memref<2x1237xf32, #tpu.memory_space<vmem>>, vector<2x85xf32>
    %cst_56 = arith.constant dense<0.000000e+00> : vector<2x3xf32>
    %56 = tpu.matmul %55, %0, %cst_56 {dimension_numbers = #tpu.dot_dimension_numbers<[1], [0], [0], [1], [0, 0, 1, 1], [], []>} : vector<2x85xf32>, vector<85x3xf32>, vector<2x3xf32> -> vector<2x3xf32>
    %c0_57 = arith.constant 0 : index
    %c896 = arith.constant 896 : index
    %57 = vector.load %arg1[%c0_57, %c896] : memref<2x1237xf32, #tpu.memory_space<vmem>>, vector<2x85xf32>
    %cst_58 = arith.constant dense<0.000000e+00> : vector<2x3xf32>
    %58 = tpu.matmul %57, %0, %cst_58 {dimension_numbers = #tpu.dot_dimension_numbers<[1], [0], [0], [1], [0, 0, 1, 1], [], []>} : vector<2x85xf32>, vector<85x3xf32>, vector<2x3xf32> -> vector<2x3xf32>
    %c0_59 = arith.constant 0 : index
    %c928 = arith.constant 928 : index
    %59 = vector.load %arg1[%c0_59, %c928] : memref<2x1237xf32, #tpu.memory_space<vmem>>, vector<2x85xf32>
    %cst_60 = arith.constant dense<0.000000e+00> : vector<2x3xf32>
    %60 = tpu.matmul %59, %0, %cst_60 {dimension_numbers = #tpu.dot_dimension_numbers<[1], [0], [0], [1], [0, 0, 1, 1], [], []>} : vector<2x85xf32>, vector<85x3xf32>, vector<2x3xf32> -> vector<2x3xf32>
    %c0_61 = arith.constant 0 : index
    %c960 = arith.constant 960 : index
    %61 = vector.load %arg1[%c0_61, %c960] : memref<2x1237xf32, #tpu.memory_space<vmem>>, vector<2x85xf32>
    %cst_62 = arith.constant dense<0.000000e+00> : vector<2x3xf32>
    %62 = tpu.matmul %61, %0, %cst_62 {dimension_numbers = #tpu.dot_dimension_numbers<[1], [0], [0], [1], [0, 0, 1, 1], [], []>} : vector<2x85xf32>, vector<85x3xf32>, vector<2x3xf32> -> vector<2x3xf32>
    %c0_63 = arith.constant 0 : index
    %c992 = arith.constant 992 : index
    %63 = vector.load %arg1[%c0_63, %c992] : memref<2x1237xf32, #tpu.memory_space<vmem>>, vector<2x85xf32>
    %cst_64 = arith.constant dense<0.000000e+00> : vector<2x3xf32>
    %64 = tpu.matmul %63, %0, %cst_64 {dimension_numbers = #tpu.dot_dimension_numbers<[1], [0], [0], [1], [0, 0, 1, 1], [], []>} : vector<2x85xf32>, vector<85x3xf32>, vector<2x3xf32> -> vector<2x3xf32>
    %c0_65 = arith.constant 0 : index
    %c1024 = arith.constant 1024 : index
    %65 = vector.load %arg1[%c0_65, %c1024] : memref<2x1237xf32, #tpu.memory_space<vmem>>, vector<2x85xf32>
    %cst_66 = arith.constant dense<0.000000e+00> : vector<2x3xf32>
    %66 = tpu.matmul %65, %0, %cst_66 {dimension_numbers = #tpu.dot_dimension_numbers<[1], [0], [0], [1], [0, 0, 1, 1], [], []>} : vector<2x85xf32>, vector<85x3xf32>, vector<2x3xf32> -> vector<2x3xf32>
    %c0_67 = arith.constant 0 : index
    %c1056 = arith.constant 1056 : index
    %67 = vector.load %arg1[%c0_67, %c1056] : memref<2x1237xf32, #tpu.memory_space<vmem>>, vector<2x85xf32>
    %cst_68 = arith.constant dense<0.000000e+00> : vector<2x3xf32>
    %68 = tpu.matmul %67, %0, %cst_68 {dimension_numbers = #tpu.dot_dimension_numbers<[1], [0], [0], [1], [0, 0, 1, 1], [], []>} : vector<2x85xf32>, vector<85x3xf32>, vector<2x3xf32> -> vector<2x3xf32>
    %c0_69 = arith.constant 0 : index
    %c1088 = arith.constant 1088 : index
    %69 = vector.load %arg1[%c0_69, %c1088] : memref<2x1237xf32, #tpu.memory_space<vmem>>, vector<2x85xf32>
    %cst_70 = arith.constant dense<0.000000e+00> : vector<2x3xf32>
    %70 = tpu.matmul %69, %0, %cst_70 {dimension_numbers = #tpu.dot_dimension_numbers<[1], [0], [0], [1], [0, 0, 1, 1], [], []>} : vector<2x85xf32>, vector<85x3xf32>, vector<2x3xf32> -> vector<2x3xf32>
    %c0_71 = arith.constant 0 : index
    %c1120 = arith.constant 1120 : index
    %71 = vector.load %arg1[%c0_71, %c1120] : memref<2x1237xf32, #tpu.memory_space<vmem>>, vector<2x85xf32>
    %cst_72 = arith.constant dense<0.000000e+00> : vector<2x3xf32>
    %72 = tpu.matmul %71, %0, %cst_72 {dimension_numbers = #tpu.dot_dimension_numbers<[1], [0], [0], [1], [0, 0, 1, 1], [], []>} : vector<2x85xf32>, vector<85x3xf32>, vector<2x3xf32> -> vector<2x3xf32>
    %c0_73 = arith.constant 0 : index
    %c1152 = arith.constant 1152 : index
    %73 = vector.load %arg1[%c0_73, %c1152] : memref<2x1237xf32, #tpu.memory_space<vmem>>, vector<2x85xf32>
    %cst_74 = arith.constant dense<0.000000e+00> : vector<2x3xf32>
    %74 = tpu.matmul %73, %0, %cst_74 {dimension_numbers = #tpu.dot_dimension_numbers<[1], [0], [0], [1], [0, 0, 1, 1], [], []>} : vector<2x85xf32>, vector<85x3xf32>, vector<2x3xf32> -> vector<2x3xf32>
    %75 = tpu.concatenate %2, %4, %6, %8, %10, %12, %14, %16, %18, %20, %22, %24, %26, %28, %30, %32 in 1 : vector<2x3xf32>, vector<2x3xf32>, vector<2x3xf32>, vector<2x3xf32>, vector<2x3xf32>, vector<2x3xf32>, vector<2x3xf32>, vector<2x3xf32>, vector<2x3xf32>, vector<2x3xf32>, vector<2x3xf32>, vector<2x3xf32>, vector<2x3xf32>, vector<2x3xf32>, vector<2x3xf32>, vector<2x3xf32> -> vector<2x48xf32>
    %76 = tpu.concatenate %34, %36, %38, %40, %42, %44, %46, %48, %50, %52, %54, %56, %58, %60, %62, %64 in 1 : vector<2x3xf32>, vector<2x3xf32>, vector<2x3xf32>, vector<2x3xf32>, vector<2x3xf32>, vector<2x3xf32>, vector<2x3xf32>, vector<2x3xf32>, vector<2x3xf32>, vector<2x3xf32>, vector<2x3xf32>, vector<2x3xf32>, vector<2x3xf32>, vector<2x3xf32>, vector<2x3xf32>, vector<2x3xf32> -> vector<2x48xf32>
    %77 = tpu.concatenate %66, %68, %70, %72, %74 in 1 : vector<2x3xf32>, vector<2x3xf32>, vector<2x3xf32>, vector<2x3xf32>, vector<2x3xf32> -> vector<2x15xf32>
    %78 = tpu.concatenate %75, %76, %77 in 1 : vector<2x48xf32>, vector<2x48xf32>, vector<2x15xf32> -> vector<2x111xf32>
    %c0_75 = arith.constant 0 : index
    %c0_76 = arith.constant 0 : index
    %79 = vector.load %arg3[%c0_75, %c0_76] : memref<1x111xf32, #tpu.memory_space<vmem>>, vector<1x111xf32>
    %80 = vector.broadcast %79 : vector<1x111xf32> to vector<2x111xf32>
    %81 = arith.addf %78, %80 : vector<2x111xf32>
    %cst_77 = arith.constant 0.000000e+00 : f32
    %82 = vector.broadcast %cst_77 : f32 to vector<2x111xf32>
    %83 = arith.maximumf %81, %82 : vector<2x111xf32>
    %c0_78 = arith.constant 0 : index
    %c0_79 = arith.constant 0 : index
    %84 = vector.load %arg4[%c0_78, %c0_79] : memref<111x20xf32, #tpu.memory_space<vmem>>, vector<111x20xf32>
    %cst_80 = arith.constant dense<0.000000e+00> : vector<2x20xf32>
    %85 = tpu.matmul %83, %84, %cst_80 {dimension_numbers = #tpu.dot_dimension_numbers<[1], [0], [0], [1], [0, 0, 1, 1], [], []>} : vector<2x111xf32>, vector<111x20xf32>, vector<2x20xf32> -> vector<2x20xf32>
    %c0_81 = arith.constant 0 : index
    %c0_82 = arith.constant 0 : index
    %86 = vector.load %arg5[%c0_81, %c0_82] : memref<1x20xf32, #tpu.memory_space<vmem>>, vector<1x20xf32>
    %87 = vector.broadcast %86 : vector<1x20xf32> to vector<2x20xf32>
    %88 = arith.addf %85, %87 : vector<2x20xf32>
    %cst_83 = arith.constant 0.000000e+00 : f32
    %89 = vector.broadcast %cst_83 : f32 to vector<2x20xf32>
    %90 = arith.maximumf %88, %89 : vector<2x20xf32>
    %c0_84 = arith.constant 0 : index
    %c0_85 = arith.constant 0 : index
    %91 = vector.load %arg6[%c0_84, %c0_85] : memref<20x10xf32, #tpu.memory_space<vmem>>, vector<20x10xf32>
    %cst_86 = arith.constant dense<0.000000e+00> : vector<2x10xf32>
    %92 = tpu.matmul %90, %91, %cst_86 {dimension_numbers = #tpu.dot_dimension_numbers<[1], [0], [0], [1], [0, 0, 1, 1], [], []>} : vector<2x20xf32>, vector<20x10xf32>, vector<2x10xf32> -> vector<2x10xf32>
    %c0_87 = arith.constant 0 : index
    %c0_88 = arith.constant 0 : index
    %93 = vector.load %arg7[%c0_87, %c0_88] : memref<1x10xf32, #tpu.memory_space<vmem>>, vector<1x10xf32>
    %94 = vector.broadcast %93 : vector<1x10xf32> to vector<2x10xf32>
    %95 = arith.addf %92, %94 : vector<2x10xf32>
    %cst_89 = arith.constant 0.000000e+00 : f32
    %96 = vector.broadcast %cst_89 : f32 to vector<2x10xf32>
    %97 = arith.maximumf %95, %96 : vector<2x10xf32>
    %c0_90 = arith.constant 0 : index
    %c0_91 = arith.constant 0 : index
    %98 = vector.load %arg8[%c0_90, %c0_91] : memref<10x2xf32, #tpu.memory_space<vmem>>, vector<10x2xf32>
    %cst_92 = arith.constant dense<0.000000e+00> : vector<2x2xf32>
    %99 = tpu.matmul %97, %98, %cst_92 {dimension_numbers = #tpu.dot_dimension_numbers<[1], [0], [0], [1], [0, 0, 1, 1], [], []>} : vector<2x10xf32>, vector<10x2xf32>, vector<2x2xf32> -> vector<2x2xf32>
    %c0_93 = arith.constant 0 : index
    %c0_94 = arith.constant 0 : index
    %100 = vector.load %arg9[%c0_93, %c0_94] : memref<1x2xf32, #tpu.memory_space<vmem>>, vector<1x2xf32>
    %101 = vector.broadcast %100 : vector<1x2xf32> to vector<2x2xf32>
    %102 = arith.addf %99, %101 : vector<2x2xf32>
    %c0_95 = arith.constant 0 : index
    %c0_96 = arith.constant 0 : index
    %103 = vector.load %arg10[%c0_95, %c0_96] : memref<2x2xf32, #tpu.memory_space<vmem>>, vector<2x2xf32>
    tpu.vector_store %arg10[%c0_95, %c0_96], %102 {strides = array<i32>} : memref<2x2xf32, #tpu.memory_space<vmem>>, vector<2x2xf32>,
    return
  }
  func.func @transform_0(%arg0: i32) -> (i32, i32) {
    %c0_i32 = arith.constant 0 : i32
    %c0_i32_0 = arith.constant 0 : i32
    return %arg0, %c0_i32 : i32, i32
  }
  func.func @transform_1(%arg0: i32) -> (i32, i32) {
    %c0_i32 = arith.constant 0 : i32
    %c0_i32_0 = arith.constant 0 : i32
    %c0_i32_1 = arith.constant 0 : i32
    return %c0_i32, %c0_i32_0 : i32, i32
  }
  func.func @transform_2(%arg0: i32) -> (i32, i32) {
    %c0_i32 = arith.constant 0 : i32
    %c0_i32_0 = arith.constant 0 : i32
    %c0_i32_1 = arith.constant 0 : i32
    return %c0_i32, %c0_i32_0 : i32, i32
  }
  func.func @transform_3(%arg0: i32) -> (i32, i32) {
    %c0_i32 = arith.constant 0 : i32
    %c0_i32_0 = arith.constant 0 : i32
    %c0_i32_1 = arith.constant 0 : i32
    return %c0_i32, %c0_i32_0 : i32, i32
  }
  func.func @transform_4(%arg0: i32) -> (i32, i32) {
    %c0_i32 = arith.constant 0 : i32
    %c0_i32_0 = arith.constant 0 : i32
    %c0_i32_1 = arith.constant 0 : i32
    return %c0_i32, %c0_i32_0 : i32, i32
  }
  func.func @transform_5(%arg0: i32) -> (i32, i32) {
    %c0_i32 = arith.constant 0 : i32
    %c0_i32_0 = arith.constant 0 : i32
    %c0_i32_1 = arith.constant 0 : i32
    return %c0_i32, %c0_i32_0 : i32, i32
  }
  func.func @transform_6(%arg0: i32) -> (i32, i32) {
    %c0_i32 = arith.constant 0 : i32
    %c0_i32_0 = arith.constant 0 : i32
    %c0_i32_1 = arith.constant 0 : i32
    return %c0_i32, %c0_i32_0 : i32, i32
  }
  func.func @transform_7(%arg0: i32) -> (i32, i32) {
    %c0_i32 = arith.constant 0 : i32
    %c0_i32_0 = arith.constant 0 : i32
    %c0_i32_1 = arith.constant 0 : i32
    return %c0_i32, %c0_i32_0 : i32, i32
  }
  func.func @transform_8(%arg0: i32) -> (i32, i32) {
    %c0_i32 = arith.constant 0 : i32
    %c0_i32_0 = arith.constant 0 : i32
    %c0_i32_1 = arith.constant 0 : i32
    return %c0_i32, %c0_i32_0 : i32, i32
  }
  func.func @transform_9(%arg0: i32) -> (i32, i32) {
    %c0_i32 = arith.constant 0 : i32
    %c0_i32_0 = arith.constant 0 : i32
    return %arg0, %c0_i32 : i32, i32
  }
}

</mosaic_0001>

<llo_original>
// kernel: iegm_forward.1
$region0: #{iegm_forward.1}
  #allocation0 [shape = 'u32[]', space=smem, size = 0x4, offset = 0x4, fixed_abs, tag = 'smem constant byte address 0x4 - core index']
  #allocation1 [shape = 'u32[144,128]{1,0:T(1,128)}', space=vmem, size = 0x12000, scoped, tag = 'internal scratch']
  %s0 = inlined_call_operand.vmem [shape: f32[2,1237], index: 0, kind: input, shape index: {}]
  %s1 = inlined_call_operand.vmem [shape: f32[85,3], index: 1, kind: input, shape index: {}]
  %s2 = inlined_call_operand.vmem [shape: f32[1,111], index: 2, kind: input, shape index: {}]
  %s3 = inlined_call_operand.vmem [shape: f32[111,20], index: 3, kind: input, shape index: {}]
  %s4 = inlined_call_operand.vmem [shape: f32[1,20], index: 4, kind: input, shape index: {}]
  %s5 = inlined_call_operand.vmem [shape: f32[20,10], index: 5, kind: input, shape index: {}]
  %s6 = inlined_call_operand.vmem [shape: f32[1,10], index: 6, kind: input, shape index: {}]
  %s7 = inlined_call_operand.vmem [shape: f32[10,2], index: 7, kind: input, shape index: {}]
  %s8 = inlined_call_operand.vmem [shape: f32[1,2], index: 8, kind: input, shape index: {}]
  %s9 = inlined_call_operand.hbm [shape: f32[2,2], index: 9, kind: output, shape index: {}]
  %s10 = sld [smem:[#allocation0]]
  $region46: #{iegm_forward.1} parent=0
    _
  %s12 = ssub.s32 1, %s10
  %s13 = scalar_select 0, %s12, %s10
  $region1: #{iegm_forward.1} parent=0
    #allocation2 [shape = 'u8[1024]{0}', space=vmem, size = 0x400, scoped, tag = 'output window, operand 0, single buffered']
    #allocation3 [shape = 's32[1]{0}', space=sflag, size = 0x4, scoped, tag = 'scoped memory for iegm_forward.1']
    %14 = vsyncpa [#allocation3], 0
    // Predicated region
    $region2: #{iegm_forward.1} parent=1 // pred_check
      _
    $region3: #{iegm_forward.1} parent=1 // pred_check_branch
      %16 = sbr.rel (0) target = $region5
    $region4: #{iegm_forward.1} parent=1 // pred_region
      _
    $region5: #{iegm_forward.1} parent=1 // pred_fallthru
      _
    // Predicated region
    $region6: #{iegm_forward.1} parent=1 // pred_check
      _
    $region7: #{iegm_forward.1} parent=1 // pred_check_branch
      %18 = sbr.rel (0) target = $region9
    $region8: #{iegm_forward.1} parent=1 // pred_region
      _
    $region9: #{iegm_forward.1} parent=1 // pred_fallthru
      _
    // Predicated region
    $region10: #{iegm_forward.1} parent=1 // pred_check
      _
    $region11: #{iegm_forward.1} parent=1 // pred_check_branch
      %20 = sbr.rel (0) target = $region13
    $region12: #{iegm_forward.1} parent=1 // pred_region
      _
    $region13: #{iegm_forward.1} parent=1 // pred_fallthru
      _
    // Predicated region
    $region14: #{iegm_forward.1} parent=1 // pred_check
      _
    $region15: #{iegm_forward.1} parent=1 // pred_check_branch
      %22 = sbr.rel (0) target = $region17
    $region16: #{iegm_forward.1} parent=1 // pred_region
      _
    $region17: #{iegm_forward.1} parent=1 // pred_fallthru
      _
    // Predicated region
    $region18: #{iegm_forward.1} parent=1 // pred_check
      _
    $region19: #{iegm_forward.1} parent=1 // pred_check_branch
      %24 = sbr.rel (0) target = $region21
    $region20: #{iegm_forward.1} parent=1 // pred_region
      _
    $region21: #{iegm_forward.1} parent=1 // pred_fallthru
      _
    // Predicated region
    $region22: #{iegm_forward.1} parent=1 // pred_check
      _
    $region23: #{iegm_forward.1} parent=1 // pred_check_branch
      %26 = sbr.rel (0) target = $region25
    $region24: #{iegm_forward.1} parent=1 // pred_region
      _
    $region25: #{iegm_forward.1} parent=1 // pred_fallthru
      _
    // Predicated region
    $region26: #{iegm_forward.1} parent=1 // pred_check
      _
    $region27: #{iegm_forward.1} parent=1 // pred_check_branch
      %28 = sbr.rel (0) target = $region29
    $region28: #{iegm_forward.1} parent=1 // pred_region
      _
    $region29: #{iegm_forward.1} parent=1 // pred_fallthru
      _
    // Predicated region
    $region30: #{iegm_forward.1} parent=1 // pred_check
      _
    $region31: #{iegm_forward.1} parent=1 // pred_check_branch
      %30 = sbr.rel (0) target = $region33
    $region32: #{iegm_forward.1} parent=1 // pred_region
      _
    $region33: #{iegm_forward.1} parent=1 // pred_fallthru
      _
    // Predicated region
    $region34: #{iegm_forward.1} parent=1 // pred_check
      _
    $region35: #{iegm_forward.1} parent=1 // pred_check_branch
      %32 = sbr.rel (0) target = $region37
    $region36: #{iegm_forward.1} parent=1 // pred_region
      _
    $region37: #{iegm_forward.1} parent=1 // pred_fallthru
      _
    %v33 = vld [vmem:[%s1] sm:$0xff]
    %v34 = vld [vmem:[%s1 + $0x8] sm:$0xff]
    %v35 = vld [vmem:[%s1 + $0x10] sm:$0xff]
    %v36 = vld [vmem:[%s1 + $0x18] sm:$0xff]
    %v37 = vld [vmem:[%s1 + $0x20] sm:$0xff]
    %v38 = vld [vmem:[%s1 + $0x28] sm:$0xff]
    %v39 = vld [vmem:[%s1 + $0x30] sm:$0xff]
    %v40 = vld [vmem:[%s1 + $0x38] sm:$0xff]
    %v41 = vld [vmem:[%s1 + $0x40] sm:$0xff]
    %v42 = vld [vmem:[%s1 + $0x48] sm:$0xff]
    %v43 = vld [vmem:[%s1 + $0x50] sm:$0x1f]
    %v44 = vld [vmem:[%s0] sm:$0x3]
    %vm45 = vcmask 695296
    %v47 = vsel %vm45, %v44, 0
    %vm49 = vcmask 1044480
    %v51 = vsel %vm49, %v43, 0
    %53 = vmatprep.subr.mxu0 0.0
    %54 = vmatpush1.msra.mxu0 %v33
    %55 = vmatprep.subr.mxu0 0.0
    %56 = vmatpush1.msra.mxu0 %v34
    %57 = vmatprep.subr.mxu0 0.0
    %58 = vmatpush1.msra.mxu0 %v35
    %59 = vmatprep.subr.mxu0 0.0
    %60 = vmatpush1.msra.mxu0 %v36
    %61 = vmatprep.subr.mxu0 0.0
    %62 = vmatpush1.msra.mxu0 %v37
    %63 = vmatprep.subr.mxu0 0.0
    %64 = vmatpush1.msra.mxu0 %v38
    %65 = vmatprep.subr.mxu0 0.0
    %66 = vmatpush1.msra.mxu0 %v39
    %67 = vmatprep.subr.mxu0 0.0
    %68 = vmatpush1.msra.mxu0 %v40
    %69 = vmatprep.subr.mxu0 0.0
    %70 = vmatpush1.msra.mxu0 %v41
    %71 = vmatprep.subr.mxu0 0.0
    %72 = vmatpush1.msra.mxu0 %v42
    %73 = vmatprep.subr.mxu0 0.0
    %74 = vmatpush1.msra.mxu0 %v51
    %75 = vmatprep.subr.mxu0 0.0
    %76 = vmatpush1.msra.mxu0 0.0
    %77 = vmatprep.subr.mxu0 0.0
    %78 = vmatpush1.msra.mxu0 0.0
    %79 = vmatprep.subr.mxu0 0.0
    %80 = vmatpush1.msra.mxu0 0.0
    %81 = vmatprep.subr.mxu0 0.0
    %82 = vmatpush1.msra.mxu0 0.0
    %83 = vmatprep.subr.mxu0 0.0
    %84 = vmatpush1.msra.mxu0 0.0
    %85 = vmatprep.subr.mxu0 0.0
    %86 = vmatpush1.msra.mxu0 0.0
    %87 = vmatprep.subr.mxu0 0.0
    %88 = vmatpush1.msra.mxu0 0.0
    %89 = vmatprep.subr.mxu0 0.0
    %90 = vmatpush1.msra.mxu0 0.0
    %91 = vmatprep.subr.mxu0 0.0
    %92 = vmatpush1.msra.mxu0 0.0
    %93 = vmatprep.subr.mxu0 0.0
    %94 = vmatpush1.msra.mxu0 0.0
    %95 = vmatprep.subr.mxu0 0.0
    %96 = vmatpush1.msra.mxu0 0.0
    %97 = vmatprep.subr.mxu0 0.0
    %98 = vmatpush1.msra.mxu0 0.0
    %99 = vmatprep.subr.mxu0 0.0
    %100 = vmatpush1.msra.mxu0 0.0
    %101 = vmatprep.subr.mxu0 0.0
    %102 = vmatpush1.msra.mxu0 0.0
    %103 = vmatprep.subr.mxu0 0.0
    %104 = vmatpush1.msra.mxu0 0.0
    %105 = vmatprep.subr.mxu0 0.0
    %106 = vmatpush1.msra.mxu0 0.0
    %107 = vmatprep.subr.mxu0 0.0
    %108 = vmatpush1.msra.mxu0 0.0
    %109 = vmatprep.subr.mxu0 0.0
    %110 = vmatpush1.msra.mxu0 0.0
    %111 = vmatprep.subr.mxu0 0.0
    %112 = vmatpush1.msra.mxu0 0.0
    %113 = vmatprep.subr.mxu0 0.0
    %114 = vmatpush1.msra.mxu0 0.0
    %115 = vmatprep.subr.mxu0 0.0
    %116 = vmatpush1.msra.mxu0 0.0
    %117 = vmatprep.mubr.f32.mxu0 0.0
    %118 = vmatmul.mubr.f32.gmra.mrb[0].mxu0 %v47
    %v119 = vpop.f32.mrb[0].mxu0
    %v120 = vadd.f32 0.0, %v119
    %v121 = vpop.f32.mrb[0].mxu0
    %122 = vdwg.mxu0
    %v124 = vunpack.c.l.s4 1983009808
    %v125 = vunpack.c.0.s8 %v124
    %v126 = vlaneseq
    %v127 = vshrl.u32 %v126, 7
    %v128 = vsub.s32 %v125, %v127
    %v129 = vrot.slane %v44, %v128
    %130 = vrot.lane.b32.xlu0 %v129, 96
    %v131 = vpop.permute.xlu0 %130
    %v132 = vsel %vm45, %v131, 0
    %134 = vmatprep.subr.mxu0 0.0
    %135 = vmatpush1.msra.mxu0 %v33
    %136 = vmatprep.subr.mxu0 0.0
    %137 = vmatpush1.msra.mxu0 %v34
    %138 = vmatprep.subr.mxu0 0.0
    %139 = vmatpush1.msra.mxu0 %v35
    %140 = vmatprep.subr.mxu0 0.0
    %141 = vmatpush1.msra.mxu0 %v36
    %142 = vmatprep.subr.mxu0 0.0
    %143 = vmatpush1.msra.mxu0 %v37
    %144 = vmatprep.subr.mxu0 0.0
    %145 = vmatpush1.msra.mxu0 %v38
    %146 = vmatprep.subr.mxu0 0.0
    %147 = vmatpush1.msra.mxu0 %v39
    %148 = vmatprep.subr.mxu0 0.0
    %149 = vmatpush1.msra.mxu0 %v40
    %150 = vmatprep.subr.mxu0 0.0
    %151 = vmatpush1.msra.mxu0 %v41
    %152 = vmatprep.subr.mxu0 0.0
    %153 = vmatpush1.msra.mxu0 %v42
    %154 = vmatprep.subr.mxu0 0.0
    %155 = vmatpush1.msra.mxu0 %v51
    %156 = vmatprep.subr.mxu0 0.0
    %157 = vmatpush1.msra.mxu0 0.0
    %158 = vmatprep.subr.mxu0 0.0
    %159 = vmatpush1.msra.mxu0 0.0
    %160 = vmatprep.subr.mxu0 0.0
    %161 = vmatpush1.msra.mxu0 0.0
    %162 = vmatprep.subr.mxu0 0.0
    %163 = vmatpush1.msra.mxu0 0.0
    %164 = vmatprep.subr.mxu0 0.0
    %165 = vmatpush1.msra.mxu0 0.0
    %166 = vmatprep.subr.mxu0 0.0
    %167 = vmatpush1.msra.mxu0 0.0
    %168 = vmatprep.subr.mxu0 0.0
    %169 = vmatpush1.msra.mxu0 0.0
    %170 = vmatprep.subr.mxu0 0.0
    %171 = vmatpush1.msra.mxu0 0.0
    %172 = vmatprep.subr.mxu0 0.0
    %173 = vmatpush1.msra.mxu0 0.0
    %174 = vmatprep.subr.mxu0 0.0
    %175 = vmatpush1.msra.mxu0 0.0
    %176 = vmatprep.subr.mxu0 0.0
    %177 = vmatpush1.msra.mxu0 0.0
    %178 = vmatprep.subr.mxu0 0.0
    %179 = vmatpush1.msra.mxu0 0.0
    %180 = vmatprep.subr.mxu0 0.0
    %181 = vmatpush1.msra.mxu0 0.0
    %182 = vmatprep.subr.mxu0 0.0
    %183 = vmatpush1.msra.mxu0 0.0
    %184 = vmatprep.subr.mxu0 0.0
    %185 = vmatpush1.msra.mxu0 0.0
    %186 = vmatprep.subr.mxu0 0.0
    %187 = vmatpush1.msra.mxu0 0.0
    %188 = vmatprep.subr.mxu0 0.0
    %189 = vmatpush1.msra.mxu0 0.0
    %190 = vmatprep.subr.mxu0 0.0
    %191 = vmatpush1.msra.mxu0 0.0
    %192 = vmatprep.subr.mxu0 0.0
    %193 = vmatpush1.msra.mxu0 0.0
    %194 = vmatprep.subr.mxu0 0.0
    %195 = vmatpush1.msra.mxu0 0.0
    %196 = vmatprep.subr.mxu0 0.0
    %197 = vmatpush1.msra.mxu0 0.0
    %198 = vmatprep.mubr.f32.mxu0 0.0
    %199 = vmatmul.mubr.f32.gmra.mrb[0].mxu0 %v132
    %v200 = vpop.f32.mrb[0].mxu0
    %v201 = vadd.f32 0.0, %v200
    %v202 = vpop.f32.mrb[0].mxu0
    %203 = vdwg.mxu0
    %v204 = vld [vmem:[%s0] sm:$0xf]
    %v207 = vunpack.c.l.s4 1983009808
    %v208 = vunpack.c.0.s8 %v207
    %v209 = vlaneseq
    %v210 = vshrl.u32 %v209, 7
    %v211 = vsub.s32 %v208, %v210
    %v212 = vrot.slane %v204, %v211
    %v213 = vcombine.high %v212, %v212
    %214 = vrot.lane.b32.xlu0 %v212, 64
    %v215 = vpop.permute.xlu0 %214
    %216 = vrot.lane.b32.xlu0 %v213, 64
    %v217 = vpop.permute.xlu0 %216
    %vm218 = vcmask 523264
    %v219 = vsel %vm218, %v215, %v217
    %v220 = vsel %vm45, %v219, 0
    %222 = vmatprep.subr.mxu0 0.0
    %223 = vmatpush1.msra.mxu0 %v33
    %224 = vmatprep.subr.mxu0 0.0
    %225 = vmatpush1.msra.mxu0 %v34
    %226 = vmatprep.subr.mxu0 0.0
    %227 = vmatpush1.msra.mxu0 %v35
    %228 = vmatprep.subr.mxu0 0.0
    %229 = vmatpush1.msra.mxu0 %v36
    %230 = vmatprep.subr.mxu0 0.0
    %231 = vmatpush1.msra.mxu0 %v37
    %232 = vmatprep.subr.mxu0 0.0
    %233 = vmatpush1.msra.mxu0 %v38
    %234 = vmatprep.subr.mxu0 0.0
    %235 = vmatpush1.msra.mxu0 %v39
    %236 = vmatprep.subr.mxu0 0.0
    %237 = vmatpush1.msra.mxu0 %v40
    %238 = vmatprep.subr.mxu0 0.0
    %239 = vmatpush1.msra.mxu0 %v41
    %240 = vmatprep.subr.mxu0 0.0
    %241 = vmatpush1.msra.mxu0 %v42
    %242 = vmatprep.subr.mxu0 0.0
    %243 = vmatpush1.msra.mxu0 %v51
    %244 = vmatprep.subr.mxu0 0.0
    %245 = vmatpush1.msra.mxu0 0.0
    %246 = vmatprep.subr.mxu0 0.0
    %247 = vmatpush1.msra.mxu0 0.0
    %248 = vmatprep.subr.mxu0 0.0
    %249 = vmatpush1.msra.mxu0 0.0
    %250 = vmatprep.subr.mxu0 0.0
    %251 = vmatpush1.msra.mxu0 0.0
    %252 = vmatprep.subr.mxu0 0.0
    %253 = vmatpush1.msra.mxu0 0.0
    %254 = vmatprep.subr.mxu0 0.0
    %255 = vmatpush1.msra.mxu0 0.0
    %256 = vmatprep.subr.mxu0 0.0
    %257 = vmatpush1.msra.mxu0 0.0
    %258 = vmatprep.subr.mxu0 0.0
    %259 = vmatpush1.msra.mxu0 0.0
    %260 = vmatprep.subr.mxu0 0.0
    %261 = vmatpush1.msra.mxu0 0.0
    %262 = vmatprep.subr.mxu0 0.0
    %263 = vmatpush1.msra.mxu0 0.0
    %264 = vmatprep.subr.mxu0 0.0
    %265 = vmatpush1.msra.mxu0 0.0
    %266 = vmatprep.subr.mxu0 0.0
    %267 = vmatpush1.msra.mxu0 0.0
    %268 = vmatprep.subr.mxu0 0.0
    %269 = vmatpush1.msra.mxu0 0.0
    %270 = vmatprep.subr.mxu0 0.0
    %271 = vmatpush1.msra.mxu0 0.0
    %272 = vmatprep.subr.mxu0 0.0
    %273 = vmatpush1.msra.mxu0 0.0
    %274 = vmatprep.subr.mxu0 0.0
    %275 = vmatpush1.msra.mxu0 0.0
    %276 = vmatprep.subr.mxu0 0.0
    %277 = vmatpush1.msra.mxu0 0.0
    %278 = vmatprep.subr.mxu0 0.0
    %279 = vmatpush1.msra.mxu0 0.0
    %280 = vmatprep.subr.mxu0 0.0
    %281 = vmatpush1.msra.mxu0 0.0
    %282 = vmatprep.subr.mxu0 0.0
    %283 = vmatpush1.msra.mxu0 0.0
    %284 = vmatprep.subr.mxu0 0.0
    %285 = vmatpush1.msra.mxu0 0.0
    %286 = vmatprep.mubr.f32.mxu0 0.0
    %287 = vmatmul.mubr.f32.gmra.mrb[0].mxu0 %v220
    %v288 = vpop.f32.mrb[0].mxu0
    %v289 = vadd.f32 0.0, %v288
    %v290 = vpop.f32.mrb[0].mxu0
    %291 = vdwg.mxu0
    %v292 = vld [vmem:[%s0] sm:$0xf]
    %v295 = vunpack.c.l.s4 1983009808
    %v296 = vunpack.c.0.s8 %v295
    %v297 = vlaneseq
    %v298 = vshrl.u32 %v297, 7
    %v299 = vsub.s32 %v296, %v298
    %v300 = vrot.slane %v292, %v299
    %v301 = vcombine.high %v300, %v300
    %302 = vrot.lane.b32.xlu0 %v300, 32
    %v303 = vpop.permute.xlu0 %302
    %304 = vrot.lane.b32.xlu0 %v301, 32
    %v305 = vpop.permute.xlu0 %304
    %vm306 = vcmask 261120
    %v307 = vsel %vm306, %v303, %v305
    %v308 = vsel %vm45, %v307, 0
    %310 = vmatprep.subr.mxu0 0.0
    %311 = vmatpush1.msra.mxu0 %v33
    %312 = vmatprep.subr.mxu0 0.0
    %313 = vmatpush1.msra.mxu0 %v34
    %314 = vmatprep.subr.mxu0 0.0
    %315 = vmatpush1.msra.mxu0 %v35
    %316 = vmatprep.subr.mxu0 0.0
    %317 = vmatpush1.msra.mxu0 %v36
    %318 = vmatprep.subr.mxu0 0.0
    %319 = vmatpush1.msra.mxu0 %v37
    %320 = vmatprep.subr.mxu0 0.0
    %321 = vmatpush1.msra.mxu0 %v38
    %322 = vmatprep.subr.mxu0 0.0
    %323 = vmatpush1.msra.mxu0 %v39
    %324 = vmatprep.subr.mxu0 0.0
    %325 = vmatpush1.msra.mxu0 %v40
    %326 = vmatprep.subr.mxu0 0.0
    %327 = vmatpush1.msra.mxu0 %v41
    %328 = vmatprep.subr.mxu0 0.0
    %329 = vmatpush1.msra.mxu0 %v42
    %330 = vmatprep.subr.mxu0 0.0
    %331 = vmatpush1.msra.mxu0 %v51
    %332 = vmatprep.subr.mxu0 0.0
    %333 = vmatpush1.msra.mxu0 0.0
    %334 = vmatprep.subr.mxu0 0.0
    %335 = vmatpush1.msra.mxu0 0.0
    %336 = vmatprep.subr.mxu0 0.0
    %337 = vmatpush1.msra.mxu0 0.0
    %338 = vmatprep.subr.mxu0 0.0
    %339 = vmatpush1.msra.mxu0 0.0
    %340 = vmatprep.subr.mxu0 0.0
    %341 = vmatpush1.msra.mxu0 0.0
    %342 = vmatprep.subr.mxu0 0.0
    %343 = vmatpush1.msra.mxu0 0.0
    %344 = vmatprep.subr.mxu0 0.0
    %345 = vmatpush1.msra.mxu0 0.0
    %346 = vmatprep.subr.mxu0 0.0
    %347 = vmatpush1.msra.mxu0 0.0
    %348 = vmatprep.subr.mxu0 0.0
    %349 = vmatpush1.msra.mxu0 0.0
    %350 = vmatprep.subr.mxu0 0.0
    %351 = vmatpush1.msra.mxu0 0.0
    %352 = vmatprep.subr.mxu0 0.0
    %353 = vmatpush1.msra.mxu0 0.0
    %354 = vmatprep.subr.mxu0 0.0
    %355 = vmatpush1.msra.mxu0 0.0
    %356 = vmatprep.subr.mxu0 0.0
    %357 = vmatpush1.msra.mxu0 0.0
    %358 = vmatprep.subr.mxu0 0.0
    %359 = vmatpush1.msra.mxu0 0.0
    %360 = vmatprep.subr.mxu0 0.0
    %361 = vmatpush1.msra.mxu0 0.0
    %362 = vmatprep.subr.mxu0 0.0
    %363 = vmatpush1.msra.mxu0 0.0
    %364 = vmatprep.subr.mxu0 0.0
    %365 = vmatpush1.msra.mxu0 0.0
    %366 = vmatprep.subr.mxu0 0.0
    %367 = vmatpush1.msra.mxu0 0.0
    %368 = vmatprep.subr.mxu0 0.0
    %369 = vmatpush1.msra.mxu0 0.0
    %370 = vmatprep.subr.mxu0 0.0
    %371 = vmatpush1.msra.mxu0 0.0
    %372 = vmatprep.subr.mxu0 0.0
    %373 = vmatpush1.msra.mxu0 0.0
    %374 = vmatprep.mubr.f32.mxu0 0.0
    %375 = vmatmul.mubr.f32.gmra.mrb[0].mxu0 %v308
    %v376 = vpop.f32.mrb[0].mxu0
    %v377 = vadd.f32 0.0, %v376
    %v378 = vpop.f32.mrb[0].mxu0
    %379 = vdwg.mxu0
    %v380 = vld [vmem:[%s0 + $0x2] sm:$0x3]
    %v382 = vsel %vm45, %v380, 0
    %384 = vmatprep.subr.mxu0 0.0
    %385 = vmatpush1.msra.mxu0 %v33
    %386 = vmatprep.subr.mxu0 0.0
    %387 = vmatpush1.msra.mxu0 %v34
    %388 = vmatprep.subr.mxu0 0.0
    %389 = vmatpush1.msra.mxu0 %v35
    %390 = vmatprep.subr.mxu0 0.0
    %391 = vmatpush1.msra.mxu0 %v36
    %392 = vmatprep.subr.mxu0 0.0
    %393 = vmatpush1.msra.mxu0 %v37
    %394 = vmatprep.subr.mxu0 0.0
    %395 = vmatpush1.msra.mxu0 %v38
    %396 = vmatprep.subr.mxu0 0.0
    %397 = vmatpush1.msra.mxu0 %v39
    %398 = vmatprep.subr.mxu0 0.0
    %399 = vmatpush1.msra.mxu0 %v40
    %400 = vmatprep.subr.mxu0 0.0
    %401 = vmatpush1.msra.mxu0 %v41
    %402 = vmatprep.subr.mxu0 0.0
    %403 = vmatpush1.msra.mxu0 %v42
    %404 = vmatprep.subr.mxu0 0.0
    %405 = vmatpush1.msra.mxu0 %v51
    %406 = vmatprep.subr.mxu0 0.0
    %407 = vmatpush1.msra.mxu0 0.0
    %408 = vmatprep.subr.mxu0 0.0
    %409 = vmatpush1.msra.mxu0 0.0
    %410 = vmatprep.subr.mxu0 0.0
    %411 = vmatpush1.msra.mxu0 0.0
    %412 = vmatprep.subr.mxu0 0.0
    %413 = vmatpush1.msra.mxu0 0.0
    %414 = vmatprep.subr.mxu0 0.0
    %415 = vmatpush1.msra.mxu0 0.0
    %416 = vmatprep.subr.mxu0 0.0
    %417 = vmatpush1.msra.mxu0 0.0
    %418 = vmatprep.subr.mxu0 0.0
    %419 = vmatpush1.msra.mxu0 0.0
    %420 = vmatprep.subr.mxu0 0.0
    %421 = vmatpush1.msra.mxu0 0.0
    %422 = vmatprep.subr.mxu0 0.0
    %423 = vmatpush1.msra.mxu0 0.0
    %424 = vmatprep.subr.mxu0 0.0
    %425 = vmatpush1.msra.mxu0 0.0
    %426 = vmatprep.subr.mxu0 0.0
    %427 = vmatpush1.msra.mxu0 0.0
    %428 = vmatprep.subr.mxu0 0.0
    %429 = vmatpush1.msra.mxu0 0.0
    %430 = vmatprep.subr.mxu0 0.0
    %431 = vmatpush1.msra.mxu0 0.0
    %432 = vmatprep.subr.mxu0 0.0
    %433 = vmatpush1.msra.mxu0 0.0
    %434 = vmatprep.subr.mxu0 0.0
    %435 = vmatpush1.msra.mxu0 0.0
    %436 = vmatprep.subr.mxu0 0.0
    %437 = vmatpush1.msra.mxu0 0.0
    %438 = vmatprep.subr.mxu0 0.0
    %439 = vmatpush1.msra.mxu0 0.0
    %440 = vmatprep.subr.mxu0 0.0
    %441 = vmatpush1.msra.mxu0 0.0
    %442 = vmatprep.subr.mxu0 0.0
    %443 = vmatpush1.msra.mxu0 0.0
    %444 = vmatprep.subr.mxu0 0.0
    %445 = vmatpush1.msra.mxu0 0.0
    %446 = vmatprep.subr.mxu0 0.0
    %447 = vmatpush1.msra.mxu0 0.0
    %448 = vmatprep.mubr.f32.mxu0 0.0
    %449 = vmatmul.mubr.f32.gmra.mrb[0].mxu0 %v382
    %v450 = vpop.f32.mrb[0].mxu0
    %v451 = vadd.f32 0.0, %v450
    %v452 = vpop.f32.mrb[0].mxu0
    %453 = vdwg.mxu0
    %v455 = vunpack.c.l.s4 1983009808
    %v456 = vunpack.c.0.s8 %v455
    %v457 = vlaneseq
    %v458 = vshrl.u32 %v457, 7
    %v459 = vsub.s32 %v456, %v458
    %v460 = vrot.slane %v380, %v459
    %461 = vrot.lane.b32.xlu0 %v460, 96
    %v462 = vpop.permute.xlu0 %461
    %v463 = vsel %vm45, %v462, 0
    %465 = vmatprep.subr.mxu0 0.0
    %466 = vmatpush1.msra.mxu0 %v33
    %467 = vmatprep.subr.mxu0 0.0
    %468 = vmatpush1.msra.mxu0 %v34
    %469 = vmatprep.subr.mxu0 0.0
    %470 = vmatpush1.msra.mxu0 %v35
    %471 = vmatprep.subr.mxu0 0.0
    %472 = vmatpush1.msra.mxu0 %v36
    %473 = vmatprep.subr.mxu0 0.0
    %474 = vmatpush1.msra.mxu0 %v37
    %475 = vmatprep.subr.mxu0 0.0
    %476 = vmatpush1.msra.mxu0 %v38
    %477 = vmatprep.subr.mxu0 0.0
    %478 = vmatpush1.msra.mxu0 %v39
    %479 = vmatprep.subr.mxu0 0.0
    %480 = vmatpush1.msra.mxu0 %v40
    %481 = vmatprep.subr.mxu0 0.0
    %482 = vmatpush1.msra.mxu0 %v41
    %483 = vmatprep.subr.mxu0 0.0
    %484 = vmatpush1.msra.mxu0 %v42
    %485 = vmatprep.subr.mxu0 0.0
    %486 = vmatpush1.msra.mxu0 %v51
    %487 = vmatprep.subr.mxu0 0.0
    %488 = vmatpush1.msra.mxu0 0.0
    %489 = vmatprep.subr.mxu0 0.0
    %490 = vmatpush1.msra.mxu0 0.0
    %491 = vmatprep.subr.mxu0 0.0
    %492 = vmatpush1.msra.mxu0 0.0
    %493 = vmatprep.subr.mxu0 0.0
    %494 = vmatpush1.msra.mxu0 0.0
    %495 = vmatprep.subr.mxu0 0.0
    %496 = vmatpush1.msra.mxu0 0.0
    %497 = vmatprep.subr.mxu0 0.0
    %498 = vmatpush1.msra.mxu0 0.0
    %499 = vmatprep.subr.mxu0 0.0
    %500 = vmatpush1.msra.mxu0 0.0
    %501 = vmatprep.subr.mxu0 0.0
    %502 = vmatpush1.msra.mxu0 0.0
    %503 = vmatprep.subr.mxu0 0.0
    %504 = vmatpush1.msra.mxu0 0.0
    %505 = vmatprep.subr.mxu0 0.0
    %506 = vmatpush1.msra.mxu0 0.0
    %507 = vmatprep.subr.mxu0 0.0
    %508 = vmatpush1.msra.mxu0 0.0
    %509 = vmatprep.subr.mxu0 0.0
    %510 = vmatpush1.msra.mxu0 0.0
    %511 = vmatprep.subr.mxu0 0.0
    %512 = vmatpush1.msra.mxu0 0.0
    %513 = vmatprep.subr.mxu0 0.0
    %514 = vmatpush1.msra.mxu0 0.0
    %515 = vmatprep.subr.mxu0 0.0
    %516 = vmatpush1.msra.mxu0 0.0
    %517 = vmatprep.subr.mxu0 0.0
    %518 = vmatpush1.msra.mxu0 0.0
    %519 = vmatprep.subr.mxu0 0.0
    %520 = vmatpush1.msra.mxu0 0.0
    %521 = vmatprep.subr.mxu0 0.0
    %522 = vmatpush1.msra.mxu0 0.0
    %523 = vmatprep.subr.mxu0 0.0
    %524 = vmatpush1.msra.mxu0 0.0
    %525 = vmatprep.subr.mxu0 0.0
    %526 = vmatpush1.msra.mxu0 0.0
    %527 = vmatprep.subr.mxu0 0.0
    %528 = vmatpush1.msra.mxu0 0.0
    %529 = vmatprep.mubr.f32.mxu0 0.0
    %530 = vmatmul.mubr.f32.gmra.mrb[0].mxu0 %v463
    %v531 = vpop.f32.mrb[0].mxu0
    %v532 = vadd.f32 0.0, %v531
    %v533 = vpop.f32.mrb[0].mxu0
    %534 = vdwg.mxu0
    %v535 = vld [vmem:[%s0 + $0x2] sm:$0xf]
    %v538 = vunpack.c.l.s4 1983009808
    %v539 = vunpack.c.0.s8 %v538
    %v540 = vlaneseq
    %v541 = vshrl.u32 %v540, 7
    %v542 = vsub.s32 %v539, %v541
    %v543 = vrot.slane %v535, %v542
    %v544 = vcombine.high %v543, %v543
    %545 = vrot.lane.b32.xlu0 %v543, 64
    %v546 = vpop.permute.xlu0 %545
    %547 = vrot.lane.b32.xlu0 %v544, 64
    %v548 = vpop.permute.xlu0 %547
    %v549 = vsel %vm218, %v546, %v548
    %v550 = vsel %vm45, %v549, 0
    %552 = vmatprep.subr.mxu0 0.0
    %553 = vmatpush1.msra.mxu0 %v33
    %554 = vmatprep.subr.mxu0 0.0
    %555 = vmatpush1.msra.mxu0 %v34
    %556 = vmatprep.subr.mxu0 0.0
    %557 = vmatpush1.msra.mxu0 %v35
    %558 = vmatprep.subr.mxu0 0.0
    %559 = vmatpush1.msra.mxu0 %v36
    %560 = vmatprep.subr.mxu0 0.0
    %561 = vmatpush1.msra.mxu0 %v37
    %562 = vmatprep.subr.mxu0 0.0
    %563 = vmatpush1.msra.mxu0 %v38
    %564 = vmatprep.subr.mxu0 0.0
    %565 = vmatpush1.msra.mxu0 %v39
    %566 = vmatprep.subr.mxu0 0.0
    %567 = vmatpush1.msra.mxu0 %v40
    %568 = vmatprep.subr.mxu0 0.0
    %569 = vmatpush1.msra.mxu0 %v41
    %570 = vmatprep.subr.mxu0 0.0
    %571 = vmatpush1.msra.mxu0 %v42
    %572 = vmatprep.subr.mxu0 0.0
    %573 = vmatpush1.msra.mxu0 %v51
    %574 = vmatprep.subr.mxu0 0.0
    %575 = vmatpush1.msra.mxu0 0.0
    %576 = vmatprep.subr.mxu0 0.0
    %577 = vmatpush1.msra.mxu0 0.0
    %578 = vmatprep.subr.mxu0 0.0
    %579 = vmatpush1.msra.mxu0 0.0
    %580 = vmatprep.subr.mxu0 0.0
    %581 = vmatpush1.msra.mxu0 0.0
    %582 = vmatprep.subr.mxu0 0.0
    %583 = vmatpush1.msra.mxu0 0.0
    %584 = vmatprep.subr.mxu0 0.0
    %585 = vmatpush1.msra.mxu0 0.0
    %586 = vmatprep.subr.mxu0 0.0
    %587 = vmatpush1.msra.mxu0 0.0
    %588 = vmatprep.subr.mxu0 0.0
    %589 = vmatpush1.msra.mxu0 0.0
    %590 = vmatprep.subr.mxu0 0.0
    %591 = vmatpush1.msra.mxu0 0.0
    %592 = vmatprep.subr.mxu0 0.0
    %593 = vmatpush1.msra.mxu0 0.0
    %594 = vmatprep.subr.mxu0 0.0
    %595 = vmatpush1.msra.mxu0 0.0
    %596 = vmatprep.subr.mxu0 0.0
    %597 = vmatpush1.msra.mxu0 0.0
    %598 = vmatprep.subr.mxu0 0.0
    %599 = vmatpush1.msra.mxu0 0.0
    %600 = vmatprep.subr.mxu0 0.0
    %601 = vmatpush1.msra.mxu0 0.0
    %602 = vmatprep.subr.mxu0 0.0
    %603 = vmatpush1.msra.mxu0 0.0
    %604 = vmatprep.subr.mxu0 0.0
    %605 = vmatpush1.msra.mxu0 0.0
    %606 = vmatprep.subr.mxu0 0.0
    %607 = vmatpush1.msra.mxu0 0.0
    %608 = vmatprep.subr.mxu0 0.0
    %609 = vmatpush1.msra.mxu0 0.0
    %610 = vmatprep.subr.mxu0 0.0
    %611 = vmatpush1.msra.mxu0 0.0
    %612 = vmatprep.subr.mxu0 0.0
    %613 = vmatpush1.msra.mxu0 0.0
    %614 = vmatprep.subr.mxu0 0.0
    %615 = vmatpush1.msra.mxu0 0.0
    %616 = vmatprep.mubr.f32.mxu0 0.0
    %617 = vmatmul.mubr.f32.gmra.mrb[0].mxu0 %v550
    %v618 = vpop.f32.mrb[0].mxu0
    %v619 = vadd.f32 0.0, %v618
    %v620 = vpop.f32.mrb[0].mxu0
    %621 = vdwg.mxu0
    %v622 = vld [vmem:[%s0 + $0x2] sm:$0xf]
    %v625 = vunpack.c.l.s4 1983009808
    %v626 = vunpack.c.0.s8 %v625
    %v627 = vlaneseq
    %v628 = vshrl.u32 %v627, 7
    %v629 = vsub.s32 %v626, %v628
    %v630 = vrot.slane %v622, %v629
    %v631 = vcombine.high %v630, %v630
    %632 = vrot.lane.b32.xlu0 %v630, 32
    %v633 = vpop.permute.xlu0 %632
    %634 = vrot.lane.b32.xlu0 %v631, 32
    %v635 = vpop.permute.xlu0 %634
    %v636 = vsel %vm306, %v633, %v635
    %v637 = vsel %vm45, %v636, 0
    %639 = vmatprep.subr.mxu0 0.0
    %640 = vmatpush1.msra.mxu0 %v33
    %641 = vmatprep.subr.mxu0 0.0
    %642 = vmatpush1.msra.mxu0 %v34
    %643 = vmatprep.subr.mxu0 0.0
    %644 = vmatpush1.msra.mxu0 %v35
    %645 = vmatprep.subr.mxu0 0.0
    %646 = vmatpush1.msra.mxu0 %v36
    %647 = vmatprep.subr.mxu0 0.0
    %648 = vmatpush1.msra.mxu0 %v37
    %649 = vmatprep.subr.mxu0 0.0
    %650 = vmatpush1.msra.mxu0 %v38
    %651 = vmatprep.subr.mxu0 0.0
    %652 = vmatpush1.msra.mxu0 %v39
    %653 = vmatprep.subr.mxu0 0.0
    %654 = vmatpush1.msra.mxu0 %v40
    %655 = vmatprep.subr.mxu0 0.0
    %656 = vmatpush1.msra.mxu0 %v41
    %657 = vmatprep.subr.mxu0 0.0
    %658 = vmatpush1.msra.mxu0 %v42
    %659 = vmatprep.subr.mxu0 0.0
    %660 = vmatpush1.msra.mxu0 %v51
    %661 = vmatprep.subr.mxu0 0.0
    %662 = vmatpush1.msra.mxu0 0.0
    %663 = vmatprep.subr.mxu0 0.0
    %664 = vmatpush1.msra.mxu0 0.0
    %665 = vmatprep.subr.mxu0 0.0
    %666 = vmatpush1.msra.mxu0 0.0
    %667 = vmatprep.subr.mxu0 0.0
    %668 = vmatpush1.msra.mxu0 0.0
    %669 = vmatprep.subr.mxu0 0.0
    %670 = vmatpush1.msra.mxu0 0.0
    %671 = vmatprep.subr.mxu0 0.0
    %672 = vmatpush1.msra.mxu0 0.0
    %673 = vmatprep.subr.mxu0 0.0
    %674 = vmatpush1.msra.mxu0 0.0
    %675 = vmatprep.subr.mxu0 0.0
    %676 = vmatpush1.msra.mxu0 0.0
    %677 = vmatprep.subr.mxu0 0.0
    %678 = vmatpush1.msra.mxu0 0.0
    %679 = vmatprep.subr.mxu0 0.0
    %680 = vmatpush1.msra.mxu0 0.0
    %681 = vmatprep.subr.mxu0 0.0
    %682 = vmatpush1.msra.mxu0 0.0
    %683 = vmatprep.subr.mxu0 0.0
    %684 = vmatpush1.msra.mxu0 0.0
    %685 = vmatprep.subr.mxu0 0.0
    %686 = vmatpush1.msra.mxu0 0.0
    %687 = vmatprep.subr.mxu0 0.0
    %688 = vmatpush1.msra.mxu0 0.0
    %689 = vmatprep.subr.mxu0 0.0
    %690 = vmatpush1.msra.mxu0 0.0
    %691 = vmatprep.subr.mxu0 0.0
    %692 = vmatpush1.msra.mxu0 0.0
    %693 = vmatprep.subr.mxu0 0.0
    %694 = vmatpush1.msra.mxu0 0.0
    %695 = vmatprep.subr.mxu0 0.0
    %696 = vmatpush1.msra.mxu0 0.0
    %697 = vmatprep.subr.mxu0 0.0
    %698 = vmatpush1.msra.mxu0 0.0
    %699 = vmatprep.subr.mxu0 0.0
    %700 = vmatpush1.msra.mxu0 0.0
    %701 = vmatprep.subr.mxu0 0.0
    %702 = vmatpush1.msra.mxu0 0.0
    %703 = vmatprep.mubr.f32.mxu0 0.0
    %704 = vmatmul.mubr.f32.gmra.mrb[0].mxu0 %v637
    %v705 = vpop.f32.mrb[0].mxu0
    %v706 = vadd.f32 0.0, %v705
    %v707 = vpop.f32.mrb[0].mxu0
    %708 = vdwg.mxu0
    %v709 = vld [vmem:[%s0 + $0x4] sm:$0x3]
    %v711 = vsel %vm45, %v709, 0
    %713 = vmatprep.subr.mxu0 0.0
    %714 = vmatpush1.msra.mxu0 %v33
    %715 = vmatprep.subr.mxu0 0.0
    %716 = vmatpush1.msra.mxu0 %v34
    %717 = vmatprep.subr.mxu0 0.0
    %718 = vmatpush1.msra.mxu0 %v35
    %719 = vmatprep.subr.mxu0 0.0
    %720 = vmatpush1.msra.mxu0 %v36
    %721 = vmatprep.subr.mxu0 0.0
    %722 = vmatpush1.msra.mxu0 %v37
    %723 = vmatprep.subr.mxu0 0.0
    %724 = vmatpush1.msra.mxu0 %v38
    %725 = vmatprep.subr.mxu0 0.0
    %726 = vmatpush1.msra.mxu0 %v39
    %727 = vmatprep.subr.mxu0 0.0
    %728 = vmatpush1.msra.mxu0 %v40
    %729 = vmatprep.subr.mxu0 0.0
    %730 = vmatpush1.msra.mxu0 %v41
    %731 = vmatprep.subr.mxu0 0.0
    %732 = vmatpush1.msra.mxu0 %v42
    %733 = vmatprep.subr.mxu0 0.0
    %734 = vmatpush1.msra.mxu0 %v51
    %735 = vmatprep.subr.mxu0 0.0
    %736 = vmatpush1.msra.mxu0 0.0
    %737 = vmatprep.subr.mxu0 0.0
    %738 = vmatpush1.msra.mxu0 0.0
    %739 = vmatprep.subr.mxu0 0.0
    %740 = vmatpush1.msra.mxu0 0.0
    %741 = vmatprep.subr.mxu0 0.0
    %742 = vmatpush1.msra.mxu0 0.0
    %743 = vmatprep.subr.mxu0 0.0
    %744 = vmatpush1.msra.mxu0 0.0
    %745 = vmatprep.subr.mxu0 0.0
    %746 = vmatpush1.msra.mxu0 0.0
    %747 = vmatprep.subr.mxu0 0.0
    %748 = vmatpush1.msra.mxu0 0.0
    %749 = vmatprep.subr.mxu0 0.0
    %750 = vmatpush1.msra.mxu0 0.0
    %751 = vmatprep.subr.mxu0 0.0
    %752 = vmatpush1.msra.mxu0 0.0
    %753 = vmatprep.subr.mxu0 0.0
    %754 = vmatpush1.msra.mxu0 0.0
    %755 = vmatprep.subr.mxu0 0.0
    %756 = vmatpush1.msra.mxu0 0.0
    %757 = vmatprep.subr.mxu0 0.0
    %758 = vmatpush1.msra.mxu0 0.0
    %759 = vmatprep.subr.mxu0 0.0
    %760 = vmatpush1.msra.mxu0 0.0
    %761 = vmatprep.subr.mxu0 0.0
    %762 = vmatpush1.msra.mxu0 0.0
    %763 = vmatprep.subr.mxu0 0.0
    %764 = vmatpush1.msra.mxu0 0.0
    %765 = vmatprep.subr.mxu0 0.0
    %766 = vmatpush1.msra.mxu0 0.0
    %767 = vmatprep.subr.mxu0 0.0
    %768 = vmatpush1.msra.mxu0 0.0
    %769 = vmatprep.subr.mxu0 0.0
    %770 = vmatpush1.msra.mxu0 0.0
    %771 = vmatprep.subr.mxu0 0.0
    %772 = vmatpush1.msra.mxu0 0.0
    %773 = vmatprep.subr.mxu0 0.0
    %774 = vmatpush1.msra.mxu0 0.0
    %775 = vmatprep.subr.mxu0 0.0
    %776 = vmatpush1.msra.mxu0 0.0
    %777 = vmatprep.mubr.f32.mxu0 0.0
    %778 = vmatmul.mubr.f32.gmra.mrb[0].mxu0 %v711
    %v779 = vpop.f32.mrb[0].mxu0
    %v780 = vadd.f32 0.0, %v779
    %v781 = vpop.f32.mrb[0].mxu0
    %782 = vdwg.mxu0
    %v784 = vunpack.c.l.s4 1983009808
    %v785 = vunpack.c.0.s8 %v784
    %v786 = vlaneseq
    %v787 = vshrl.u32 %v786, 7
    %v788 = vsub.s32 %v785, %v787
    %v789 = vrot.slane %v709, %v788
    %790 = vrot.lane.b32.xlu0 %v789, 96
    %v791 = vpop.permute.xlu0 %790
    %v792 = vsel %vm45, %v791, 0
    %794 = vmatprep.subr.mxu0 0.0
    %795 = vmatpush1.msra.mxu0 %v33
    %796 = vmatprep.subr.mxu0 0.0
    %797 = vmatpush1.msra.mxu0 %v34
    %798 = vmatprep.subr.mxu0 0.0
    %799 = vmatpush1.msra.mxu0 %v35
    %800 = vmatprep.subr.mxu0 0.0
    %801 = vmatpush1.msra.mxu0 %v36
    %802 = vmatprep.subr.mxu0 0.0
    %803 = vmatpush1.msra.mxu0 %v37
    %804 = vmatprep.subr.mxu0 0.0
    %805 = vmatpush1.msra.mxu0 %v38
    %806 = vmatprep.subr.mxu0 0.0
    %807 = vmatpush1.msra.mxu0 %v39
    %808 = vmatprep.subr.mxu0 0.0
    %809 = vmatpush1.msra.mxu0 %v40
    %810 = vmatprep.subr.mxu0 0.0
    %811 = vmatpush1.msra.mxu0 %v41
    %812 = vmatprep.subr.mxu0 0.0
    %813 = vmatpush1.msra.mxu0 %v42
    %814 = vmatprep.subr.mxu0 0.0
    %815 = vmatpush1.msra.mxu0 %v51
    %816 = vmatprep.subr.mxu0 0.0
    %817 = vmatpush1.msra.mxu0 0.0
    %818 = vmatprep.subr.mxu0 0.0
    %819 = vmatpush1.msra.mxu0 0.0
    %820 = vmatprep.subr.mxu0 0.0
    %821 = vmatpush1.msra.mxu0 0.0
    %822 = vmatprep.subr.mxu0 0.0
    %823 = vmatpush1.msra.mxu0 0.0
    %824 = vmatprep.subr.mxu0 0.0
    %825 = vmatpush1.msra.mxu0 0.0
    %826 = vmatprep.subr.mxu0 0.0
    %827 = vmatpush1.msra.mxu0 0.0
    %828 = vmatprep.subr.mxu0 0.0
    %829 = vmatpush1.msra.mxu0 0.0
    %830 = vmatprep.subr.mxu0 0.0
    %831 = vmatpush1.msra.mxu0 0.0
    %832 = vmatprep.subr.mxu0 0.0
    %833 = vmatpush1.msra.mxu0 0.0
    %834 = vmatprep.subr.mxu0 0.0
    %835 = vmatpush1.msra.mxu0 0.0
    %836 = vmatprep.subr.mxu0 0.0
    %837 = vmatpush1.msra.mxu0 0.0
    %838 = vmatprep.subr.mxu0 0.0
    %839 = vmatpush1.msra.mxu0 0.0
    %840 = vmatprep.subr.mxu0 0.0
    %841 = vmatpush1.msra.mxu0 0.0
    %842 = vmatprep.subr.mxu0 0.0
    %843 = vmatpush1.msra.mxu0 0.0
    %844 = vmatprep.subr.mxu0 0.0
    %845 = vmatpush1.msra.mxu0 0.0
    %846 = vmatprep.subr.mxu0 0.0
    %847 = vmatpush1.msra.mxu0 0.0
    %848 = vmatprep.subr.mxu0 0.0
    %849 = vmatpush1.msra.mxu0 0.0
    %850 = vmatprep.subr.mxu0 0.0
    %851 = vmatpush1.msra.mxu0 0.0
    %852 = vmatprep.subr.mxu0 0.0
    %853 = vmatpush1.msra.mxu0 0.0
    %854 = vmatprep.subr.mxu0 0.0
    %855 = vmatpush1.msra.mxu0 0.0
    %856 = vmatprep.subr.mxu0 0.0
    %857 = vmatpush1.msra.mxu0 0.0
    %858 = vmatprep.mubr.f32.mxu0 0.0
    %859 = vmatmul.mubr.f32.gmra.mrb[0].mxu0 %v792
    %v860 = vpop.f32.mrb[0].mxu0
    %v861 = vadd.f32 0.0, %v860
    %v862 = vpop.f32.mrb[0].mxu0
    %863 = vdwg.mxu0
    %v864 = vld [vmem:[%s0 + $0x4] sm:$0xf]
    %v867 = vunpack.c.l.s4 1983009808
    %v868 = vunpack.c.0.s8 %v867
    %v869 = vlaneseq
    %v870 = vshrl.u32 %v869, 7
    %v871 = vsub.s32 %v868, %v870
    %v872 = vrot.slane %v864, %v871
    %v873 = vcombine.high %v872, %v872
    %874 = vrot.lane.b32.xlu0 %v872, 64
    %v875 = vpop.permute.xlu0 %874
    %876 = vrot.lane.b32.xlu0 %v873, 64
    %v877 = vpop.permute.xlu0 %876
    %v878 = vsel %vm218, %v875, %v877
    %v879 = vsel %vm45, %v878, 0
    %881 = vmatprep.subr.mxu0 0.0
    %882 = vmatpush1.msra.mxu0 %v33
    %883 = vmatprep.subr.mxu0 0.0
    %884 = vmatpush1.msra.mxu0 %v34
    %885 = vmatprep.subr.mxu0 0.0
    %886 = vmatpush1.msra.mxu0 %v35
    %887 = vmatprep.subr.mxu0 0.0
    %888 = vmatpush1.msra.mxu0 %v36
    %889 = vmatprep.subr.mxu0 0.0
    %890 = vmatpush1.msra.mxu0 %v37
    %891 = vmatprep.subr.mxu0 0.0
    %892 = vmatpush1.msra.mxu0 %v38
    %893 = vmatprep.subr.mxu0 0.0
    %894 = vmatpush1.msra.mxu0 %v39
    %895 = vmatprep.subr.mxu0 0.0
    %896 = vmatpush1.msra.mxu0 %v40
    %897 = vmatprep.subr.mxu0 0.0
    %898 = vmatpush1.msra.mxu0 %v41
    %899 = vmatprep.subr.mxu0 0.0
    %900 = vmatpush1.msra.mxu0 %v42
    %901 = vmatprep.subr.mxu0 0.0
    %902 = vmatpush1.msra.mxu0 %v51
    %903 = vmatprep.subr.mxu0 0.0
    %904 = vmatpush1.msra.mxu0 0.0
    %905 = vmatprep.subr.mxu0 0.0
    %906 = vmatpush1.msra.mxu0 0.0
    %907 = vmatprep.subr.mxu0 0.0
    %908 = vmatpush1.msra.mxu0 0.0
    %909 = vmatprep.subr.mxu0 0.0
    %910 = vmatpush1.msra.mxu0 0.0
    %911 = vmatprep.subr.mxu0 0.0
    %912 = vmatpush1.msra.mxu0 0.0
    %913 = vmatprep.subr.mxu0 0.0
    %914 = vmatpush1.msra.mxu0 0.0
    %915 = vmatprep.subr.mxu0 0.0
    %916 = vmatpush1.msra.mxu0 0.0
    %917 = vmatprep.subr.mxu0 0.0
    %918 = vmatpush1.msra.mxu0 0.0
    %919 = vmatprep.subr.mxu0 0.0
    %920 = vmatpush1.msra.mxu0 0.0
    %921 = vmatprep.subr.mxu0 0.0
    %922 = vmatpush1.msra.mxu0 0.0
    %923 = vmatprep.subr.mxu0 0.0
    %924 = vmatpush1.msra.mxu0 0.0
    %925 = vmatprep.subr.mxu0 0.0
    %926 = vmatpush1.msra.mxu0 0.0
    %927 = vmatprep.subr.mxu0 0.0
    %928 = vmatpush1.msra.mxu0 0.0
    %929 = vmatprep.subr.mxu0 0.0
    %930 = vmatpush1.msra.mxu0 0.0
    %931 = vmatprep.subr.mxu0 0.0
    %932 = vmatpush1.msra.mxu0 0.0
    %933 = vmatprep.subr.mxu0 0.0
    %934 = vmatpush1.msra.mxu0 0.0
    %935 = vmatprep.subr.mxu0 0.0
    %936 = vmatpush1.msra.mxu0 0.0
    %937 = vmatprep.subr.mxu0 0.0
    %938 = vmatpush1.msra.mxu0 0.0
    %939 = vmatprep.subr.mxu0 0.0
    %940 = vmatpush1.msra.mxu0 0.0
    %941 = vmatprep.subr.mxu0 0.0
    %942 = vmatpush1.msra.mxu0 0.0
    %943 = vmatprep.subr.mxu0 0.0
    %944 = vmatpush1.msra.mxu0 0.0
    %945 = vmatprep.mubr.f32.mxu0 0.0
    %946 = vmatmul.mubr.f32.gmra.mrb[0].mxu0 %v879
    %v947 = vpop.f32.mrb[0].mxu0
    %v948 = vadd.f32 0.0, %v947
    %v949 = vpop.f32.mrb[0].mxu0
    %950 = vdwg.mxu0
    %v951 = vld [vmem:[%s0 + $0x4] sm:$0xf]
    %v954 = vunpack.c.l.s4 1983009808
    %v955 = vunpack.c.0.s8 %v954
    %v956 = vlaneseq
    %v957 = vshrl.u32 %v956, 7
    %v958 = vsub.s32 %v955, %v957
    %v959 = vrot.slane %v951, %v958
    %v960 = vcombine.high %v959, %v959
    %961 = vrot.lane.b32.xlu0 %v959, 32
    %v962 = vpop.permute.xlu0 %961
    %963 = vrot.lane.b32.xlu0 %v960, 32
    %v964 = vpop.permute.xlu0 %963
    %v965 = vsel %vm306, %v962, %v964
    %v966 = vsel %vm45, %v965, 0
    %968 = vmatprep.subr.mxu0 0.0
    %969 = vmatpush1.msra.mxu0 %v33
    %970 = vmatprep.subr.mxu0 0.0
    %971 = vmatpush1.msra.mxu0 %v34
    %972 = vmatprep.subr.mxu0 0.0
    %973 = vmatpush1.msra.mxu0 %v35
    %974 = vmatprep.subr.mxu0 0.0
    %975 = vmatpush1.msra.mxu0 %v36
    %976 = vmatprep.subr.mxu0 0.0
    %977 = vmatpush1.msra.mxu0 %v37
    %978 = vmatprep.subr.mxu0 0.0
    %979 = vmatpush1.msra.mxu0 %v38
    %980 = vmatprep.subr.mxu0 0.0
    %981 = vmatpush1.msra.mxu0 %v39
    %982 = vmatprep.subr.mxu0 0.0
    %983 = vmatpush1.msra.mxu0 %v40
    %984 = vmatprep.subr.mxu0 0.0
    %985 = vmatpush1.msra.mxu0 %v41
    %986 = vmatprep.subr.mxu0 0.0
    %987 = vmatpush1.msra.mxu0 %v42
    %988 = vmatprep.subr.mxu0 0.0
    %989 = vmatpush1.msra.mxu0 %v51
    %990 = vmatprep.subr.mxu0 0.0
    %991 = vmatpush1.msra.mxu0 0.0
    %992 = vmatprep.subr.mxu0 0.0
    %993 = vmatpush1.msra.mxu0 0.0
    %994 = vmatprep.subr.mxu0 0.0
    %995 = vmatpush1.msra.mxu0 0.0
    %996 = vmatprep.subr.mxu0 0.0
    %997 = vmatpush1.msra.mxu0 0.0
    %998 = vmatprep.subr.mxu0 0.0
    %999 = vmatpush1.msra.mxu0 0.0
    %1000 = vmatprep.subr.mxu0 0.0
    %1001 = vmatpush1.msra.mxu0 0.0
    %1002 = vmatprep.subr.mxu0 0.0
    %1003 = vmatpush1.msra.mxu0 0.0
    %1004 = vmatprep.subr.mxu0 0.0
    %1005 = vmatpush1.msra.mxu0 0.0
    %1006 = vmatprep.subr.mxu0 0.0
    %1007 = vmatpush1.msra.mxu0 0.0
    %1008 = vmatprep.subr.mxu0 0.0
    %1009 = vmatpush1.msra.mxu0 0.0
    %1010 = vmatprep.subr.mxu0 0.0
    %1011 = vmatpush1.msra.mxu0 0.0
    %1012 = vmatprep.subr.mxu0 0.0
    %1013 = vmatpush1.msra.mxu0 0.0
    %1014 = vmatprep.subr.mxu0 0.0
    %1015 = vmatpush1.msra.mxu0 0.0
    %1016 = vmatprep.subr.mxu0 0.0
    %1017 = vmatpush1.msra.mxu0 0.0
    %1018 = vmatprep.subr.mxu0 0.0
    %1019 = vmatpush1.msra.mxu0 0.0
    %1020 = vmatprep.subr.mxu0 0.0
    %1021 = vmatpush1.msra.mxu0 0.0
    %1022 = vmatprep.subr.mxu0 0.0
    %1023 = vmatpush1.msra.mxu0 0.0
    %1024 = vmatprep.subr.mxu0 0.0
    %1025 = vmatpush1.msra.mxu0 0.0
    %1026 = vmatprep.subr.mxu0 0.0
    %1027 = vmatpush1.msra.mxu0 0.0
    %1028 = vmatprep.subr.mxu0 0.0
    %1029 = vmatpush1.msra.mxu0 0.0
    %1030 = vmatprep.subr.mxu0 0.0
    %1031 = vmatpush1.msra.mxu0 0.0
    %1032 = vmatprep.mubr.f32.mxu0 0.0
    %1033 = vmatmul.mubr.f32.gmra.mrb[0].mxu0 %v966
    %v1034 = vpop.f32.mrb[0].mxu0
    %v1035 = vadd.f32 0.0, %v1034
    %v1036 = vpop.f32.mrb[0].mxu0
    %1037 = vdwg.mxu0
    %v1038 = vld [vmem:[%s0 + $0x6] sm:$0x3]
    %v1040 = vsel %vm45, %v1038, 0
    %1042 = vmatprep.subr.mxu0 0.0
    %1043 = vmatpush1.msra.mxu0 %v33
    %1044 = vmatprep.subr.mxu0 0.0
    %1045 = vmatpush1.msra.mxu0 %v34
    %1046 = vmatprep.subr.mxu0 0.0
    %1047 = vmatpush1.msra.mxu0 %v35
    %1048 = vmatprep.subr.mxu0 0.0
    %1049 = vmatpush1.msra.mxu0 %v36
    %1050 = vmatprep.subr.mxu0 0.0
    %1051 = vmatpush1.msra.mxu0 %v37
    %1052 = vmatprep.subr.mxu0 0.0
    %1053 = vmatpush1.msra.mxu0 %v38
    %1054 = vmatprep.subr.mxu0 0.0
    %1055 = vmatpush1.msra.mxu0 %v39
    %1056 = vmatprep.subr.mxu0 0.0
    %1057 = vmatpush1.msra.mxu0 %v40
    %1058 = vmatprep.subr.mxu0 0.0
    %1059 = vmatpush1.msra.mxu0 %v41
    %1060 = vmatprep.subr.mxu0 0.0
    %1061 = vmatpush1.msra.mxu0 %v42
    %1062 = vmatprep.subr.mxu0 0.0
    %1063 = vmatpush1.msra.mxu0 %v51
    %1064 = vmatprep.subr.mxu0 0.0
    %1065 = vmatpush1.msra.mxu0 0.0
    %1066 = vmatprep.subr.mxu0 0.0
    %1067 = vmatpush1.msra.mxu0 0.0
    %1068 = vmatprep.subr.mxu0 0.0
    %1069 = vmatpush1.msra.mxu0 0.0
    %1070 = vmatprep.subr.mxu0 0.0
    %1071 = vmatpush1.msra.mxu0 0.0
    %1072 = vmatprep.subr.mxu0 0.0
    %1073 = vmatpush1.msra.mxu0 0.0
    %1074 = vmatprep.subr.mxu0 0.0
    %1075 = vmatpush1.msra.mxu0 0.0
    %1076 = vmatprep.subr.mxu0 0.0
    %1077 = vmatpush1.msra.mxu0 0.0
    %1078 = vmatprep.subr.mxu0 0.0
    %1079 = vmatpush1.msra.mxu0 0.0
    %1080 = vmatprep.subr.mxu0 0.0
    %1081 = vmatpush1.msra.mxu0 0.0
    %1082 = vmatprep.subr.mxu0 0.0
    %1083 = vmatpush1.msra.mxu0 0.0
    %1084 = vmatprep.subr.mxu0 0.0
    %1085 = vmatpush1.msra.mxu0 0.0
    %1086 = vmatprep.subr.mxu0 0.0
    %1087 = vmatpush1.msra.mxu0 0.0
    %1088 = vmatprep.subr.mxu0 0.0
    %1089 = vmatpush1.msra.mxu0 0.0
    %1090 = vmatprep.subr.mxu0 0.0
    %1091 = vmatpush1.msra.mxu0 0.0
    %1092 = vmatprep.subr.mxu0 0.0
    %1093 = vmatpush1.msra.mxu0 0.0
    %1094 = vmatprep.subr.mxu0 0.0
    %1095 = vmatpush1.msra.mxu0 0.0
    %1096 = vmatprep.subr.mxu0 0.0
    %1097 = vmatpush1.msra.mxu0 0.0
    %1098 = vmatprep.subr.mxu0 0.0
    %1099 = vmatpush1.msra.mxu0 0.0
    %1100 = vmatprep.subr.mxu0 0.0
    %1101 = vmatpush1.msra.mxu0 0.0
    %1102 = vmatprep.subr.mxu0 0.0
    %1103 = vmatpush1.msra.mxu0 0.0
    %1104 = vmatprep.subr.mxu0 0.0
    %1105 = vmatpush1.msra.mxu0 0.0
    %1106 = vmatprep.mubr.f32.mxu0 0.0
    %1107 = vmatmul.mubr.f32.gmra.mrb[0].mxu0 %v1040
    %v1108 = vpop.f32.mrb[0].mxu0
    %v1109 = vadd.f32 0.0, %v1108
    %v1110 = vpop.f32.mrb[0].mxu0
    %1111 = vdwg.mxu0
    %v1113 = vunpack.c.l.s4 1983009808
    %v1114 = vunpack.c.0.s8 %v1113
    %v1115 = vlaneseq
    %v1116 = vshrl.u32 %v1115, 7
    %v1117 = vsub.s32 %v1114, %v1116
    %v1118 = vrot.slane %v1038, %v1117
    %1119 = vrot.lane.b32.xlu0 %v1118, 96
    %v1120 = vpop.permute.xlu0 %1119
    %v1121 = vsel %vm45, %v1120, 0
    %1123 = vmatprep.subr.mxu0 0.0
    %1124 = vmatpush1.msra.mxu0 %v33
    %1125 = vmatprep.subr.mxu0 0.0
    %1126 = vmatpush1.msra.mxu0 %v34
    %1127 = vmatprep.subr.mxu0 0.0
    %1128 = vmatpush1.msra.mxu0 %v35
    %1129 = vmatprep.subr.mxu0 0.0
    %1130 = vmatpush1.msra.mxu0 %v36
    %1131 = vmatprep.subr.mxu0 0.0
    %1132 = vmatpush1.msra.mxu0 %v37
    %1133 = vmatprep.subr.mxu0 0.0
    %1134 = vmatpush1.msra.mxu0 %v38
    %1135 = vmatprep.subr.mxu0 0.0
    %1136 = vmatpush1.msra.mxu0 %v39
    %1137 = vmatprep.subr.mxu0 0.0
    %1138 = vmatpush1.msra.mxu0 %v40
    %1139 = vmatprep.subr.mxu0 0.0
    %1140 = vmatpush1.msra.mxu0 %v41
    %1141 = vmatprep.subr.mxu0 0.0
    %1142 = vmatpush1.msra.mxu0 %v42
    %1143 = vmatprep.subr.mxu0 0.0
    %1144 = vmatpush1.msra.mxu0 %v51
    %1145 = vmatprep.subr.mxu0 0.0
    %1146 = vmatpush1.msra.mxu0 0.0
    %1147 = vmatprep.subr.mxu0 0.0
    %1148 = vmatpush1.msra.mxu0 0.0
    %1149 = vmatprep.subr.mxu0 0.0
    %1150 = vmatpush1.msra.mxu0 0.0
    %1151 = vmatprep.subr.mxu0 0.0
    %1152 = vmatpush1.msra.mxu0 0.0
    %1153 = vmatprep.subr.mxu0 0.0
    %1154 = vmatpush1.msra.mxu0 0.0
    %1155 = vmatprep.subr.mxu0 0.0
    %1156 = vmatpush1.msra.mxu0 0.0
    %1157 = vmatprep.subr.mxu0 0.0
    %1158 = vmatpush1.msra.mxu0 0.0
    %1159 = vmatprep.subr.mxu0 0.0
    %1160 = vmatpush1.msra.mxu0 0.0
    %1161 = vmatprep.subr.mxu0 0.0
    %1162 = vmatpush1.msra.mxu0 0.0
    %1163 = vmatprep.subr.mxu0 0.0
    %1164 = vmatpush1.msra.mxu0 0.0
    %1165 = vmatprep.subr.mxu0 0.0
    %1166 = vmatpush1.msra.mxu0 0.0
    %1167 = vmatprep.subr.mxu0 0.0
    %1168 = vmatpush1.msra.mxu0 0.0
    %1169 = vmatprep.subr.mxu0 0.0
    %1170 = vmatpush1.msra.mxu0 0.0
    %1171 = vmatprep.subr.mxu0 0.0
    %1172 = vmatpush1.msra.mxu0 0.0
    %1173 = vmatprep.subr.mxu0 0.0
    %1174 = vmatpush1.msra.mxu0 0.0
    %1175 = vmatprep.subr.mxu0 0.0
    %1176 = vmatpush1.msra.mxu0 0.0
    %1177 = vmatprep.subr.mxu0 0.0
    %1178 = vmatpush1.msra.mxu0 0.0
    %1179 = vmatprep.subr.mxu0 0.0
    %1180 = vmatpush1.msra.mxu0 0.0
    %1181 = vmatprep.subr.mxu0 0.0
    %1182 = vmatpush1.msra.mxu0 0.0
    %1183 = vmatprep.subr.mxu0 0.0
    %1184 = vmatpush1.msra.mxu0 0.0
    %1185 = vmatprep.subr.mxu0 0.0
    %1186 = vmatpush1.msra.mxu0 0.0
    %1187 = vmatprep.mubr.f32.mxu0 0.0
    %1188 = vmatmul.mubr.f32.gmra.mrb[0].mxu0 %v1121
    %v1189 = vpop.f32.mrb[0].mxu0
    %v1190 = vadd.f32 0.0, %v1189
    %v1191 = vpop.f32.mrb[0].mxu0
    %1192 = vdwg.mxu0
    %v1193 = vld [vmem:[%s0 + $0x6] sm:$0xf]
    %v1196 = vunpack.c.l.s4 1983009808
    %v1197 = vunpack.c.0.s8 %v1196
    %v1198 = vlaneseq
    %v1199 = vshrl.u32 %v1198, 7
    %v1200 = vsub.s32 %v1197, %v1199
    %v1201 = vrot.slane %v1193, %v1200
    %v1202 = vcombine.high %v1201, %v1201
    %1203 = vrot.lane.b32.xlu0 %v1201, 64
    %v1204 = vpop.permute.xlu0 %1203
    %1205 = vrot.lane.b32.xlu0 %v1202, 64
    %v1206 = vpop.permute.xlu0 %1205
    %v1207 = vsel %vm218, %v1204, %v1206
    %v1208 = vsel %vm45, %v1207, 0
    %1210 = vmatprep.subr.mxu0 0.0
    %1211 = vmatpush1.msra.mxu0 %v33
    %1212 = vmatprep.subr.mxu0 0.0
    %1213 = vmatpush1.msra.mxu0 %v34
    %1214 = vmatprep.subr.mxu0 0.0
    %1215 = vmatpush1.msra.mxu0 %v35
    %1216 = vmatprep.subr.mxu0 0.0
    %1217 = vmatpush1.msra.mxu0 %v36
    %1218 = vmatprep.subr.mxu0 0.0
    %1219 = vmatpush1.msra.mxu0 %v37
    %1220 = vmatprep.subr.mxu0 0.0
    %1221 = vmatpush1.msra.mxu0 %v38
    %1222 = vmatprep.subr.mxu0 0.0
    %1223 = vmatpush1.msra.mxu0 %v39
    %1224 = vmatprep.subr.mxu0 0.0
    %1225 = vmatpush1.msra.mxu0 %v40
    %1226 = vmatprep.subr.mxu0 0.0
    %1227 = vmatpush1.msra.mxu0 %v41
    %1228 = vmatprep.subr.mxu0 0.0
    %1229 = vmatpush1.msra.mxu0 %v42
    %1230 = vmatprep.subr.mxu0 0.0
    %1231 = vmatpush1.msra.mxu0 %v51
    %1232 = vmatprep.subr.mxu0 0.0
    %1233 = vmatpush1.msra.mxu0 0.0
    %1234 = vmatprep.subr.mxu0 0.0
    %1235 = vmatpush1.msra.mxu0 0.0
    %1236 = vmatprep.subr.mxu0 0.0
    %1237 = vmatpush1.msra.mxu0 0.0
    %1238 = vmatprep.subr.mxu0 0.0
    %1239 = vmatpush1.msra.mxu0 0.0
    %1240 = vmatprep.subr.mxu0 0.0
    %1241 = vmatpush1.msra.mxu0 0.0
    %1242 = vmatprep.subr.mxu0 0.0
    %1243 = vmatpush1.msra.mxu0 0.0
    %1244 = vmatprep.subr.mxu0 0.0
    %1245 = vmatpush1.msra.mxu0 0.0
    %1246 = vmatprep.subr.mxu0 0.0
    %1247 = vmatpush1.msra.mxu0 0.0
    %1248 = vmatprep.subr.mxu0 0.0
    %1249 = vmatpush1.msra.mxu0 0.0
    %1250 = vmatprep.subr.mxu0 0.0
    %1251 = vmatpush1.msra.mxu0 0.0
    %1252 = vmatprep.subr.mxu0 0.0
    %1253 = vmatpush1.msra.mxu0 0.0
    %1254 = vmatprep.subr.mxu0 0.0
    %1255 = vmatpush1.msra.mxu0 0.0
    %1256 = vmatprep.subr.mxu0 0.0
    %1257 = vmatpush1.msra.mxu0 0.0
    %1258 = vmatprep.subr.mxu0 0.0
    %1259 = vmatpush1.msra.mxu0 0.0
    %1260 = vmatprep.subr.mxu0 0.0
    %1261 = vmatpush1.msra.mxu0 0.0
    %1262 = vmatprep.subr.mxu0 0.0
    %1263 = vmatpush1.msra.mxu0 0.0
    %1264 = vmatprep.subr.mxu0 0.0
    %1265 = vmatpush1.msra.mxu0 0.0
    %1266 = vmatprep.subr.mxu0 0.0
    %1267 = vmatpush1.msra.mxu0 0.0
    %1268 = vmatprep.subr.mxu0 0.0
    %1269 = vmatpush1.msra.mxu0 0.0
    %1270 = vmatprep.subr.mxu0 0.0
    %1271 = vmatpush1.msra.mxu0 0.0
    %1272 = vmatprep.subr.mxu0 0.0
    %1273 = vmatpush1.msra.mxu0 0.0
    %1274 = vmatprep.mubr.f32.mxu0 0.0
    %1275 = vmatmul.mubr.f32.gmra.mrb[0].mxu0 %v1208
    %v1276 = vpop.f32.mrb[0].mxu0
    %v1277 = vadd.f32 0.0, %v1276
    %v1278 = vpop.f32.mrb[0].mxu0
    %1279 = vdwg.mxu0
    %v1280 = vld [vmem:[%s0 + $0x6] sm:$0xf]
    %v1283 = vunpack.c.l.s4 1983009808
    %v1284 = vunpack.c.0.s8 %v1283
    %v1285 = vlaneseq
    %v1286 = vshrl.u32 %v1285, 7
    %v1287 = vsub.s32 %v1284, %v1286
    %v1288 = vrot.slane %v1280, %v1287
    %v1289 = vcombine.high %v1288, %v1288
    %1290 = vrot.lane.b32.xlu0 %v1288, 32
    %v1291 = vpop.permute.xlu0 %1290
    %1292 = vrot.lane.b32.xlu0 %v1289, 32
    %v1293 = vpop.permute.xlu0 %1292
    %v1294 = vsel %vm306, %v1291, %v1293
    %v1295 = vsel %vm45, %v1294, 0
    %1297 = vmatprep.subr.mxu0 0.0
    %1298 = vmatpush1.msra.mxu0 %v33
    %1299 = vmatprep.subr.mxu0 0.0
    %1300 = vmatpush1.msra.mxu0 %v34
    %1301 = vmatprep.subr.mxu0 0.0
    %1302 = vmatpush1.msra.mxu0 %v35
    %1303 = vmatprep.subr.mxu0 0.0
    %1304 = vmatpush1.msra.mxu0 %v36
    %1305 = vmatprep.subr.mxu0 0.0
    %1306 = vmatpush1.msra.mxu0 %v37
    %1307 = vmatprep.subr.mxu0 0.0
    %1308 = vmatpush1.msra.mxu0 %v38
    %1309 = vmatprep.subr.mxu0 0.0
    %1310 = vmatpush1.msra.mxu0 %v39
    %1311 = vmatprep.subr.mxu0 0.0
    %1312 = vmatpush1.msra.mxu0 %v40
    %1313 = vmatprep.subr.mxu0 0.0
    %1314 = vmatpush1.msra.mxu0 %v41
    %1315 = vmatprep.subr.mxu0 0.0
    %1316 = vmatpush1.msra.mxu0 %v42
    %1317 = vmatprep.subr.mxu0 0.0
    %1318 = vmatpush1.msra.mxu0 %v51
    %1319 = vmatprep.subr.mxu0 0.0
    %1320 = vmatpush1.msra.mxu0 0.0
    %1321 = vmatprep.subr.mxu0 0.0
    %1322 = vmatpush1.msra.mxu0 0.0
    %1323 = vmatprep.subr.mxu0 0.0
    %1324 = vmatpush1.msra.mxu0 0.0
    %1325 = vmatprep.subr.mxu0 0.0
    %1326 = vmatpush1.msra.mxu0 0.0
    %1327 = vmatprep.subr.mxu0 0.0
    %1328 = vmatpush1.msra.mxu0 0.0
    %1329 = vmatprep.subr.mxu0 0.0
    %1330 = vmatpush1.msra.mxu0 0.0
    %1331 = vmatprep.subr.mxu0 0.0
    %1332 = vmatpush1.msra.mxu0 0.0
    %1333 = vmatprep.subr.mxu0 0.0
    %1334 = vmatpush1.msra.mxu0 0.0
    %1335 = vmatprep.subr.mxu0 0.0
    %1336 = vmatpush1.msra.mxu0 0.0
    %1337 = vmatprep.subr.mxu0 0.0
    %1338 = vmatpush1.msra.mxu0 0.0
    %1339 = vmatprep.subr.mxu0 0.0
    %1340 = vmatpush1.msra.mxu0 0.0
    %1341 = vmatprep.subr.mxu0 0.0
    %1342 = vmatpush1.msra.mxu0 0.0
    %1343 = vmatprep.subr.mxu0 0.0
    %1344 = vmatpush1.msra.mxu0 0.0
    %1345 = vmatprep.subr.mxu0 0.0
    %1346 = vmatpush1.msra.mxu0 0.0
    %1347 = vmatprep.subr.mxu0 0.0
    %1348 = vmatpush1.msra.mxu0 0.0
    %1349 = vmatprep.subr.mxu0 0.0
    %1350 = vmatpush1.msra.mxu0 0.0
    %1351 = vmatprep.subr.mxu0 0.0
    %1352 = vmatpush1.msra.mxu0 0.0
    %1353 = vmatprep.subr.mxu0 0.0
    %1354 = vmatpush1.msra.mxu0 0.0
    %1355 = vmatprep.subr.mxu0 0.0
    %1356 = vmatpush1.msra.mxu0 0.0
    %1357 = vmatprep.subr.mxu0 0.0
    %1358 = vmatpush1.msra.mxu0 0.0
    %1359 = vmatprep.subr.mxu0 0.0
    %1360 = vmatpush1.msra.mxu0 0.0
    %1361 = vmatprep.mubr.f32.mxu0 0.0
    %1362 = vmatmul.mubr.f32.gmra.mrb[0].mxu0 %v1295
    %v1363 = vpop.f32.mrb[0].mxu0
    %v1364 = vadd.f32 0.0, %v1363
    %v1365 = vpop.f32.mrb[0].mxu0
    %1366 = vdwg.mxu0
    %v1367 = vld [vmem:[%s0 + $0x8] sm:$0x3]
    %v1369 = vsel %vm45, %v1367, 0
    %1371 = vmatprep.subr.mxu0 0.0
    %1372 = vmatpush1.msra.mxu0 %v33
    %1373 = vmatprep.subr.mxu0 0.0
    %1374 = vmatpush1.msra.mxu0 %v34
    %1375 = vmatprep.subr.mxu0 0.0
    %1376 = vmatpush1.msra.mxu0 %v35
    %1377 = vmatprep.subr.mxu0 0.0
    %1378 = vmatpush1.msra.mxu0 %v36
    %1379 = vmatprep.subr.mxu0 0.0
    %1380 = vmatpush1.msra.mxu0 %v37
    %1381 = vmatprep.subr.mxu0 0.0
    %1382 = vmatpush1.msra.mxu0 %v38
    %1383 = vmatprep.subr.mxu0 0.0
    %1384 = vmatpush1.msra.mxu0 %v39
    %1385 = vmatprep.subr.mxu0 0.0
    %1386 = vmatpush1.msra.mxu0 %v40
    %1387 = vmatprep.subr.mxu0 0.0
    %1388 = vmatpush1.msra.mxu0 %v41
    %1389 = vmatprep.subr.mxu0 0.0
    %1390 = vmatpush1.msra.mxu0 %v42
    %1391 = vmatprep.subr.mxu0 0.0
    %1392 = vmatpush1.msra.mxu0 %v51
    %1393 = vmatprep.subr.mxu0 0.0
    %1394 = vmatpush1.msra.mxu0 0.0
    %1395 = vmatprep.subr.mxu0 0.0
    %1396 = vmatpush1.msra.mxu0 0.0
    %1397 = vmatprep.subr.mxu0 0.0
    %1398 = vmatpush1.msra.mxu0 0.0
    %1399 = vmatprep.subr.mxu0 0.0
    %1400 = vmatpush1.msra.mxu0 0.0
    %1401 = vmatprep.subr.mxu0 0.0
    %1402 = vmatpush1.msra.mxu0 0.0
    %1403 = vmatprep.subr.mxu0 0.0
    %1404 = vmatpush1.msra.mxu0 0.0
    %1405 = vmatprep.subr.mxu0 0.0
    %1406 = vmatpush1.msra.mxu0 0.0
    %1407 = vmatprep.subr.mxu0 0.0
    %1408 = vmatpush1.msra.mxu0 0.0
    %1409 = vmatprep.subr.mxu0 0.0
    %1410 = vmatpush1.msra.mxu0 0.0
    %1411 = vmatprep.subr.mxu0 0.0
    %1412 = vmatpush1.msra.mxu0 0.0
    %1413 = vmatprep.subr.mxu0 0.0
    %1414 = vmatpush1.msra.mxu0 0.0
    %1415 = vmatprep.subr.mxu0 0.0
    %1416 = vmatpush1.msra.mxu0 0.0
    %1417 = vmatprep.subr.mxu0 0.0
    %1418 = vmatpush1.msra.mxu0 0.0
    %1419 = vmatprep.subr.mxu0 0.0
    %1420 = vmatpush1.msra.mxu0 0.0
    %1421 = vmatprep.subr.mxu0 0.0
    %1422 = vmatpush1.msra.mxu0 0.0
    %1423 = vmatprep.subr.mxu0 0.0
    %1424 = vmatpush1.msra.mxu0 0.0
    %1425 = vmatprep.subr.mxu0 0.0
    %1426 = vmatpush1.msra.mxu0 0.0
    %1427 = vmatprep.subr.mxu0 0.0
    %1428 = vmatpush1.msra.mxu0 0.0
    %1429 = vmatprep.subr.mxu0 0.0
    %1430 = vmatpush1.msra.mxu0 0.0
    %1431 = vmatprep.subr.mxu0 0.0
    %1432 = vmatpush1.msra.mxu0 0.0
    %1433 = vmatprep.subr.mxu0 0.0
    %1434 = vmatpush1.msra.mxu0 0.0
    %1435 = vmatprep.mubr.f32.mxu0 0.0
    %1436 = vmatmul.mubr.f32.gmra.mrb[0].mxu0 %v1369
    %v1437 = vpop.f32.mrb[0].mxu0
    %v1438 = vadd.f32 0.0, %v1437
    %v1439 = vpop.f32.mrb[0].mxu0
    %1440 = vdwg.mxu0
    %v1442 = vunpack.c.l.s4 1983009808
    %v1443 = vunpack.c.0.s8 %v1442
    %v1444 = vlaneseq
    %v1445 = vshrl.u32 %v1444, 7
    %v1446 = vsub.s32 %v1443, %v1445
    %v1447 = vrot.slane %v1367, %v1446
    %1448 = vrot.lane.b32.xlu0 %v1447, 96
    %v1449 = vpop.permute.xlu0 %1448
    %v1450 = vsel %vm45, %v1449, 0
    %1452 = vmatprep.subr.mxu0 0.0
    %1453 = vmatpush1.msra.mxu0 %v33
    %1454 = vmatprep.subr.mxu0 0.0
    %1455 = vmatpush1.msra.mxu0 %v34
    %1456 = vmatprep.subr.mxu0 0.0
    %1457 = vmatpush1.msra.mxu0 %v35
    %1458 = vmatprep.subr.mxu0 0.0
    %1459 = vmatpush1.msra.mxu0 %v36
    %1460 = vmatprep.subr.mxu0 0.0
    %1461 = vmatpush1.msra.mxu0 %v37
    %1462 = vmatprep.subr.mxu0 0.0
    %1463 = vmatpush1.msra.mxu0 %v38
    %1464 = vmatprep.subr.mxu0 0.0
    %1465 = vmatpush1.msra.mxu0 %v39
    %1466 = vmatprep.subr.mxu0 0.0
    %1467 = vmatpush1.msra.mxu0 %v40
    %1468 = vmatprep.subr.mxu0 0.0
    %1469 = vmatpush1.msra.mxu0 %v41
    %1470 = vmatprep.subr.mxu0 0.0
    %1471 = vmatpush1.msra.mxu0 %v42
    %1472 = vmatprep.subr.mxu0 0.0
    %1473 = vmatpush1.msra.mxu0 %v51
    %1474 = vmatprep.subr.mxu0 0.0
    %1475 = vmatpush1.msra.mxu0 0.0
    %1476 = vmatprep.subr.mxu0 0.0
    %1477 = vmatpush1.msra.mxu0 0.0
    %1478 = vmatprep.subr.mxu0 0.0
    %1479 = vmatpush1.msra.mxu0 0.0
    %1480 = vmatprep.subr.mxu0 0.0
    %1481 = vmatpush1.msra.mxu0 0.0
    %1482 = vmatprep.subr.mxu0 0.0
    %1483 = vmatpush1.msra.mxu0 0.0
    %1484 = vmatprep.subr.mxu0 0.0
    %1485 = vmatpush1.msra.mxu0 0.0
    %1486 = vmatprep.subr.mxu0 0.0
    %1487 = vmatpush1.msra.mxu0 0.0
    %1488 = vmatprep.subr.mxu0 0.0
    %1489 = vmatpush1.msra.mxu0 0.0
    %1490 = vmatprep.subr.mxu0 0.0
    %1491 = vmatpush1.msra.mxu0 0.0
    %1492 = vmatprep.subr.mxu0 0.0
    %1493 = vmatpush1.msra.mxu0 0.0
    %1494 = vmatprep.subr.mxu0 0.0
    %1495 = vmatpush1.msra.mxu0 0.0
    %1496 = vmatprep.subr.mxu0 0.0
    %1497 = vmatpush1.msra.mxu0 0.0
    %1498 = vmatprep.subr.mxu0 0.0
    %1499 = vmatpush1.msra.mxu0 0.0
    %1500 = vmatprep.subr.mxu0 0.0
    %1501 = vmatpush1.msra.mxu0 0.0
    %1502 = vmatprep.subr.mxu0 0.0
    %1503 = vmatpush1.msra.mxu0 0.0
    %1504 = vmatprep.subr.mxu0 0.0
    %1505 = vmatpush1.msra.mxu0 0.0
    %1506 = vmatprep.subr.mxu0 0.0
    %1507 = vmatpush1.msra.mxu0 0.0
    %1508 = vmatprep.subr.mxu0 0.0
    %1509 = vmatpush1.msra.mxu0 0.0
    %1510 = vmatprep.subr.mxu0 0.0
    %1511 = vmatpush1.msra.mxu0 0.0
    %1512 = vmatprep.subr.mxu0 0.0
    %1513 = vmatpush1.msra.mxu0 0.0
    %1514 = vmatprep.subr.mxu0 0.0
    %1515 = vmatpush1.msra.mxu0 0.0
    %1516 = vmatprep.mubr.f32.mxu0 0.0
    %1517 = vmatmul.mubr.f32.gmra.mrb[0].mxu0 %v1450
    %v1518 = vpop.f32.mrb[0].mxu0
    %v1519 = vadd.f32 0.0, %v1518
    %v1520 = vpop.f32.mrb[0].mxu0
    %1521 = vdwg.mxu0
    %v1522 = vld [vmem:[%s0 + $0x8] sm:$0xf]
    %v1525 = vunpack.c.l.s4 1983009808
    %v1526 = vunpack.c.0.s8 %v1525
    %v1527 = vlaneseq
    %v1528 = vshrl.u32 %v1527, 7
    %v1529 = vsub.s32 %v1526, %v1528
    %v1530 = vrot.slane %v1522, %v1529
    %v1531 = vcombine.high %v1530, %v1530
    %1532 = vrot.lane.b32.xlu0 %v1530, 64
    %v1533 = vpop.permute.xlu0 %1532
    %1534 = vrot.lane.b32.xlu0 %v1531, 64
    %v1535 = vpop.permute.xlu0 %1534
    %v1536 = vsel %vm218, %v1533, %v1535
    %v1537 = vsel %vm45, %v1536, 0
    %1539 = vmatprep.subr.mxu0 0.0
    %1540 = vmatpush1.msra.mxu0 %v33
    %1541 = vmatprep.subr.mxu0 0.0
    %1542 = vmatpush1.msra.mxu0 %v34
    %1543 = vmatprep.subr.mxu0 0.0
    %1544 = vmatpush1.msra.mxu0 %v35
    %1545 = vmatprep.subr.mxu0 0.0
    %1546 = vmatpush1.msra.mxu0 %v36
    %1547 = vmatprep.subr.mxu0 0.0
    %1548 = vmatpush1.msra.mxu0 %v37
    %1549 = vmatprep.subr.mxu0 0.0
    %1550 = vmatpush1.msra.mxu0 %v38
    %1551 = vmatprep.subr.mxu0 0.0
    %1552 = vmatpush1.msra.mxu0 %v39
    %1553 = vmatprep.subr.mxu0 0.0
    %1554 = vmatpush1.msra.mxu0 %v40
    %1555 = vmatprep.subr.mxu0 0.0
    %1556 = vmatpush1.msra.mxu0 %v41
    %1557 = vmatprep.subr.mxu0 0.0
    %1558 = vmatpush1.msra.mxu0 %v42
    %1559 = vmatprep.subr.mxu0 0.0
    %1560 = vmatpush1.msra.mxu0 %v51
    %1561 = vmatprep.subr.mxu0 0.0
    %1562 = vmatpush1.msra.mxu0 0.0
    %1563 = vmatprep.subr.mxu0 0.0
    %1564 = vmatpush1.msra.mxu0 0.0
    %1565 = vmatprep.subr.mxu0 0.0
    %1566 = vmatpush1.msra.mxu0 0.0
    %1567 = vmatprep.subr.mxu0 0.0
    %1568 = vmatpush1.msra.mxu0 0.0
    %1569 = vmatprep.subr.mxu0 0.0
    %1570 = vmatpush1.msra.mxu0 0.0
    %1571 = vmatprep.subr.mxu0 0.0
    %1572 = vmatpush1.msra.mxu0 0.0
    %1573 = vmatprep.subr.mxu0 0.0
    %1574 = vmatpush1.msra.mxu0 0.0
    %1575 = vmatprep.subr.mxu0 0.0
    %1576 = vmatpush1.msra.mxu0 0.0
    %1577 = vmatprep.subr.mxu0 0.0
    %1578 = vmatpush1.msra.mxu0 0.0
    %1579 = vmatprep.subr.mxu0 0.0
    %1580 = vmatpush1.msra.mxu0 0.0
    %1581 = vmatprep.subr.mxu0 0.0
    %1582 = vmatpush1.msra.mxu0 0.0
    %1583 = vmatprep.subr.mxu0 0.0
    %1584 = vmatpush1.msra.mxu0 0.0
    %1585 = vmatprep.subr.mxu0 0.0
    %1586 = vmatpush1.msra.mxu0 0.0
    %1587 = vmatprep.subr.mxu0 0.0
    %1588 = vmatpush1.msra.mxu0 0.0
    %1589 = vmatprep.subr.mxu0 0.0
    %1590 = vmatpush1.msra.mxu0 0.0
    %1591 = vmatprep.subr.mxu0 0.0
    %1592 = vmatpush1.msra.mxu0 0.0
    %1593 = vmatprep.subr.mxu0 0.0
    %1594 = vmatpush1.msra.mxu0 0.0
    %1595 = vmatprep.subr.mxu0 0.0
    %1596 = vmatpush1.msra.mxu0 0.0
    %1597 = vmatprep.subr.mxu0 0.0
    %1598 = vmatpush1.msra.mxu0 0.0
    %1599 = vmatprep.subr.mxu0 0.0
    %1600 = vmatpush1.msra.mxu0 0.0
    %1601 = vmatprep.subr.mxu0 0.0
    %1602 = vmatpush1.msra.mxu0 0.0
    %1603 = vmatprep.mubr.f32.mxu0 0.0
    %1604 = vmatmul.mubr.f32.gmra.mrb[0].mxu0 %v1537
    %v1605 = vpop.f32.mrb[0].mxu0
    %v1606 = vadd.f32 0.0, %v1605
    %v1607 = vpop.f32.mrb[0].mxu0
    %1608 = vdwg.mxu0
    %v1609 = vld [vmem:[%s0 + $0x8] sm:$0xf]
    %v1612 = vunpack.c.l.s4 1983009808
    %v1613 = vunpack.c.0.s8 %v1612
    %v1614 = vlaneseq
    %v1615 = vshrl.u32 %v1614, 7
    %v1616 = vsub.s32 %v1613, %v1615
    %v1617 = vrot.slane %v1609, %v1616
    %v1618 = vcombine.high %v1617, %v1617
    %1619 = vrot.lane.b32.xlu0 %v1617, 32
    %v1620 = vpop.permute.xlu0 %1619
    %1621 = vrot.lane.b32.xlu0 %v1618, 32
    %v1622 = vpop.permute.xlu0 %1621
    %v1623 = vsel %vm306, %v1620, %v1622
    %v1624 = vsel %vm45, %v1623, 0
    %1626 = vmatprep.subr.mxu0 0.0
    %1627 = vmatpush1.msra.mxu0 %v33
    %1628 = vmatprep.subr.mxu0 0.0
    %1629 = vmatpush1.msra.mxu0 %v34
    %1630 = vmatprep.subr.mxu0 0.0
    %1631 = vmatpush1.msra.mxu0 %v35
    %1632 = vmatprep.subr.mxu0 0.0
    %1633 = vmatpush1.msra.mxu0 %v36
    %1634 = vmatprep.subr.mxu0 0.0
    %1635 = vmatpush1.msra.mxu0 %v37
    %1636 = vmatprep.subr.mxu0 0.0
    %1637 = vmatpush1.msra.mxu0 %v38
    %1638 = vmatprep.subr.mxu0 0.0
    %1639 = vmatpush1.msra.mxu0 %v39
    %1640 = vmatprep.subr.mxu0 0.0
    %1641 = vmatpush1.msra.mxu0 %v40
    %1642 = vmatprep.subr.mxu0 0.0
    %1643 = vmatpush1.msra.mxu0 %v41
    %1644 = vmatprep.subr.mxu0 0.0
    %1645 = vmatpush1.msra.mxu0 %v42
    %1646 = vmatprep.subr.mxu0 0.0
    %1647 = vmatpush1.msra.mxu0 %v51
    %1648 = vmatprep.subr.mxu0 0.0
    %1649 = vmatpush1.msra.mxu0 0.0
    %1650 = vmatprep.subr.mxu0 0.0
    %1651 = vmatpush1.msra.mxu0 0.0
    %1652 = vmatprep.subr.mxu0 0.0
    %1653 = vmatpush1.msra.mxu0 0.0
    %1654 = vmatprep.subr.mxu0 0.0
    %1655 = vmatpush1.msra.mxu0 0.0
    %1656 = vmatprep.subr.mxu0 0.0
    %1657 = vmatpush1.msra.mxu0 0.0
    %1658 = vmatprep.subr.mxu0 0.0
    %1659 = vmatpush1.msra.mxu0 0.0
    %1660 = vmatprep.subr.mxu0 0.0
    %1661 = vmatpush1.msra.mxu0 0.0
    %1662 = vmatprep.subr.mxu0 0.0
    %1663 = vmatpush1.msra.mxu0 0.0
    %1664 = vmatprep.subr.mxu0 0.0
    %1665 = vmatpush1.msra.mxu0 0.0
    %1666 = vmatprep.subr.mxu0 0.0
    %1667 = vmatpush1.msra.mxu0 0.0
    %1668 = vmatprep.subr.mxu0 0.0
    %1669 = vmatpush1.msra.mxu0 0.0
    %1670 = vmatprep.subr.mxu0 0.0
    %1671 = vmatpush1.msra.mxu0 0.0
    %1672 = vmatprep.subr.mxu0 0.0
    %1673 = vmatpush1.msra.mxu0 0.0
    %1674 = vmatprep.subr.mxu0 0.0
    %1675 = vmatpush1.msra.mxu0 0.0
    %1676 = vmatprep.subr.mxu0 0.0
    %1677 = vmatpush1.msra.mxu0 0.0
    %1678 = vmatprep.subr.mxu0 0.0
    %1679 = vmatpush1.msra.mxu0 0.0
    %1680 = vmatprep.subr.mxu0 0.0
    %1681 = vmatpush1.msra.mxu0 0.0
    %1682 = vmatprep.subr.mxu0 0.0
    %1683 = vmatpush1.msra.mxu0 0.0
    %1684 = vmatprep.subr.mxu0 0.0
    %1685 = vmatpush1.msra.mxu0 0.0
    %1686 = vmatprep.subr.mxu0 0.0
    %1687 = vmatpush1.msra.mxu0 0.0
    %1688 = vmatprep.subr.mxu0 0.0
    %1689 = vmatpush1.msra.mxu0 0.0
    %1690 = vmatprep.mubr.f32.mxu0 0.0
    %1691 = vmatmul.mubr.f32.gmra.mrb[0].mxu0 %v1624
    %v1692 = vpop.f32.mrb[0].mxu0
    %v1693 = vadd.f32 0.0, %v1692
    %v1694 = vpop.f32.mrb[0].mxu0
    %1695 = vdwg.mxu0
    %v1696 = vld [vmem:[%s0 + $0xa] sm:$0x3]
    %v1698 = vsel %vm45, %v1696, 0
    %1700 = vmatprep.subr.mxu0 0.0
    %1701 = vmatpush1.msra.mxu0 %v33
    %1702 = vmatprep.subr.mxu0 0.0
    %1703 = vmatpush1.msra.mxu0 %v34
    %1704 = vmatprep.subr.mxu0 0.0
    %1705 = vmatpush1.msra.mxu0 %v35
    %1706 = vmatprep.subr.mxu0 0.0
    %1707 = vmatpush1.msra.mxu0 %v36
    %1708 = vmatprep.subr.mxu0 0.0
    %1709 = vmatpush1.msra.mxu0 %v37
    %1710 = vmatprep.subr.mxu0 0.0
    %1711 = vmatpush1.msra.mxu0 %v38
    %1712 = vmatprep.subr.mxu0 0.0
    %1713 = vmatpush1.msra.mxu0 %v39
    %1714 = vmatprep.subr.mxu0 0.0
    %1715 = vmatpush1.msra.mxu0 %v40
    %1716 = vmatprep.subr.mxu0 0.0
    %1717 = vmatpush1.msra.mxu0 %v41
    %1718 = vmatprep.subr.mxu0 0.0
    %1719 = vmatpush1.msra.mxu0 %v42
    %1720 = vmatprep.subr.mxu0 0.0
    %1721 = vmatpush1.msra.mxu0 %v51
    %1722 = vmatprep.subr.mxu0 0.0
    %1723 = vmatpush1.msra.mxu0 0.0
    %1724 = vmatprep.subr.mxu0 0.0
    %1725 = vmatpush1.msra.mxu0 0.0
    %1726 = vmatprep.subr.mxu0 0.0
    %1727 = vmatpush1.msra.mxu0 0.0
    %1728 = vmatprep.subr.mxu0 0.0
    %1729 = vmatpush1.msra.mxu0 0.0
    %1730 = vmatprep.subr.mxu0 0.0
    %1731 = vmatpush1.msra.mxu0 0.0
    %1732 = vmatprep.subr.mxu0 0.0
    %1733 = vmatpush1.msra.mxu0 0.0
    %1734 = vmatprep.subr.mxu0 0.0
    %1735 = vmatpush1.msra.mxu0 0.0
    %1736 = vmatprep.subr.mxu0 0.0
    %1737 = vmatpush1.msra.mxu0 0.0
    %1738 = vmatprep.subr.mxu0 0.0
    %1739 = vmatpush1.msra.mxu0 0.0
    %1740 = vmatprep.subr.mxu0 0.0
    %1741 = vmatpush1.msra.mxu0 0.0
    %1742 = vmatprep.subr.mxu0 0.0
    %1743 = vmatpush1.msra.mxu0 0.0
    %1744 = vmatprep.subr.mxu0 0.0
    %1745 = vmatpush1.msra.mxu0 0.0
    %1746 = vmatprep.subr.mxu0 0.0
    %1747 = vmatpush1.msra.mxu0 0.0
    %1748 = vmatprep.subr.mxu0 0.0
    %1749 = vmatpush1.msra.mxu0 0.0
    %1750 = vmatprep.subr.mxu0 0.0
    %1751 = vmatpush1.msra.mxu0 0.0
    %1752 = vmatprep.subr.mxu0 0.0
    %1753 = vmatpush1.msra.mxu0 0.0
    %1754 = vmatprep.subr.mxu0 0.0
    %1755 = vmatpush1.msra.mxu0 0.0
    %1756 = vmatprep.subr.mxu0 0.0
    %1757 = vmatpush1.msra.mxu0 0.0
    %1758 = vmatprep.subr.mxu0 0.0
    %1759 = vmatpush1.msra.mxu0 0.0
    %1760 = vmatprep.subr.mxu0 0.0
    %1761 = vmatpush1.msra.mxu0 0.0
    %1762 = vmatprep.subr.mxu0 0.0
    %1763 = vmatpush1.msra.mxu0 0.0
    %1764 = vmatprep.mubr.f32.mxu0 0.0
    %1765 = vmatmul.mubr.f32.gmra.mrb[0].mxu0 %v1698
    %v1766 = vpop.f32.mrb[0].mxu0
    %v1767 = vadd.f32 0.0, %v1766
    %v1768 = vpop.f32.mrb[0].mxu0
    %1769 = vdwg.mxu0
    %v1771 = vunpack.c.l.s4 1983009808
    %v1772 = vunpack.c.0.s8 %v1771
    %v1773 = vlaneseq
    %v1774 = vshrl.u32 %v1773, 7
    %v1775 = vsub.s32 %v1772, %v1774
    %v1776 = vrot.slane %v1696, %v1775
    %1777 = vrot.lane.b32.xlu0 %v1776, 96
    %v1778 = vpop.permute.xlu0 %1777
    %v1779 = vsel %vm45, %v1778, 0
    %1781 = vmatprep.subr.mxu0 0.0
    %1782 = vmatpush1.msra.mxu0 %v33
    %1783 = vmatprep.subr.mxu0 0.0
    %1784 = vmatpush1.msra.mxu0 %v34
    %1785 = vmatprep.subr.mxu0 0.0
    %1786 = vmatpush1.msra.mxu0 %v35
    %1787 = vmatprep.subr.mxu0 0.0
    %1788 = vmatpush1.msra.mxu0 %v36
    %1789 = vmatprep.subr.mxu0 0.0
    %1790 = vmatpush1.msra.mxu0 %v37
    %1791 = vmatprep.subr.mxu0 0.0
    %1792 = vmatpush1.msra.mxu0 %v38
    %1793 = vmatprep.subr.mxu0 0.0
    %1794 = vmatpush1.msra.mxu0 %v39
    %1795 = vmatprep.subr.mxu0 0.0
    %1796 = vmatpush1.msra.mxu0 %v40
    %1797 = vmatprep.subr.mxu0 0.0
    %1798 = vmatpush1.msra.mxu0 %v41
    %1799 = vmatprep.subr.mxu0 0.0
    %1800 = vmatpush1.msra.mxu0 %v42
    %1801 = vmatprep.subr.mxu0 0.0
    %1802 = vmatpush1.msra.mxu0 %v51
    %1803 = vmatprep.subr.mxu0 0.0
    %1804 = vmatpush1.msra.mxu0 0.0
    %1805 = vmatprep.subr.mxu0 0.0
    %1806 = vmatpush1.msra.mxu0 0.0
    %1807 = vmatprep.subr.mxu0 0.0
    %1808 = vmatpush1.msra.mxu0 0.0
    %1809 = vmatprep.subr.mxu0 0.0
    %1810 = vmatpush1.msra.mxu0 0.0
    %1811 = vmatprep.subr.mxu0 0.0
    %1812 = vmatpush1.msra.mxu0 0.0
    %1813 = vmatprep.subr.mxu0 0.0
    %1814 = vmatpush1.msra.mxu0 0.0
    %1815 = vmatprep.subr.mxu0 0.0
    %1816 = vmatpush1.msra.mxu0 0.0
    %1817 = vmatprep.subr.mxu0 0.0
    %1818 = vmatpush1.msra.mxu0 0.0
    %1819 = vmatprep.subr.mxu0 0.0
    %1820 = vmatpush1.msra.mxu0 0.0
    %1821 = vmatprep.subr.mxu0 0.0
    %1822 = vmatpush1.msra.mxu0 0.0
    %1823 = vmatprep.subr.mxu0 0.0
    %1824 = vmatpush1.msra.mxu0 0.0
    %1825 = vmatprep.subr.mxu0 0.0
    %1826 = vmatpush1.msra.mxu0 0.0
    %1827 = vmatprep.subr.mxu0 0.0
    %1828 = vmatpush1.msra.mxu0 0.0
    %1829 = vmatprep.subr.mxu0 0.0
    %1830 = vmatpush1.msra.mxu0 0.0
    %1831 = vmatprep.subr.mxu0 0.0
    %1832 = vmatpush1.msra.mxu0 0.0
    %1833 = vmatprep.subr.mxu0 0.0
    %1834 = vmatpush1.msra.mxu0 0.0
    %1835 = vmatprep.subr.mxu0 0.0
    %1836 = vmatpush1.msra.mxu0 0.0
    %1837 = vmatprep.subr.mxu0 0.0
    %1838 = vmatpush1.msra.mxu0 0.0
    %1839 = vmatprep.subr.mxu0 0.0
    %1840 = vmatpush1.msra.mxu0 0.0
    %1841 = vmatprep.subr.mxu0 0.0
    %1842 = vmatpush1.msra.mxu0 0.0
    %1843 = vmatprep.subr.mxu0 0.0
    %1844 = vmatpush1.msra.mxu0 0.0
    %1845 = vmatprep.mubr.f32.mxu0 0.0
    %1846 = vmatmul.mubr.f32.gmra.mrb[0].mxu0 %v1779
    %v1847 = vpop.f32.mrb[0].mxu0
    %v1848 = vadd.f32 0.0, %v1847
    %v1849 = vpop.f32.mrb[0].mxu0
    %1850 = vdwg.mxu0
    %v1851 = vld [vmem:[%s0 + $0xa] sm:$0xf]
    %v1854 = vunpack.c.l.s4 1983009808
    %v1855 = vunpack.c.0.s8 %v1854
    %v1856 = vlaneseq
    %v1857 = vshrl.u32 %v1856, 7
    %v1858 = vsub.s32 %v1855, %v1857
    %v1859 = vrot.slane %v1851, %v1858
    %v1860 = vcombine.high %v1859, %v1859
    %1861 = vrot.lane.b32.xlu0 %v1859, 64
    %v1862 = vpop.permute.xlu0 %1861
    %1863 = vrot.lane.b32.xlu0 %v1860, 64
    %v1864 = vpop.permute.xlu0 %1863
    %v1865 = vsel %vm218, %v1862, %v1864
    %v1866 = vsel %vm45, %v1865, 0
    %1868 = vmatprep.subr.mxu0 0.0
    %1869 = vmatpush1.msra.mxu0 %v33
    %1870 = vmatprep.subr.mxu0 0.0
    %1871 = vmatpush1.msra.mxu0 %v34
    %1872 = vmatprep.subr.mxu0 0.0
    %1873 = vmatpush1.msra.mxu0 %v35
    %1874 = vmatprep.subr.mxu0 0.0
    %1875 = vmatpush1.msra.mxu0 %v36
    %1876 = vmatprep.subr.mxu0 0.0
    %1877 = vmatpush1.msra.mxu0 %v37
    %1878 = vmatprep.subr.mxu0 0.0
    %1879 = vmatpush1.msra.mxu0 %v38
    %1880 = vmatprep.subr.mxu0 0.0
    %1881 = vmatpush1.msra.mxu0 %v39
    %1882 = vmatprep.subr.mxu0 0.0
    %1883 = vmatpush1.msra.mxu0 %v40
    %1884 = vmatprep.subr.mxu0 0.0
    %1885 = vmatpush1.msra.mxu0 %v41
    %1886 = vmatprep.subr.mxu0 0.0
    %1887 = vmatpush1.msra.mxu0 %v42
    %1888 = vmatprep.subr.mxu0 0.0
    %1889 = vmatpush1.msra.mxu0 %v51
    %1890 = vmatprep.subr.mxu0 0.0
    %1891 = vmatpush1.msra.mxu0 0.0
    %1892 = vmatprep.subr.mxu0 0.0
    %1893 = vmatpush1.msra.mxu0 0.0
    %1894 = vmatprep.subr.mxu0 0.0
    %1895 = vmatpush1.msra.mxu0 0.0
    %1896 = vmatprep.subr.mxu0 0.0
    %1897 = vmatpush1.msra.mxu0 0.0
    %1898 = vmatprep.subr.mxu0 0.0
    %1899 = vmatpush1.msra.mxu0 0.0
    %1900 = vmatprep.subr.mxu0 0.0
    %1901 = vmatpush1.msra.mxu0 0.0
    %1902 = vmatprep.subr.mxu0 0.0
    %1903 = vmatpush1.msra.mxu0 0.0
    %1904 = vmatprep.subr.mxu0 0.0
    %1905 = vmatpush1.msra.mxu0 0.0
    %1906 = vmatprep.subr.mxu0 0.0
    %1907 = vmatpush1.msra.mxu0 0.0
    %1908 = vmatprep.subr.mxu0 0.0
    %1909 = vmatpush1.msra.mxu0 0.0
    %1910 = vmatprep.subr.mxu0 0.0
    %1911 = vmatpush1.msra.mxu0 0.0
    %1912 = vmatprep.subr.mxu0 0.0
    %1913 = vmatpush1.msra.mxu0 0.0
    %1914 = vmatprep.subr.mxu0 0.0
    %1915 = vmatpush1.msra.mxu0 0.0
    %1916 = vmatprep.subr.mxu0 0.0
    %1917 = vmatpush1.msra.mxu0 0.0
    %1918 = vmatprep.subr.mxu0 0.0
    %1919 = vmatpush1.msra.mxu0 0.0
    %1920 = vmatprep.subr.mxu0 0.0
    %1921 = vmatpush1.msra.mxu0 0.0
    %1922 = vmatprep.subr.mxu0 0.0
    %1923 = vmatpush1.msra.mxu0 0.0
    %1924 = vmatprep.subr.mxu0 0.0
    %1925 = vmatpush1.msra.mxu0 0.0
    %1926 = vmatprep.subr.mxu0 0.0
    %1927 = vmatpush1.msra.mxu0 0.0
    %1928 = vmatprep.subr.mxu0 0.0
    %1929 = vmatpush1.msra.mxu0 0.0
    %1930 = vmatprep.subr.mxu0 0.0
    %1931 = vmatpush1.msra.mxu0 0.0
    %1932 = vmatprep.mubr.f32.mxu0 0.0
    %1933 = vmatmul.mubr.f32.gmra.mrb[0].mxu0 %v1866
    %v1934 = vpop.f32.mrb[0].mxu0
    %v1935 = vadd.f32 0.0, %v1934
    %v1936 = vpop.f32.mrb[0].mxu0
    %1937 = vdwg.mxu0
    %v1938 = vld [vmem:[%s0 + $0xa] sm:$0xf]
    %v1941 = vunpack.c.l.s4 1983009808
    %v1942 = vunpack.c.0.s8 %v1941
    %v1943 = vlaneseq
    %v1944 = vshrl.u32 %v1943, 7
    %v1945 = vsub.s32 %v1942, %v1944
    %v1946 = vrot.slane %v1938, %v1945
    %v1947 = vcombine.high %v1946, %v1946
    %1948 = vrot.lane.b32.xlu0 %v1946, 32
    %v1949 = vpop.permute.xlu0 %1948
    %1950 = vrot.lane.b32.xlu0 %v1947, 32
    %v1951 = vpop.permute.xlu0 %1950
    %v1952 = vsel %vm306, %v1949, %v1951
    %v1953 = vsel %vm45, %v1952, 0
    %1955 = vmatprep.subr.mxu0 0.0
    %1956 = vmatpush1.msra.mxu0 %v33
    %1957 = vmatprep.subr.mxu0 0.0
    %1958 = vmatpush1.msra.mxu0 %v34
    %1959 = vmatprep.subr.mxu0 0.0
    %1960 = vmatpush1.msra.mxu0 %v35
    %1961 = vmatprep.subr.mxu0 0.0
    %1962 = vmatpush1.msra.mxu0 %v36
    %1963 = vmatprep.subr.mxu0 0.0
    %1964 = vmatpush1.msra.mxu0 %v37
    %1965 = vmatprep.subr.mxu0 0.0
    %1966 = vmatpush1.msra.mxu0 %v38
    %1967 = vmatprep.subr.mxu0 0.0
    %1968 = vmatpush1.msra.mxu0 %v39
    %1969 = vmatprep.subr.mxu0 0.0
    %1970 = vmatpush1.msra.mxu0 %v40
    %1971 = vmatprep.subr.mxu0 0.0
    %1972 = vmatpush1.msra.mxu0 %v41
    %1973 = vmatprep.subr.mxu0 0.0
    %1974 = vmatpush1.msra.mxu0 %v42
    %1975 = vmatprep.subr.mxu0 0.0
    %1976 = vmatpush1.msra.mxu0 %v51
    %1977 = vmatprep.subr.mxu0 0.0
    %1978 = vmatpush1.msra.mxu0 0.0
    %1979 = vmatprep.subr.mxu0 0.0
    %1980 = vmatpush1.msra.mxu0 0.0
    %1981 = vmatprep.subr.mxu0 0.0
    %1982 = vmatpush1.msra.mxu0 0.0
    %1983 = vmatprep.subr.mxu0 0.0
    %1984 = vmatpush1.msra.mxu0 0.0
    %1985 = vmatprep.subr.mxu0 0.0
    %1986 = vmatpush1.msra.mxu0 0.0
    %1987 = vmatprep.subr.mxu0 0.0
    %1988 = vmatpush1.msra.mxu0 0.0
    %1989 = vmatprep.subr.mxu0 0.0
    %1990 = vmatpush1.msra.mxu0 0.0
    %1991 = vmatprep.subr.mxu0 0.0
    %1992 = vmatpush1.msra.mxu0 0.0
    %1993 = vmatprep.subr.mxu0 0.0
    %1994 = vmatpush1.msra.mxu0 0.0
    %1995 = vmatprep.subr.mxu0 0.0
    %1996 = vmatpush1.msra.mxu0 0.0
    %1997 = vmatprep.subr.mxu0 0.0
    %1998 = vmatpush1.msra.mxu0 0.0
    %1999 = vmatprep.subr.mxu0 0.0
    %2000 = vmatpush1.msra.mxu0 0.0
    %2001 = vmatprep.subr.mxu0 0.0
    %2002 = vmatpush1.msra.mxu0 0.0
    %2003 = vmatprep.subr.mxu0 0.0
    %2004 = vmatpush1.msra.mxu0 0.0
    %2005 = vmatprep.subr.mxu0 0.0
    %2006 = vmatpush1.msra.mxu0 0.0
    %2007 = vmatprep.subr.mxu0 0.0
    %2008 = vmatpush1.msra.mxu0 0.0
    %2009 = vmatprep.subr.mxu0 0.0
    %2010 = vmatpush1.msra.mxu0 0.0
    %2011 = vmatprep.subr.mxu0 0.0
    %2012 = vmatpush1.msra.mxu0 0.0
    %2013 = vmatprep.subr.mxu0 0.0
    %2014 = vmatpush1.msra.mxu0 0.0
    %2015 = vmatprep.subr.mxu0 0.0
    %2016 = vmatpush1.msra.mxu0 0.0
    %2017 = vmatprep.subr.mxu0 0.0
    %2018 = vmatpush1.msra.mxu0 0.0
    %2019 = vmatprep.mubr.f32.mxu0 0.0
    %2020 = vmatmul.mubr.f32.gmra.mrb[0].mxu0 %v1953
    %v2021 = vpop.f32.mrb[0].mxu0
    %v2022 = vadd.f32 0.0, %v2021
    %v2023 = vpop.f32.mrb[0].mxu0
    %2024 = vdwg.mxu0
    %v2025 = vld [vmem:[%s0 + $0xc] sm:$0x3]
    %v2027 = vsel %vm45, %v2025, 0
    %2029 = vmatprep.subr.mxu0 0.0
    %2030 = vmatpush1.msra.mxu0 %v33
    %2031 = vmatprep.subr.mxu0 0.0
    %2032 = vmatpush1.msra.mxu0 %v34
    %2033 = vmatprep.subr.mxu0 0.0
    %2034 = vmatpush1.msra.mxu0 %v35
    %2035 = vmatprep.subr.mxu0 0.0
    %2036 = vmatpush1.msra.mxu0 %v36
    %2037 = vmatprep.subr.mxu0 0.0
    %2038 = vmatpush1.msra.mxu0 %v37
    %2039 = vmatprep.subr.mxu0 0.0
    %2040 = vmatpush1.msra.mxu0 %v38
    %2041 = vmatprep.subr.mxu0 0.0
    %2042 = vmatpush1.msra.mxu0 %v39
    %2043 = vmatprep.subr.mxu0 0.0
    %2044 = vmatpush1.msra.mxu0 %v40
    %2045 = vmatprep.subr.mxu0 0.0
    %2046 = vmatpush1.msra.mxu0 %v41
    %2047 = vmatprep.subr.mxu0 0.0
    %2048 = vmatpush1.msra.mxu0 %v42
    %2049 = vmatprep.subr.mxu0 0.0
    %2050 = vmatpush1.msra.mxu0 %v51
    %2051 = vmatprep.subr.mxu0 0.0
    %2052 = vmatpush1.msra.mxu0 0.0
    %2053 = vmatprep.subr.mxu0 0.0
    %2054 = vmatpush1.msra.mxu0 0.0
    %2055 = vmatprep.subr.mxu0 0.0
    %2056 = vmatpush1.msra.mxu0 0.0
    %2057 = vmatprep.subr.mxu0 0.0
    %2058 = vmatpush1.msra.mxu0 0.0
    %2059 = vmatprep.subr.mxu0 0.0
    %2060 = vmatpush1.msra.mxu0 0.0
    %2061 = vmatprep.subr.mxu0 0.0
    %2062 = vmatpush1.msra.mxu0 0.0
    %2063 = vmatprep.subr.mxu0 0.0
    %2064 = vmatpush1.msra.mxu0 0.0
    %2065 = vmatprep.subr.mxu0 0.0
    %2066 = vmatpush1.msra.mxu0 0.0
    %2067 = vmatprep.subr.mxu0 0.0
    %2068 = vmatpush1.msra.mxu0 0.0
    %2069 = vmatprep.subr.mxu0 0.0
    %2070 = vmatpush1.msra.mxu0 0.0
    %2071 = vmatprep.subr.mxu0 0.0
    %2072 = vmatpush1.msra.mxu0 0.0
    %2073 = vmatprep.subr.mxu0 0.0
    %2074 = vmatpush1.msra.mxu0 0.0
    %2075 = vmatprep.subr.mxu0 0.0
    %2076 = vmatpush1.msra.mxu0 0.0
    %2077 = vmatprep.subr.mxu0 0.0
    %2078 = vmatpush1.msra.mxu0 0.0
    %2079 = vmatprep.subr.mxu0 0.0
    %2080 = vmatpush1.msra.mxu0 0.0
    %2081 = vmatprep.subr.mxu0 0.0
    %2082 = vmatpush1.msra.mxu0 0.0
    %2083 = vmatprep.subr.mxu0 0.0
    %2084 = vmatpush1.msra.mxu0 0.0
    %2085 = vmatprep.subr.mxu0 0.0
    %2086 = vmatpush1.msra.mxu0 0.0
    %2087 = vmatprep.subr.mxu0 0.0
    %2088 = vmatpush1.msra.mxu0 0.0
    %2089 = vmatprep.subr.mxu0 0.0
    %2090 = vmatpush1.msra.mxu0 0.0
    %2091 = vmatprep.subr.mxu0 0.0
    %2092 = vmatpush1.msra.mxu0 0.0
    %2093 = vmatprep.mubr.f32.mxu0 0.0
    %2094 = vmatmul.mubr.f32.gmra.mrb[0].mxu0 %v2027
    %v2095 = vpop.f32.mrb[0].mxu0
    %v2096 = vadd.f32 0.0, %v2095
    %v2097 = vpop.f32.mrb[0].mxu0
    %2098 = vdwg.mxu0
    %v2100 = vunpack.c.l.s4 1983009808
    %v2101 = vunpack.c.0.s8 %v2100
    %v2102 = vlaneseq
    %v2103 = vshrl.u32 %v2102, 7
    %v2104 = vsub.s32 %v2101, %v2103
    %v2105 = vrot.slane %v2025, %v2104
    %2106 = vrot.lane.b32.xlu0 %v2105, 96
    %v2107 = vpop.permute.xlu0 %2106
    %v2108 = vsel %vm45, %v2107, 0
    %2110 = vmatprep.subr.mxu0 0.0
    %2111 = vmatpush1.msra.mxu0 %v33
    %2112 = vmatprep.subr.mxu0 0.0
    %2113 = vmatpush1.msra.mxu0 %v34
    %2114 = vmatprep.subr.mxu0 0.0
    %2115 = vmatpush1.msra.mxu0 %v35
    %2116 = vmatprep.subr.mxu0 0.0
    %2117 = vmatpush1.msra.mxu0 %v36
    %2118 = vmatprep.subr.mxu0 0.0
    %2119 = vmatpush1.msra.mxu0 %v37
    %2120 = vmatprep.subr.mxu0 0.0
    %2121 = vmatpush1.msra.mxu0 %v38
    %2122 = vmatprep.subr.mxu0 0.0
    %2123 = vmatpush1.msra.mxu0 %v39
    %2124 = vmatprep.subr.mxu0 0.0
    %2125 = vmatpush1.msra.mxu0 %v40
    %2126 = vmatprep.subr.mxu0 0.0
    %2127 = vmatpush1.msra.mxu0 %v41
    %2128 = vmatprep.subr.mxu0 0.0
    %2129 = vmatpush1.msra.mxu0 %v42
    %2130 = vmatprep.subr.mxu0 0.0
    %2131 = vmatpush1.msra.mxu0 %v51
    %2132 = vmatprep.subr.mxu0 0.0
    %2133 = vmatpush1.msra.mxu0 0.0
    %2134 = vmatprep.subr.mxu0 0.0
    %2135 = vmatpush1.msra.mxu0 0.0
    %2136 = vmatprep.subr.mxu0 0.0
    %2137 = vmatpush1.msra.mxu0 0.0
    %2138 = vmatprep.subr.mxu0 0.0
    %2139 = vmatpush1.msra.mxu0 0.0
    %2140 = vmatprep.subr.mxu0 0.0
    %2141 = vmatpush1.msra.mxu0 0.0
    %2142 = vmatprep.subr.mxu0 0.0
    %2143 = vmatpush1.msra.mxu0 0.0
    %2144 = vmatprep.subr.mxu0 0.0
    %2145 = vmatpush1.msra.mxu0 0.0
    %2146 = vmatprep.subr.mxu0 0.0
    %2147 = vmatpush1.msra.mxu0 0.0
    %2148 = vmatprep.subr.mxu0 0.0
    %2149 = vmatpush1.msra.mxu0 0.0
    %2150 = vmatprep.subr.mxu0 0.0
    %2151 = vmatpush1.msra.mxu0 0.0
    %2152 = vmatprep.subr.mxu0 0.0
    %2153 = vmatpush1.msra.mxu0 0.0
    %2154 = vmatprep.subr.mxu0 0.0
    %2155 = vmatpush1.msra.mxu0 0.0
    %2156 = vmatprep.subr.mxu0 0.0
    %2157 = vmatpush1.msra.mxu0 0.0
    %2158 = vmatprep.subr.mxu0 0.0
    %2159 = vmatpush1.msra.mxu0 0.0
    %2160 = vmatprep.subr.mxu0 0.0
    %2161 = vmatpush1.msra.mxu0 0.0
    %2162 = vmatprep.subr.mxu0 0.0
    %2163 = vmatpush1.msra.mxu0 0.0
    %2164 = vmatprep.subr.mxu0 0.0
    %2165 = vmatpush1.msra.mxu0 0.0
    %2166 = vmatprep.subr.mxu0 0.0
    %2167 = vmatpush1.msra.mxu0 0.0
    %2168 = vmatprep.subr.mxu0 0.0
    %2169 = vmatpush1.msra.mxu0 0.0
    %2170 = vmatprep.subr.mxu0 0.0
    %2171 = vmatpush1.msra.mxu0 0.0
    %2172 = vmatprep.subr.mxu0 0.0
    %2173 = vmatpush1.msra.mxu0 0.0
    %2174 = vmatprep.mubr.f32.mxu0 0.0
    %2175 = vmatmul.mubr.f32.gmra.mrb[0].mxu0 %v2108
    %v2176 = vpop.f32.mrb[0].mxu0
    %v2177 = vadd.f32 0.0, %v2176
    %v2178 = vpop.f32.mrb[0].mxu0
    %2179 = vdwg.mxu0
    %v2180 = vld [vmem:[%s0 + $0xc] sm:$0xf]
    %v2183 = vunpack.c.l.s4 1983009808
    %v2184 = vunpack.c.0.s8 %v2183
    %v2185 = vlaneseq
    %v2186 = vshrl.u32 %v2185, 7
    %v2187 = vsub.s32 %v2184, %v2186
    %v2188 = vrot.slane %v2180, %v2187
    %v2189 = vcombine.high %v2188, %v2188
    %2190 = vrot.lane.b32.xlu0 %v2188, 64
    %v2191 = vpop.permute.xlu0 %2190
    %2192 = vrot.lane.b32.xlu0 %v2189, 64
    %v2193 = vpop.permute.xlu0 %2192
    %v2194 = vsel %vm218, %v2191, %v2193
    %v2195 = vsel %vm45, %v2194, 0
    %2197 = vmatprep.subr.mxu0 0.0
    %2198 = vmatpush1.msra.mxu0 %v33
    %2199 = vmatprep.subr.mxu0 0.0
    %2200 = vmatpush1.msra.mxu0 %v34
    %2201 = vmatprep.subr.mxu0 0.0
    %2202 = vmatpush1.msra.mxu0 %v35
    %2203 = vmatprep.subr.mxu0 0.0
    %2204 = vmatpush1.msra.mxu0 %v36
    %2205 = vmatprep.subr.mxu0 0.0
    %2206 = vmatpush1.msra.mxu0 %v37
    %2207 = vmatprep.subr.mxu0 0.0
    %2208 = vmatpush1.msra.mxu0 %v38
    %2209 = vmatprep.subr.mxu0 0.0
    %2210 = vmatpush1.msra.mxu0 %v39
    %2211 = vmatprep.subr.mxu0 0.0
    %2212 = vmatpush1.msra.mxu0 %v40
    %2213 = vmatprep.subr.mxu0 0.0
    %2214 = vmatpush1.msra.mxu0 %v41
    %2215 = vmatprep.subr.mxu0 0.0
    %2216 = vmatpush1.msra.mxu0 %v42
    %2217 = vmatprep.subr.mxu0 0.0
    %2218 = vmatpush1.msra.mxu0 %v51
    %2219 = vmatprep.subr.mxu0 0.0
    %2220 = vmatpush1.msra.mxu0 0.0
    %2221 = vmatprep.subr.mxu0 0.0
    %2222 = vmatpush1.msra.mxu0 0.0
    %2223 = vmatprep.subr.mxu0 0.0
    %2224 = vmatpush1.msra.mxu0 0.0
    %2225 = vmatprep.subr.mxu0 0.0
    %2226 = vmatpush1.msra.mxu0 0.0
    %2227 = vmatprep.subr.mxu0 0.0
    %2228 = vmatpush1.msra.mxu0 0.0
    %2229 = vmatprep.subr.mxu0 0.0
    %2230 = vmatpush1.msra.mxu0 0.0
    %2231 = vmatprep.subr.mxu0 0.0
    %2232 = vmatpush1.msra.mxu0 0.0
    %2233 = vmatprep.subr.mxu0 0.0
    %2234 = vmatpush1.msra.mxu0 0.0
    %2235 = vmatprep.subr.mxu0 0.0
    %2236 = vmatpush1.msra.mxu0 0.0
    %2237 = vmatprep.subr.mxu0 0.0
    %2238 = vmatpush1.msra.mxu0 0.0
    %2239 = vmatprep.subr.mxu0 0.0
    %2240 = vmatpush1.msra.mxu0 0.0
    %2241 = vmatprep.subr.mxu0 0.0
    %2242 = vmatpush1.msra.mxu0 0.0
    %2243 = vmatprep.subr.mxu0 0.0
    %2244 = vmatpush1.msra.mxu0 0.0
    %2245 = vmatprep.subr.mxu0 0.0
    %2246 = vmatpush1.msra.mxu0 0.0
    %2247 = vmatprep.subr.mxu0 0.0
    %2248 = vmatpush1.msra.mxu0 0.0
    %2249 = vmatprep.subr.mxu0 0.0
    %2250 = vmatpush1.msra.mxu0 0.0
    %2251 = vmatprep.subr.mxu0 0.0
    %2252 = vmatpush1.msra.mxu0 0.0
    %2253 = vmatprep.subr.mxu0 0.0
    %2254 = vmatpush1.msra.mxu0 0.0
    %2255 = vmatprep.subr.mxu0 0.0
    %2256 = vmatpush1.msra.mxu0 0.0
    %2257 = vmatprep.subr.mxu0 0.0
    %2258 = vmatpush1.msra.mxu0 0.0
    %2259 = vmatprep.subr.mxu0 0.0
    %2260 = vmatpush1.msra.mxu0 0.0
    %2261 = vmatprep.mubr.f32.mxu0 0.0
    %2262 = vmatmul.mubr.f32.gmra.mrb[0].mxu0 %v2195
    %v2263 = vpop.f32.mrb[0].mxu0
    %v2264 = vadd.f32 0.0, %v2263
    %v2265 = vpop.f32.mrb[0].mxu0
    %2266 = vdwg.mxu0
    %v2267 = vld [vmem:[%s0 + $0xc] sm:$0xf]
    %v2270 = vunpack.c.l.s4 1983009808
    %v2271 = vunpack.c.0.s8 %v2270
    %v2272 = vlaneseq
    %v2273 = vshrl.u32 %v2272, 7
    %v2274 = vsub.s32 %v2271, %v2273
    %v2275 = vrot.slane %v2267, %v2274
    %v2276 = vcombine.high %v2275, %v2275
    %2277 = vrot.lane.b32.xlu0 %v2275, 32
    %v2278 = vpop.permute.xlu0 %2277
    %2279 = vrot.lane.b32.xlu0 %v2276, 32
    %v2280 = vpop.permute.xlu0 %2279
    %v2281 = vsel %vm306, %v2278, %v2280
    %v2282 = vsel %vm45, %v2281, 0
    %2284 = vmatprep.subr.mxu0 0.0
    %2285 = vmatpush1.msra.mxu0 %v33
    %2286 = vmatprep.subr.mxu0 0.0
    %2287 = vmatpush1.msra.mxu0 %v34
    %2288 = vmatprep.subr.mxu0 0.0
    %2289 = vmatpush1.msra.mxu0 %v35
    %2290 = vmatprep.subr.mxu0 0.0
    %2291 = vmatpush1.msra.mxu0 %v36
    %2292 = vmatprep.subr.mxu0 0.0
    %2293 = vmatpush1.msra.mxu0 %v37
    %2294 = vmatprep.subr.mxu0 0.0
    %2295 = vmatpush1.msra.mxu0 %v38
    %2296 = vmatprep.subr.mxu0 0.0
    %2297 = vmatpush1.msra.mxu0 %v39
    %2298 = vmatprep.subr.mxu0 0.0
    %2299 = vmatpush1.msra.mxu0 %v40
    %2300 = vmatprep.subr.mxu0 0.0
    %2301 = vmatpush1.msra.mxu0 %v41
    %2302 = vmatprep.subr.mxu0 0.0
    %2303 = vmatpush1.msra.mxu0 %v42
    %2304 = vmatprep.subr.mxu0 0.0
    %2305 = vmatpush1.msra.mxu0 %v51
    %2306 = vmatprep.subr.mxu0 0.0
    %2307 = vmatpush1.msra.mxu0 0.0
    %2308 = vmatprep.subr.mxu0 0.0
    %2309 = vmatpush1.msra.mxu0 0.0
    %2310 = vmatprep.subr.mxu0 0.0
    %2311 = vmatpush1.msra.mxu0 0.0
    %2312 = vmatprep.subr.mxu0 0.0
    %2313 = vmatpush1.msra.mxu0 0.0
    %2314 = vmatprep.subr.mxu0 0.0
    %2315 = vmatpush1.msra.mxu0 0.0
    %2316 = vmatprep.subr.mxu0 0.0
    %2317 = vmatpush1.msra.mxu0 0.0
    %2318 = vmatprep.subr.mxu0 0.0
    %2319 = vmatpush1.msra.mxu0 0.0
    %2320 = vmatprep.subr.mxu0 0.0
    %2321 = vmatpush1.msra.mxu0 0.0
    %2322 = vmatprep.subr.mxu0 0.0
    %2323 = vmatpush1.msra.mxu0 0.0
    %2324 = vmatprep.subr.mxu0 0.0
    %2325 = vmatpush1.msra.mxu0 0.0
    %2326 = vmatprep.subr.mxu0 0.0
    %2327 = vmatpush1.msra.mxu0 0.0
    %2328 = vmatprep.subr.mxu0 0.0
    %2329 = vmatpush1.msra.mxu0 0.0
    %2330 = vmatprep.subr.mxu0 0.0
    %2331 = vmatpush1.msra.mxu0 0.0
    %2332 = vmatprep.subr.mxu0 0.0
    %2333 = vmatpush1.msra.mxu0 0.0
    %2334 = vmatprep.subr.mxu0 0.0
    %2335 = vmatpush1.msra.mxu0 0.0
    %2336 = vmatprep.subr.mxu0 0.0
    %2337 = vmatpush1.msra.mxu0 0.0
    %2338 = vmatprep.subr.mxu0 0.0
    %2339 = vmatpush1.msra.mxu0 0.0
    %2340 = vmatprep.subr.mxu0 0.0
    %2341 = vmatpush1.msra.mxu0 0.0
    %2342 = vmatprep.subr.mxu0 0.0
    %2343 = vmatpush1.msra.mxu0 0.0
    %2344 = vmatprep.subr.mxu0 0.0
    %2345 = vmatpush1.msra.mxu0 0.0
    %2346 = vmatprep.subr.mxu0 0.0
    %2347 = vmatpush1.msra.mxu0 0.0
    %2348 = vmatprep.mubr.f32.mxu0 0.0
    %2349 = vmatmul.mubr.f32.gmra.mrb[0].mxu0 %v2282
    %v2350 = vpop.f32.mrb[0].mxu0
    %v2351 = vadd.f32 0.0, %v2350
    %v2352 = vpop.f32.mrb[0].mxu0
    %2353 = vdwg.mxu0
    %v2354 = vld [vmem:[%s0 + $0xe] sm:$0x3]
    %v2356 = vsel %vm45, %v2354, 0
    %2358 = vmatprep.subr.mxu0 0.0
    %2359 = vmatpush1.msra.mxu0 %v33
    %2360 = vmatprep.subr.mxu0 0.0
    %2361 = vmatpush1.msra.mxu0 %v34
    %2362 = vmatprep.subr.mxu0 0.0
    %2363 = vmatpush1.msra.mxu0 %v35
    %2364 = vmatprep.subr.mxu0 0.0
    %2365 = vmatpush1.msra.mxu0 %v36
    %2366 = vmatprep.subr.mxu0 0.0
    %2367 = vmatpush1.msra.mxu0 %v37
    %2368 = vmatprep.subr.mxu0 0.0
    %2369 = vmatpush1.msra.mxu0 %v38
    %2370 = vmatprep.subr.mxu0 0.0
    %2371 = vmatpush1.msra.mxu0 %v39
    %2372 = vmatprep.subr.mxu0 0.0
    %2373 = vmatpush1.msra.mxu0 %v40
    %2374 = vmatprep.subr.mxu0 0.0
    %2375 = vmatpush1.msra.mxu0 %v41
    %2376 = vmatprep.subr.mxu0 0.0
    %2377 = vmatpush1.msra.mxu0 %v42
    %2378 = vmatprep.subr.mxu0 0.0
    %2379 = vmatpush1.msra.mxu0 %v51
    %2380 = vmatprep.subr.mxu0 0.0
    %2381 = vmatpush1.msra.mxu0 0.0
    %2382 = vmatprep.subr.mxu0 0.0
    %2383 = vmatpush1.msra.mxu0 0.0
    %2384 = vmatprep.subr.mxu0 0.0
    %2385 = vmatpush1.msra.mxu0 0.0
    %2386 = vmatprep.subr.mxu0 0.0
    %2387 = vmatpush1.msra.mxu0 0.0
    %2388 = vmatprep.subr.mxu0 0.0
    %2389 = vmatpush1.msra.mxu0 0.0
    %2390 = vmatprep.subr.mxu0 0.0
    %2391 = vmatpush1.msra.mxu0 0.0
    %2392 = vmatprep.subr.mxu0 0.0
    %2393 = vmatpush1.msra.mxu0 0.0
    %2394 = vmatprep.subr.mxu0 0.0
    %2395 = vmatpush1.msra.mxu0 0.0
    %2396 = vmatprep.subr.mxu0 0.0
    %2397 = vmatpush1.msra.mxu0 0.0
    %2398 = vmatprep.subr.mxu0 0.0
    %2399 = vmatpush1.msra.mxu0 0.0
    %2400 = vmatprep.subr.mxu0 0.0
    %2401 = vmatpush1.msra.mxu0 0.0
    %2402 = vmatprep.subr.mxu0 0.0
    %2403 = vmatpush1.msra.mxu0 0.0
    %2404 = vmatprep.subr.mxu0 0.0
    %2405 = vmatpush1.msra.mxu0 0.0
    %2406 = vmatprep.subr.mxu0 0.0
    %2407 = vmatpush1.msra.mxu0 0.0
    %2408 = vmatprep.subr.mxu0 0.0
    %2409 = vmatpush1.msra.mxu0 0.0
    %2410 = vmatprep.subr.mxu0 0.0
    %2411 = vmatpush1.msra.mxu0 0.0
    %2412 = vmatprep.subr.mxu0 0.0
    %2413 = vmatpush1.msra.mxu0 0.0
    %2414 = vmatprep.subr.mxu0 0.0
    %2415 = vmatpush1.msra.mxu0 0.0
    %2416 = vmatprep.subr.mxu0 0.0
    %2417 = vmatpush1.msra.mxu0 0.0
    %2418 = vmatprep.subr.mxu0 0.0
    %2419 = vmatpush1.msra.mxu0 0.0
    %2420 = vmatprep.subr.mxu0 0.0
    %2421 = vmatpush1.msra.mxu0 0.0
    %2422 = vmatprep.mubr.f32.mxu0 0.0
    %2423 = vmatmul.mubr.f32.gmra.mrb[0].mxu0 %v2356
    %v2424 = vpop.f32.mrb[0].mxu0
    %v2425 = vadd.f32 0.0, %v2424
    %v2426 = vpop.f32.mrb[0].mxu0
    %2427 = vdwg.mxu0
    %v2429 = vunpack.c.l.s4 1983009808
    %v2430 = vunpack.c.0.s8 %v2429
    %v2431 = vlaneseq
    %v2432 = vshrl.u32 %v2431, 7
    %v2433 = vsub.s32 %v2430, %v2432
    %v2434 = vrot.slane %v2354, %v2433
    %2435 = vrot.lane.b32.xlu0 %v2434, 96
    %v2436 = vpop.permute.xlu0 %2435
    %v2437 = vsel %vm45, %v2436, 0
    %2439 = vmatprep.subr.mxu0 0.0
    %2440 = vmatpush1.msra.mxu0 %v33
    %2441 = vmatprep.subr.mxu0 0.0
    %2442 = vmatpush1.msra.mxu0 %v34
    %2443 = vmatprep.subr.mxu0 0.0
    %2444 = vmatpush1.msra.mxu0 %v35
    %2445 = vmatprep.subr.mxu0 0.0
    %2446 = vmatpush1.msra.mxu0 %v36
    %2447 = vmatprep.subr.mxu0 0.0
    %2448 = vmatpush1.msra.mxu0 %v37
    %2449 = vmatprep.subr.mxu0 0.0
    %2450 = vmatpush1.msra.mxu0 %v38
    %2451 = vmatprep.subr.mxu0 0.0
    %2452 = vmatpush1.msra.mxu0 %v39
    %2453 = vmatprep.subr.mxu0 0.0
    %2454 = vmatpush1.msra.mxu0 %v40
    %2455 = vmatprep.subr.mxu0 0.0
    %2456 = vmatpush1.msra.mxu0 %v41
    %2457 = vmatprep.subr.mxu0 0.0
    %2458 = vmatpush1.msra.mxu0 %v42
    %2459 = vmatprep.subr.mxu0 0.0
    %2460 = vmatpush1.msra.mxu0 %v51
    %2461 = vmatprep.subr.mxu0 0.0
    %2462 = vmatpush1.msra.mxu0 0.0
    %2463 = vmatprep.subr.mxu0 0.0
    %2464 = vmatpush1.msra.mxu0 0.0
    %2465 = vmatprep.subr.mxu0 0.0
    %2466 = vmatpush1.msra.mxu0 0.0
    %2467 = vmatprep.subr.mxu0 0.0
    %2468 = vmatpush1.msra.mxu0 0.0
    %2469 = vmatprep.subr.mxu0 0.0
    %2470 = vmatpush1.msra.mxu0 0.0
    %2471 = vmatprep.subr.mxu0 0.0
    %2472 = vmatpush1.msra.mxu0 0.0
    %2473 = vmatprep.subr.mxu0 0.0
    %2474 = vmatpush1.msra.mxu0 0.0
    %2475 = vmatprep.subr.mxu0 0.0
    %2476 = vmatpush1.msra.mxu0 0.0
    %2477 = vmatprep.subr.mxu0 0.0
    %2478 = vmatpush1.msra.mxu0 0.0
    %2479 = vmatprep.subr.mxu0 0.0
    %2480 = vmatpush1.msra.mxu0 0.0
    %2481 = vmatprep.subr.mxu0 0.0
    %2482 = vmatpush1.msra.mxu0 0.0
    %2483 = vmatprep.subr.mxu0 0.0
    %2484 = vmatpush1.msra.mxu0 0.0
    %2485 = vmatprep.subr.mxu0 0.0
    %2486 = vmatpush1.msra.mxu0 0.0
    %2487 = vmatprep.subr.mxu0 0.0
    %2488 = vmatpush1.msra.mxu0 0.0
    %2489 = vmatprep.subr.mxu0 0.0
    %2490 = vmatpush1.msra.mxu0 0.0
    %2491 = vmatprep.subr.mxu0 0.0
    %2492 = vmatpush1.msra.mxu0 0.0
    %2493 = vmatprep.subr.mxu0 0.0
    %2494 = vmatpush1.msra.mxu0 0.0
    %2495 = vmatprep.subr.mxu0 0.0
    %2496 = vmatpush1.msra.mxu0 0.0
    %2497 = vmatprep.subr.mxu0 0.0
    %2498 = vmatpush1.msra.mxu0 0.0
    %2499 = vmatprep.subr.mxu0 0.0
    %2500 = vmatpush1.msra.mxu0 0.0
    %2501 = vmatprep.subr.mxu0 0.0
    %2502 = vmatpush1.msra.mxu0 0.0
    %2503 = vmatprep.mubr.f32.mxu0 0.0
    %2504 = vmatmul.mubr.f32.gmra.mrb[0].mxu0 %v2437
    %v2505 = vpop.f32.mrb[0].mxu0
    %v2506 = vadd.f32 0.0, %v2505
    %v2507 = vpop.f32.mrb[0].mxu0
    %2508 = vdwg.mxu0
    %v2509 = vld [vmem:[%s0 + $0xe] sm:$0xf]
    %v2512 = vunpack.c.l.s4 1983009808
    %v2513 = vunpack.c.0.s8 %v2512
    %v2514 = vlaneseq
    %v2515 = vshrl.u32 %v2514, 7
    %v2516 = vsub.s32 %v2513, %v2515
    %v2517 = vrot.slane %v2509, %v2516
    %v2518 = vcombine.high %v2517, %v2517
    %2519 = vrot.lane.b32.xlu0 %v2517, 64
    %v2520 = vpop.permute.xlu0 %2519
    %2521 = vrot.lane.b32.xlu0 %v2518, 64
    %v2522 = vpop.permute.xlu0 %2521
    %v2523 = vsel %vm218, %v2520, %v2522
    %v2524 = vsel %vm45, %v2523, 0
    %2526 = vmatprep.subr.mxu0 0.0
    %2527 = vmatpush1.msra.mxu0 %v33
    %2528 = vmatprep.subr.mxu0 0.0
    %2529 = vmatpush1.msra.mxu0 %v34
    %2530 = vmatprep.subr.mxu0 0.0
    %2531 = vmatpush1.msra.mxu0 %v35
    %2532 = vmatprep.subr.mxu0 0.0
    %2533 = vmatpush1.msra.mxu0 %v36
    %2534 = vmatprep.subr.mxu0 0.0
    %2535 = vmatpush1.msra.mxu0 %v37
    %2536 = vmatprep.subr.mxu0 0.0
    %2537 = vmatpush1.msra.mxu0 %v38
    %2538 = vmatprep.subr.mxu0 0.0
    %2539 = vmatpush1.msra.mxu0 %v39
    %2540 = vmatprep.subr.mxu0 0.0
    %2541 = vmatpush1.msra.mxu0 %v40
    %2542 = vmatprep.subr.mxu0 0.0
    %2543 = vmatpush1.msra.mxu0 %v41
    %2544 = vmatprep.subr.mxu0 0.0
    %2545 = vmatpush1.msra.mxu0 %v42
    %2546 = vmatprep.subr.mxu0 0.0
    %2547 = vmatpush1.msra.mxu0 %v51
    %2548 = vmatprep.subr.mxu0 0.0
    %2549 = vmatpush1.msra.mxu0 0.0
    %2550 = vmatprep.subr.mxu0 0.0
    %2551 = vmatpush1.msra.mxu0 0.0
    %2552 = vmatprep.subr.mxu0 0.0
    %2553 = vmatpush1.msra.mxu0 0.0
    %2554 = vmatprep.subr.mxu0 0.0
    %2555 = vmatpush1.msra.mxu0 0.0
    %2556 = vmatprep.subr.mxu0 0.0
    %2557 = vmatpush1.msra.mxu0 0.0
    %2558 = vmatprep.subr.mxu0 0.0
    %2559 = vmatpush1.msra.mxu0 0.0
    %2560 = vmatprep.subr.mxu0 0.0
    %2561 = vmatpush1.msra.mxu0 0.0
    %2562 = vmatprep.subr.mxu0 0.0
    %2563 = vmatpush1.msra.mxu0 0.0
    %2564 = vmatprep.subr.mxu0 0.0
    %2565 = vmatpush1.msra.mxu0 0.0
    %2566 = vmatprep.subr.mxu0 0.0
    %2567 = vmatpush1.msra.mxu0 0.0
    %2568 = vmatprep.subr.mxu0 0.0
    %2569 = vmatpush1.msra.mxu0 0.0
    %2570 = vmatprep.subr.mxu0 0.0
    %2571 = vmatpush1.msra.mxu0 0.0
    %2572 = vmatprep.subr.mxu0 0.0
    %2573 = vmatpush1.msra.mxu0 0.0
    %2574 = vmatprep.subr.mxu0 0.0
    %2575 = vmatpush1.msra.mxu0 0.0
    %2576 = vmatprep.subr.mxu0 0.0
    %2577 = vmatpush1.msra.mxu0 0.0
    %2578 = vmatprep.subr.mxu0 0.0
    %2579 = vmatpush1.msra.mxu0 0.0
    %2580 = vmatprep.subr.mxu0 0.0
    %2581 = vmatpush1.msra.mxu0 0.0
    %2582 = vmatprep.subr.mxu0 0.0
    %2583 = vmatpush1.msra.mxu0 0.0
    %2584 = vmatprep.subr.mxu0 0.0
    %2585 = vmatpush1.msra.mxu0 0.0
    %2586 = vmatprep.subr.mxu0 0.0
    %2587 = vmatpush1.msra.mxu0 0.0
    %2588 = vmatprep.subr.mxu0 0.0
    %2589 = vmatpush1.msra.mxu0 0.0
    %2590 = vmatprep.mubr.f32.mxu0 0.0
    %2591 = vmatmul.mubr.f32.gmra.mrb[0].mxu0 %v2524
    %v2592 = vpop.f32.mrb[0].mxu0
    %v2593 = vadd.f32 0.0, %v2592
    %v2594 = vpop.f32.mrb[0].mxu0
    %2595 = vdwg.mxu0
    %v2596 = vld [vmem:[%s0 + $0xe] sm:$0xf]
    %v2599 = vunpack.c.l.s4 1983009808
    %v2600 = vunpack.c.0.s8 %v2599
    %v2601 = vlaneseq
    %v2602 = vshrl.u32 %v2601, 7
    %v2603 = vsub.s32 %v2600, %v2602
    %v2604 = vrot.slane %v2596, %v2603
    %v2605 = vcombine.high %v2604, %v2604
    %2606 = vrot.lane.b32.xlu0 %v2604, 32
    %v2607 = vpop.permute.xlu0 %2606
    %2608 = vrot.lane.b32.xlu0 %v2605, 32
    %v2609 = vpop.permute.xlu0 %2608
    %v2610 = vsel %vm306, %v2607, %v2609
    %v2611 = vsel %vm45, %v2610, 0
    %2613 = vmatprep.subr.mxu0 0.0
    %2614 = vmatpush1.msra.mxu0 %v33
    %2615 = vmatprep.subr.mxu0 0.0
    %2616 = vmatpush1.msra.mxu0 %v34
    %2617 = vmatprep.subr.mxu0 0.0
    %2618 = vmatpush1.msra.mxu0 %v35
    %2619 = vmatprep.subr.mxu0 0.0
    %2620 = vmatpush1.msra.mxu0 %v36
    %2621 = vmatprep.subr.mxu0 0.0
    %2622 = vmatpush1.msra.mxu0 %v37
    %2623 = vmatprep.subr.mxu0 0.0
    %2624 = vmatpush1.msra.mxu0 %v38
    %2625 = vmatprep.subr.mxu0 0.0
    %2626 = vmatpush1.msra.mxu0 %v39
    %2627 = vmatprep.subr.mxu0 0.0
    %2628 = vmatpush1.msra.mxu0 %v40
    %2629 = vmatprep.subr.mxu0 0.0
    %2630 = vmatpush1.msra.mxu0 %v41
    %2631 = vmatprep.subr.mxu0 0.0
    %2632 = vmatpush1.msra.mxu0 %v42
    %2633 = vmatprep.subr.mxu0 0.0
    %2634 = vmatpush1.msra.mxu0 %v51
    %2635 = vmatprep.subr.mxu0 0.0
    %2636 = vmatpush1.msra.mxu0 0.0
    %2637 = vmatprep.subr.mxu0 0.0
    %2638 = vmatpush1.msra.mxu0 0.0
    %2639 = vmatprep.subr.mxu0 0.0
    %2640 = vmatpush1.msra.mxu0 0.0
    %2641 = vmatprep.subr.mxu0 0.0
    %2642 = vmatpush1.msra.mxu0 0.0
    %2643 = vmatprep.subr.mxu0 0.0
    %2644 = vmatpush1.msra.mxu0 0.0
    %2645 = vmatprep.subr.mxu0 0.0
    %2646 = vmatpush1.msra.mxu0 0.0
    %2647 = vmatprep.subr.mxu0 0.0
    %2648 = vmatpush1.msra.mxu0 0.0
    %2649 = vmatprep.subr.mxu0 0.0
    %2650 = vmatpush1.msra.mxu0 0.0
    %2651 = vmatprep.subr.mxu0 0.0
    %2652 = vmatpush1.msra.mxu0 0.0
    %2653 = vmatprep.subr.mxu0 0.0
    %2654 = vmatpush1.msra.mxu0 0.0
    %2655 = vmatprep.subr.mxu0 0.0
    %2656 = vmatpush1.msra.mxu0 0.0
    %2657 = vmatprep.subr.mxu0 0.0
    %2658 = vmatpush1.msra.mxu0 0.0
    %2659 = vmatprep.subr.mxu0 0.0
    %2660 = vmatpush1.msra.mxu0 0.0
    %2661 = vmatprep.subr.mxu0 0.0
    %2662 = vmatpush1.msra.mxu0 0.0
    %2663 = vmatprep.subr.mxu0 0.0
    %2664 = vmatpush1.msra.mxu0 0.0
    %2665 = vmatprep.subr.mxu0 0.0
    %2666 = vmatpush1.msra.mxu0 0.0
    %2667 = vmatprep.subr.mxu0 0.0
    %2668 = vmatpush1.msra.mxu0 0.0
    %2669 = vmatprep.subr.mxu0 0.0
    %2670 = vmatpush1.msra.mxu0 0.0
    %2671 = vmatprep.subr.mxu0 0.0
    %2672 = vmatpush1.msra.mxu0 0.0
    %2673 = vmatprep.subr.mxu0 0.0
    %2674 = vmatpush1.msra.mxu0 0.0
    %2675 = vmatprep.subr.mxu0 0.0
    %2676 = vmatpush1.msra.mxu0 0.0
    %2677 = vmatprep.mubr.f32.mxu0 0.0
    %2678 = vmatmul.mubr.f32.gmra.mrb[0].mxu0 %v2611
    %v2679 = vpop.f32.mrb[0].mxu0
    %v2680 = vadd.f32 0.0, %v2679
    %v2681 = vpop.f32.mrb[0].mxu0
    %2682 = vdwg.mxu0
    %v2683 = vld [vmem:[%s0 + $0x10] sm:$0x3]
    %v2685 = vsel %vm45, %v2683, 0
    %2687 = vmatprep.subr.mxu0 0.0
    %2688 = vmatpush1.msra.mxu0 %v33
    %2689 = vmatprep.subr.mxu0 0.0
    %2690 = vmatpush1.msra.mxu0 %v34
    %2691 = vmatprep.subr.mxu0 0.0
    %2692 = vmatpush1.msra.mxu0 %v35
    %2693 = vmatprep.subr.mxu0 0.0
    %2694 = vmatpush1.msra.mxu0 %v36
    %2695 = vmatprep.subr.mxu0 0.0
    %2696 = vmatpush1.msra.mxu0 %v37
    %2697 = vmatprep.subr.mxu0 0.0
    %2698 = vmatpush1.msra.mxu0 %v38
    %2699 = vmatprep.subr.mxu0 0.0
    %2700 = vmatpush1.msra.mxu0 %v39
    %2701 = vmatprep.subr.mxu0 0.0
    %2702 = vmatpush1.msra.mxu0 %v40
    %2703 = vmatprep.subr.mxu0 0.0
    %2704 = vmatpush1.msra.mxu0 %v41
    %2705 = vmatprep.subr.mxu0 0.0
    %2706 = vmatpush1.msra.mxu0 %v42
    %2707 = vmatprep.subr.mxu0 0.0
    %2708 = vmatpush1.msra.mxu0 %v51
    %2709 = vmatprep.subr.mxu0 0.0
    %2710 = vmatpush1.msra.mxu0 0.0
    %2711 = vmatprep.subr.mxu0 0.0
    %2712 = vmatpush1.msra.mxu0 0.0
    %2713 = vmatprep.subr.mxu0 0.0
    %2714 = vmatpush1.msra.mxu0 0.0
    %2715 = vmatprep.subr.mxu0 0.0
    %2716 = vmatpush1.msra.mxu0 0.0
    %2717 = vmatprep.subr.mxu0 0.0
    %2718 = vmatpush1.msra.mxu0 0.0
    %2719 = vmatprep.subr.mxu0 0.0
    %2720 = vmatpush1.msra.mxu0 0.0
    %2721 = vmatprep.subr.mxu0 0.0
    %2722 = vmatpush1.msra.mxu0 0.0
    %2723 = vmatprep.subr.mxu0 0.0
    %2724 = vmatpush1.msra.mxu0 0.0
    %2725 = vmatprep.subr.mxu0 0.0
    %2726 = vmatpush1.msra.mxu0 0.0
    %2727 = vmatprep.subr.mxu0 0.0
    %2728 = vmatpush1.msra.mxu0 0.0
    %2729 = vmatprep.subr.mxu0 0.0
    %2730 = vmatpush1.msra.mxu0 0.0
    %2731 = vmatprep.subr.mxu0 0.0
    %2732 = vmatpush1.msra.mxu0 0.0
    %2733 = vmatprep.subr.mxu0 0.0
    %2734 = vmatpush1.msra.mxu0 0.0
    %2735 = vmatprep.subr.mxu0 0.0
    %2736 = vmatpush1.msra.mxu0 0.0
    %2737 = vmatprep.subr.mxu0 0.0
    %2738 = vmatpush1.msra.mxu0 0.0
    %2739 = vmatprep.subr.mxu0 0.0
    %2740 = vmatpush1.msra.mxu0 0.0
    %2741 = vmatprep.subr.mxu0 0.0
    %2742 = vmatpush1.msra.mxu0 0.0
    %2743 = vmatprep.subr.mxu0 0.0
    %2744 = vmatpush1.msra.mxu0 0.0
    %2745 = vmatprep.subr.mxu0 0.0
    %2746 = vmatpush1.msra.mxu0 0.0
    %2747 = vmatprep.subr.mxu0 0.0
    %2748 = vmatpush1.msra.mxu0 0.0
    %2749 = vmatprep.subr.mxu0 0.0
    %2750 = vmatpush1.msra.mxu0 0.0
    %2751 = vmatprep.mubr.f32.mxu0 0.0
    %2752 = vmatmul.mubr.f32.gmra.mrb[0].mxu0 %v2685
    %v2753 = vpop.f32.mrb[0].mxu0
    %v2754 = vadd.f32 0.0, %v2753
    %v2755 = vpop.f32.mrb[0].mxu0
    %2756 = vdwg.mxu0
    %v2758 = vunpack.c.l.s4 1983009808
    %v2759 = vunpack.c.0.s8 %v2758
    %v2760 = vlaneseq
    %v2761 = vshrl.u32 %v2760, 7
    %v2762 = vsub.s32 %v2759, %v2761
    %v2763 = vrot.slane %v2683, %v2762
    %2764 = vrot.lane.b32.xlu0 %v2763, 96
    %v2765 = vpop.permute.xlu0 %2764
    %v2766 = vsel %vm45, %v2765, 0
    %2768 = vmatprep.subr.mxu0 0.0
    %2769 = vmatpush1.msra.mxu0 %v33
    %2770 = vmatprep.subr.mxu0 0.0
    %2771 = vmatpush1.msra.mxu0 %v34
    %2772 = vmatprep.subr.mxu0 0.0
    %2773 = vmatpush1.msra.mxu0 %v35
    %2774 = vmatprep.subr.mxu0 0.0
    %2775 = vmatpush1.msra.mxu0 %v36
    %2776 = vmatprep.subr.mxu0 0.0
    %2777 = vmatpush1.msra.mxu0 %v37
    %2778 = vmatprep.subr.mxu0 0.0
    %2779 = vmatpush1.msra.mxu0 %v38
    %2780 = vmatprep.subr.mxu0 0.0
    %2781 = vmatpush1.msra.mxu0 %v39
    %2782 = vmatprep.subr.mxu0 0.0
    %2783 = vmatpush1.msra.mxu0 %v40
    %2784 = vmatprep.subr.mxu0 0.0
    %2785 = vmatpush1.msra.mxu0 %v41
    %2786 = vmatprep.subr.mxu0 0.0
    %2787 = vmatpush1.msra.mxu0 %v42
    %2788 = vmatprep.subr.mxu0 0.0
    %2789 = vmatpush1.msra.mxu0 %v51
    %2790 = vmatprep.subr.mxu0 0.0
    %2791 = vmatpush1.msra.mxu0 0.0
    %2792 = vmatprep.subr.mxu0 0.0
    %2793 = vmatpush1.msra.mxu0 0.0
    %2794 = vmatprep.subr.mxu0 0.0
    %2795 = vmatpush1.msra.mxu0 0.0
    %2796 = vmatprep.subr.mxu0 0.0
    %2797 = vmatpush1.msra.mxu0 0.0
    %2798 = vmatprep.subr.mxu0 0.0
    %2799 = vmatpush1.msra.mxu0 0.0
    %2800 = vmatprep.subr.mxu0 0.0
    %2801 = vmatpush1.msra.mxu0 0.0
    %2802 = vmatprep.subr.mxu0 0.0
    %2803 = vmatpush1.msra.mxu0 0.0
    %2804 = vmatprep.subr.mxu0 0.0
    %2805 = vmatpush1.msra.mxu0 0.0
    %2806 = vmatprep.subr.mxu0 0.0
    %2807 = vmatpush1.msra.mxu0 0.0
    %2808 = vmatprep.subr.mxu0 0.0
    %2809 = vmatpush1.msra.mxu0 0.0
    %2810 = vmatprep.subr.mxu0 0.0
    %2811 = vmatpush1.msra.mxu0 0.0
    %2812 = vmatprep.subr.mxu0 0.0
    %2813 = vmatpush1.msra.mxu0 0.0
    %2814 = vmatprep.subr.mxu0 0.0
    %2815 = vmatpush1.msra.mxu0 0.0
    %2816 = vmatprep.subr.mxu0 0.0
    %2817 = vmatpush1.msra.mxu0 0.0
    %2818 = vmatprep.subr.mxu0 0.0
    %2819 = vmatpush1.msra.mxu0 0.0
    %2820 = vmatprep.subr.mxu0 0.0
    %2821 = vmatpush1.msra.mxu0 0.0
    %2822 = vmatprep.subr.mxu0 0.0
    %2823 = vmatpush1.msra.mxu0 0.0
    %2824 = vmatprep.subr.mxu0 0.0
    %2825 = vmatpush1.msra.mxu0 0.0
    %2826 = vmatprep.subr.mxu0 0.0
    %2827 = vmatpush1.msra.mxu0 0.0
    %2828 = vmatprep.subr.mxu0 0.0
    %2829 = vmatpush1.msra.mxu0 0.0
    %2830 = vmatprep.subr.mxu0 0.0
    %2831 = vmatpush1.msra.mxu0 0.0
    %2832 = vmatprep.mubr.f32.mxu0 0.0
    %2833 = vmatmul.mubr.f32.gmra.mrb[0].mxu0 %v2766
    %v2834 = vpop.f32.mrb[0].mxu0
    %v2835 = vadd.f32 0.0, %v2834
    %v2836 = vpop.f32.mrb[0].mxu0
    %2837 = vdwg.mxu0
    %v2838 = vld [vmem:[%s0 + $0x10] sm:$0xf]
    %v2841 = vunpack.c.l.s4 1983009808
    %v2842 = vunpack.c.0.s8 %v2841
    %v2843 = vlaneseq
    %v2844 = vshrl.u32 %v2843, 7
    %v2845 = vsub.s32 %v2842, %v2844
    %v2846 = vrot.slane %v2838, %v2845
    %v2847 = vcombine.high %v2846, %v2846
    %2848 = vrot.lane.b32.xlu0 %v2846, 64
    %v2849 = vpop.permute.xlu0 %2848
    %2850 = vrot.lane.b32.xlu0 %v2847, 64
    %v2851 = vpop.permute.xlu0 %2850
    %v2852 = vsel %vm218, %v2849, %v2851
    %v2853 = vsel %vm45, %v2852, 0
    %2855 = vmatprep.subr.mxu0 0.0
    %2856 = vmatpush1.msra.mxu0 %v33
    %2857 = vmatprep.subr.mxu0 0.0
    %2858 = vmatpush1.msra.mxu0 %v34
    %2859 = vmatprep.subr.mxu0 0.0
    %2860 = vmatpush1.msra.mxu0 %v35
    %2861 = vmatprep.subr.mxu0 0.0
    %2862 = vmatpush1.msra.mxu0 %v36
    %2863 = vmatprep.subr.mxu0 0.0
    %2864 = vmatpush1.msra.mxu0 %v37
    %2865 = vmatprep.subr.mxu0 0.0
    %2866 = vmatpush1.msra.mxu0 %v38
    %2867 = vmatprep.subr.mxu0 0.0
    %2868 = vmatpush1.msra.mxu0 %v39
    %2869 = vmatprep.subr.mxu0 0.0
    %2870 = vmatpush1.msra.mxu0 %v40
    %2871 = vmatprep.subr.mxu0 0.0
    %2872 = vmatpush1.msra.mxu0 %v41
    %2873 = vmatprep.subr.mxu0 0.0
    %2874 = vmatpush1.msra.mxu0 %v42
    %2875 = vmatprep.subr.mxu0 0.0
    %2876 = vmatpush1.msra.mxu0 %v51
    %2877 = vmatprep.subr.mxu0 0.0
    %2878 = vmatpush1.msra.mxu0 0.0
    %2879 = vmatprep.subr.mxu0 0.0
    %2880 = vmatpush1.msra.mxu0 0.0
    %2881 = vmatprep.subr.mxu0 0.0
    %2882 = vmatpush1.msra.mxu0 0.0
    %2883 = vmatprep.subr.mxu0 0.0
    %2884 = vmatpush1.msra.mxu0 0.0
    %2885 = vmatprep.subr.mxu0 0.0
    %2886 = vmatpush1.msra.mxu0 0.0
    %2887 = vmatprep.subr.mxu0 0.0
    %2888 = vmatpush1.msra.mxu0 0.0
    %2889 = vmatprep.subr.mxu0 0.0
    %2890 = vmatpush1.msra.mxu0 0.0
    %2891 = vmatprep.subr.mxu0 0.0
    %2892 = vmatpush1.msra.mxu0 0.0
    %2893 = vmatprep.subr.mxu0 0.0
    %2894 = vmatpush1.msra.mxu0 0.0
    %2895 = vmatprep.subr.mxu0 0.0
    %2896 = vmatpush1.msra.mxu0 0.0
    %2897 = vmatprep.subr.mxu0 0.0
    %2898 = vmatpush1.msra.mxu0 0.0
    %2899 = vmatprep.subr.mxu0 0.0
    %2900 = vmatpush1.msra.mxu0 0.0
    %2901 = vmatprep.subr.mxu0 0.0
    %2902 = vmatpush1.msra.mxu0 0.0
    %2903 = vmatprep.subr.mxu0 0.0
    %2904 = vmatpush1.msra.mxu0 0.0
    %2905 = vmatprep.subr.mxu0 0.0
    %2906 = vmatpush1.msra.mxu0 0.0
    %2907 = vmatprep.subr.mxu0 0.0
    %2908 = vmatpush1.msra.mxu0 0.0
    %2909 = vmatprep.subr.mxu0 0.0
    %2910 = vmatpush1.msra.mxu0 0.0
    %2911 = vmatprep.subr.mxu0 0.0
    %2912 = vmatpush1.msra.mxu0 0.0
    %2913 = vmatprep.subr.mxu0 0.0
    %2914 = vmatpush1.msra.mxu0 0.0
    %2915 = vmatprep.subr.mxu0 0.0
    %2916 = vmatpush1.msra.mxu0 0.0
    %2917 = vmatprep.subr.mxu0 0.0
    %2918 = vmatpush1.msra.mxu0 0.0
    %2919 = vmatprep.mubr.f32.mxu0 0.0
    %2920 = vmatmul.mubr.f32.gmra.mrb[0].mxu0 %v2853
    %v2921 = vpop.f32.mrb[0].mxu0
    %v2922 = vadd.f32 0.0, %v2921
    %v2923 = vpop.f32.mrb[0].mxu0
    %2924 = vdwg.mxu0
    %v2925 = vld [vmem:[%s0 + $0x10] sm:$0xf]
    %v2928 = vunpack.c.l.s4 1983009808
    %v2929 = vunpack.c.0.s8 %v2928
    %v2930 = vlaneseq
    %v2931 = vshrl.u32 %v2930, 7
    %v2932 = vsub.s32 %v2929, %v2931
    %v2933 = vrot.slane %v2925, %v2932
    %v2934 = vcombine.high %v2933, %v2933
    %2935 = vrot.lane.b32.xlu0 %v2933, 32
    %v2936 = vpop.permute.xlu0 %2935
    %2937 = vrot.lane.b32.xlu0 %v2934, 32
    %v2938 = vpop.permute.xlu0 %2937
    %v2939 = vsel %vm306, %v2936, %v2938
    %v2940 = vsel %vm45, %v2939, 0
    %2942 = vmatprep.subr.mxu0 0.0
    %2943 = vmatpush1.msra.mxu0 %v33
    %2944 = vmatprep.subr.mxu0 0.0
    %2945 = vmatpush1.msra.mxu0 %v34
    %2946 = vmatprep.subr.mxu0 0.0
    %2947 = vmatpush1.msra.mxu0 %v35
    %2948 = vmatprep.subr.mxu0 0.0
    %2949 = vmatpush1.msra.mxu0 %v36
    %2950 = vmatprep.subr.mxu0 0.0
    %2951 = vmatpush1.msra.mxu0 %v37
    %2952 = vmatprep.subr.mxu0 0.0
    %2953 = vmatpush1.msra.mxu0 %v38
    %2954 = vmatprep.subr.mxu0 0.0
    %2955 = vmatpush1.msra.mxu0 %v39
    %2956 = vmatprep.subr.mxu0 0.0
    %2957 = vmatpush1.msra.mxu0 %v40
    %2958 = vmatprep.subr.mxu0 0.0
    %2959 = vmatpush1.msra.mxu0 %v41
    %2960 = vmatprep.subr.mxu0 0.0
    %2961 = vmatpush1.msra.mxu0 %v42
    %2962 = vmatprep.subr.mxu0 0.0
    %2963 = vmatpush1.msra.mxu0 %v51
    %2964 = vmatprep.subr.mxu0 0.0
    %2965 = vmatpush1.msra.mxu0 0.0
    %2966 = vmatprep.subr.mxu0 0.0
    %2967 = vmatpush1.msra.mxu0 0.0
    %2968 = vmatprep.subr.mxu0 0.0
    %2969 = vmatpush1.msra.mxu0 0.0
    %2970 = vmatprep.subr.mxu0 0.0
    %2971 = vmatpush1.msra.mxu0 0.0
    %2972 = vmatprep.subr.mxu0 0.0
    %2973 = vmatpush1.msra.mxu0 0.0
    %2974 = vmatprep.subr.mxu0 0.0
    %2975 = vmatpush1.msra.mxu0 0.0
    %2976 = vmatprep.subr.mxu0 0.0
    %2977 = vmatpush1.msra.mxu0 0.0
    %2978 = vmatprep.subr.mxu0 0.0
    %2979 = vmatpush1.msra.mxu0 0.0
    %2980 = vmatprep.subr.mxu0 0.0
    %2981 = vmatpush1.msra.mxu0 0.0
    %2982 = vmatprep.subr.mxu0 0.0
    %2983 = vmatpush1.msra.mxu0 0.0
    %2984 = vmatprep.subr.mxu0 0.0
    %2985 = vmatpush1.msra.mxu0 0.0
    %2986 = vmatprep.subr.mxu0 0.0
    %2987 = vmatpush1.msra.mxu0 0.0
    %2988 = vmatprep.subr.mxu0 0.0
    %2989 = vmatpush1.msra.mxu0 0.0
    %2990 = vmatprep.subr.mxu0 0.0
    %2991 = vmatpush1.msra.mxu0 0.0
    %2992 = vmatprep.subr.mxu0 0.0
    %2993 = vmatpush1.msra.mxu0 0.0
    %2994 = vmatprep.subr.mxu0 0.0
    %2995 = vmatpush1.msra.mxu0 0.0
    %2996 = vmatprep.subr.mxu0 0.0
    %2997 = vmatpush1.msra.mxu0 0.0
    %2998 = vmatprep.subr.mxu0 0.0
    %2999 = vmatpush1.msra.mxu0 0.0
    %3000 = vmatprep.subr.mxu0 0.0
    %3001 = vmatpush1.msra.mxu0 0.0
    %3002 = vmatprep.subr.mxu0 0.0
    %3003 = vmatpush1.msra.mxu0 0.0
    %3004 = vmatprep.subr.mxu0 0.0
    %3005 = vmatpush1.msra.mxu0 0.0
    %3006 = vmatprep.mubr.f32.mxu0 0.0
    %3007 = vmatmul.mubr.f32.gmra.mrb[0].mxu0 %v2940
    %v3008 = vpop.f32.mrb[0].mxu0
    %v3009 = vadd.f32 0.0, %v3008
    %v3010 = vpop.f32.mrb[0].mxu0
    %3011 = vdwg.mxu0
    %v3012 = vld [vmem:[%s0 + $0x12] sm:$0x3]
    %v3014 = vsel %vm45, %v3012, 0
    %3016 = vmatprep.subr.mxu0 0.0
    %3017 = vmatpush1.msra.mxu0 %v33
    %3018 = vmatprep.subr.mxu0 0.0
    %3019 = vmatpush1.msra.mxu0 %v34
    %3020 = vmatprep.subr.mxu0 0.0
    %3021 = vmatpush1.msra.mxu0 %v35
    %3022 = vmatprep.subr.mxu0 0.0
    %3023 = vmatpush1.msra.mxu0 %v36
    %3024 = vmatprep.subr.mxu0 0.0
    %3025 = vmatpush1.msra.mxu0 %v37
    %3026 = vmatprep.subr.mxu0 0.0
    %3027 = vmatpush1.msra.mxu0 %v38
    %3028 = vmatprep.subr.mxu0 0.0
    %3029 = vmatpush1.msra.mxu0 %v39
    %3030 = vmatprep.subr.mxu0 0.0
    %3031 = vmatpush1.msra.mxu0 %v40
    %3032 = vmatprep.subr.mxu0 0.0
    %3033 = vmatpush1.msra.mxu0 %v41
    %3034 = vmatprep.subr.mxu0 0.0
    %3035 = vmatpush1.msra.mxu0 %v42
    %3036 = vmatprep.subr.mxu0 0.0
    %3037 = vmatpush1.msra.mxu0 %v51
    %3038 = vmatprep.subr.mxu0 0.0
    %3039 = vmatpush1.msra.mxu0 0.0
    %3040 = vmatprep.subr.mxu0 0.0
    %3041 = vmatpush1.msra.mxu0 0.0
    %3042 = vmatprep.subr.mxu0 0.0
    %3043 = vmatpush1.msra.mxu0 0.0
    %3044 = vmatprep.subr.mxu0 0.0
    %3045 = vmatpush1.msra.mxu0 0.0
    %3046 = vmatprep.subr.mxu0 0.0
    %3047 = vmatpush1.msra.mxu0 0.0
    %3048 = vmatprep.subr.mxu0 0.0
    %3049 = vmatpush1.msra.mxu0 0.0
    %3050 = vmatprep.subr.mxu0 0.0
    %3051 = vmatpush1.msra.mxu0 0.0
    %3052 = vmatprep.subr.mxu0 0.0
    %3053 = vmatpush1.msra.mxu0 0.0
    %3054 = vmatprep.subr.mxu0 0.0
    %3055 = vmatpush1.msra.mxu0 0.0
    %3056 = vmatprep.subr.mxu0 0.0
    %3057 = vmatpush1.msra.mxu0 0.0
    %3058 = vmatprep.subr.mxu0 0.0
    %3059 = vmatpush1.msra.mxu0 0.0
    %3060 = vmatprep.subr.mxu0 0.0
    %3061 = vmatpush1.msra.mxu0 0.0
    %3062 = vmatprep.subr.mxu0 0.0
    %3063 = vmatpush1.msra.mxu0 0.0
    %3064 = vmatprep.subr.mxu0 0.0
    %3065 = vmatpush1.msra.mxu0 0.0
    %3066 = vmatprep.subr.mxu0 0.0
    %3067 = vmatpush1.msra.mxu0 0.0
    %3068 = vmatprep.subr.mxu0 0.0
    %3069 = vmatpush1.msra.mxu0 0.0
    %3070 = vmatprep.subr.mxu0 0.0
    %3071 = vmatpush1.msra.mxu0 0.0
    %3072 = vmatprep.subr.mxu0 0.0
    %3073 = vmatpush1.msra.mxu0 0.0
    %3074 = vmatprep.subr.mxu0 0.0
    %3075 = vmatpush1.msra.mxu0 0.0
    %3076 = vmatprep.subr.mxu0 0.0
    %3077 = vmatpush1.msra.mxu0 0.0
    %3078 = vmatprep.subr.mxu0 0.0
    %3079 = vmatpush1.msra.mxu0 0.0
    %3080 = vmatprep.mubr.f32.mxu0 0.0
    %3081 = vmatmul.mubr.f32.gmra.mrb[0].mxu0 %v3014
    %v3082 = vpop.f32.mrb[0].mxu0
    %v3083 = vadd.f32 0.0, %v3082
    %v3084 = vpop.f32.mrb[0].mxu0
    %3085 = vdwg.mxu0
    %3087 = vrot.lane.b32.xlu0 %v201, 3
    %v3088 = vpop.permute.xlu0 %3087
    %3091 = vrot.lane.b32.xlu0 %v289, 6
    %v3092 = vpop.permute.xlu0 %3091
    %3095 = vrot.lane.b32.xlu0 %v377, 9
    %v3096 = vpop.permute.xlu0 %3095
    %3099 = vrot.lane.b32.xlu0 %v451, 12
    %v3100 = vpop.permute.xlu0 %3099
    %3103 = vrot.lane.b32.xlu0 %v532, 15
    %v3104 = vpop.permute.xlu0 %3103
    %3107 = vrot.lane.b32.xlu0 %v619, 18
    %v3108 = vpop.permute.xlu0 %3107
    %3111 = vrot.lane.b32.xlu0 %v706, 21
    %v3112 = vpop.permute.xlu0 %3111
    %3115 = vrot.lane.b32.xlu0 %v780, 24
    %v3116 = vpop.permute.xlu0 %3115
    %3119 = vrot.lane.b32.xlu0 %v861, 27
    %v3120 = vpop.permute.xlu0 %3119
    %3123 = vrot.lane.b32.xlu0 %v948, 30
    %v3124 = vpop.permute.xlu0 %3123
    %3127 = vrot.lane.b32.xlu0 %v1035, 33
    %v3128 = vpop.permute.xlu0 %3127
    %3131 = vrot.lane.b32.xlu0 %v1109, 36
    %v3132 = vpop.permute.xlu0 %3131
    %3135 = vrot.lane.b32.xlu0 %v1190, 39
    %v3136 = vpop.permute.xlu0 %3135
    %3139 = vrot.lane.b32.xlu0 %v1277, 42
    %v3140 = vpop.permute.xlu0 %3139
    %3143 = vrot.lane.b32.xlu0 %v1364, 45
    %v3144 = vpop.permute.xlu0 %3143
    %vm3146 = vcmask 23552
    %v3147 = vsel %vm3146, %v120, %v3088
    %vm3148 = vcmask 48128
    %v3149 = vsel %vm3148, %v3147, %v3092
    %vm3150 = vcmask 72704
    %v3151 = vsel %vm3150, %v3149, %v3096
    %vm3152 = vcmask 97280
    %v3153 = vsel %vm3152, %v3151, %v3100
    %vm3154 = vcmask 121856
    %v3155 = vsel %vm3154, %v3153, %v3104
    %vm3156 = vcmask 146432
    %v3157 = vsel %vm3156, %v3155, %v3108
    %vm3158 = vcmask 171008
    %v3159 = vsel %vm3158, %v3157, %v3112
    %vm3160 = vcmask 195584
    %v3161 = vsel %vm3160, %v3159, %v3116
    %vm3162 = vcmask 220160
    %v3163 = vsel %vm3162, %v3161, %v3120
    %vm3164 = vcmask 244736
    %v3165 = vsel %vm3164, %v3163, %v3124
    %vm3166 = vcmask 269312
    %v3167 = vsel %vm3166, %v3165, %v3128
    %vm3168 = vcmask 293888
    %v3169 = vsel %vm3168, %v3167, %v3132
    %vm3170 = vcmask 318464
    %v3171 = vsel %vm3170, %v3169, %v3136
    %vm3172 = vcmask 343040
    %v3173 = vsel %vm3172, %v3171, %v3140
    %vm3174 = vcmask 367616
    %v3175 = vsel %vm3174, %v3173, %v3144
    %3177 = vrot.lane.b32.xlu0 %v1519, 3
    %v3178 = vpop.permute.xlu0 %3177
    %3181 = vrot.lane.b32.xlu0 %v1606, 6
    %v3182 = vpop.permute.xlu0 %3181
    %3185 = vrot.lane.b32.xlu0 %v1693, 9
    %v3186 = vpop.permute.xlu0 %3185
    %3189 = vrot.lane.b32.xlu0 %v1767, 12
    %v3190 = vpop.permute.xlu0 %3189
    %3193 = vrot.lane.b32.xlu0 %v1848, 15
    %v3194 = vpop.permute.xlu0 %3193
    %3197 = vrot.lane.b32.xlu0 %v1935, 18
    %v3198 = vpop.permute.xlu0 %3197
    %3201 = vrot.lane.b32.xlu0 %v2022, 21
    %v3202 = vpop.permute.xlu0 %3201
    %3205 = vrot.lane.b32.xlu0 %v2096, 24
    %v3206 = vpop.permute.xlu0 %3205
    %3209 = vrot.lane.b32.xlu0 %v2177, 27
    %v3210 = vpop.permute.xlu0 %3209
    %3213 = vrot.lane.b32.xlu0 %v2264, 30
    %v3214 = vpop.permute.xlu0 %3213
    %3217 = vrot.lane.b32.xlu0 %v2351, 33
    %v3218 = vpop.permute.xlu0 %3217
    %3221 = vrot.lane.b32.xlu0 %v2425, 36
    %v3222 = vpop.permute.xlu0 %3221
    %3225 = vrot.lane.b32.xlu0 %v2506, 39
    %v3226 = vpop.permute.xlu0 %3225
    %3229 = vrot.lane.b32.xlu0 %v2593, 42
    %v3230 = vpop.permute.xlu0 %3229
    %3233 = vrot.lane.b32.xlu0 %v2680, 45
    %v3234 = vpop.permute.xlu0 %3233
    %v3236 = vsel %vm3146, %v1438, %v3178
    %v3237 = vsel %vm3148, %v3236, %v3182
    %v3238 = vsel %vm3150, %v3237, %v3186
    %v3239 = vsel %vm3152, %v3238, %v3190
    %v3240 = vsel %vm3154, %v3239, %v3194
    %v3241 = vsel %vm3156, %v3240, %v3198
    %v3242 = vsel %vm3158, %v3241, %v3202
    %v3243 = vsel %vm3160, %v3242, %v3206
    %v3244 = vsel %vm3162, %v3243, %v3210
    %v3245 = vsel %vm3164, %v3244, %v3214
    %v3246 = vsel %vm3166, %v3245, %v3218
    %v3247 = vsel %vm3168, %v3246, %v3222
    %v3248 = vsel %vm3170, %v3247, %v3226
    %v3249 = vsel %vm3172, %v3248, %v3230
    %v3250 = vsel %vm3174, %v3249, %v3234
    %3252 = vrot.lane.b32.xlu0 %v2835, 3
    %v3253 = vpop.permute.xlu0 %3252
    %3256 = vrot.lane.b32.xlu0 %v2922, 6
    %v3257 = vpop.permute.xlu0 %3256
    %3260 = vrot.lane.b32.xlu0 %v3009, 9
    %v3261 = vpop.permute.xlu0 %3260
    %3264 = vrot.lane.b32.xlu0 %v3083, 12
    %v3265 = vpop.permute.xlu0 %3264
    %v3267 = vsel %vm3146, %v2754, %v3253
    %v3268 = vsel %vm3148, %v3267, %v3257
    %v3269 = vsel %vm3150, %v3268, %v3261
    %v3270 = vsel %vm3152, %v3269, %v3265
    %3272 = vrot.lane.b32.xlu0 %v3250, 48
    %v3273 = vpop.permute.xlu0 %3272
    %3276 = vrot.lane.b32.xlu0 %v3270, 96
    %v3277 = vpop.permute.xlu0 %3276
    %vm3279 = vcmask 392192
    %v3280 = vsel %vm3279, %v3175, %v3273
    %vm3281 = vcmask 785408
    %v3282 = vsel %vm3281, %v3280, %v3277
    %v3283 = vld [vmem:[%s2] sm:$0x1]
    %v3285 = vlaneseq
    %v3286 = vshrl.u32 %v3285, 7
    %v3287 = vsub.s32 0, %v3286
    %v3288 = vrot.slane %v3283, %v3287
    %v3290 = vadd.f32 %v3282, %v3288
    %v3291 = vmax.f32 %v3290, 0.0
    %v3292 = vld [vmem:[%s3] sm:$0xff]
    %v3293 = vld [vmem:[%s3 + $0x8] sm:$0xff]
    %v3294 = vld [vmem:[%s3 + $0x10] sm:$0xff]
    %v3295 = vld [vmem:[%s3 + $0x18] sm:$0xff]
    %v3296 = vld [vmem:[%s3 + $0x20] sm:$0xff]
    %v3297 = vld [vmem:[%s3 + $0x28] sm:$0xff]
    %v3298 = vld [vmem:[%s3 + $0x30] sm:$0xff]
    %v3299 = vld [vmem:[%s3 + $0x38] sm:$0xff]
    %v3300 = vld [vmem:[%s3 + $0x40] sm:$0xff]
    %v3301 = vld [vmem:[%s3 + $0x48] sm:$0xff]
    %v3302 = vld [vmem:[%s3 + $0x50] sm:$0xff]
    %v3303 = vld [vmem:[%s3 + $0x58] sm:$0xff]
    %v3304 = vld [vmem:[%s3 + $0x60] sm:$0xff]
    %v3305 = vld [vmem:[%s3 + $0x68] sm:$0x7f]
    %v3306 = vld [vmem:[%s4] sm:$0x1]
    %v3308 = vlaneseq
    %v3309 = vshrl.u32 %v3308, 7
    %v3310 = vsub.s32 0, %v3309
    %v3311 = vrot.slane %v3306, %v3310
    %vm3313 = vcmask 908288
    %v3315 = vsel %vm3313, %v3291, 0
    %vm3317 = vcmask 1046528
    %v3319 = vsel %vm3317, %v3305, 0
    %3321 = vmatprep.subr.mxu0 0.0
    %3322 = vmatpush1.msra.mxu0 %v3292
    %3323 = vmatprep.subr.mxu0 0.0
    %3324 = vmatpush1.msra.mxu0 %v3293
    %3325 = vmatprep.subr.mxu0 0.0
    %3326 = vmatpush1.msra.mxu0 %v3294
    %3327 = vmatprep.subr.mxu0 0.0
    %3328 = vmatpush1.msra.mxu0 %v3295
    %3329 = vmatprep.subr.mxu0 0.0
    %3330 = vmatpush1.msra.mxu0 %v3296
    %3331 = vmatprep.subr.mxu0 0.0
    %3332 = vmatpush1.msra.mxu0 %v3297
    %3333 = vmatprep.subr.mxu0 0.0
    %3334 = vmatpush1.msra.mxu0 %v3298
    %3335 = vmatprep.subr.mxu0 0.0
    %3336 = vmatpush1.msra.mxu0 %v3299
    %3337 = vmatprep.subr.mxu0 0.0
    %3338 = vmatpush1.msra.mxu0 %v3300
    %3339 = vmatprep.subr.mxu0 0.0
    %3340 = vmatpush1.msra.mxu0 %v3301
    %3341 = vmatprep.subr.mxu0 0.0
    %3342 = vmatpush1.msra.mxu0 %v3302
    %3343 = vmatprep.subr.mxu0 0.0
    %3344 = vmatpush1.msra.mxu0 %v3303
    %3345 = vmatprep.subr.mxu0 0.0
    %3346 = vmatpush1.msra.mxu0 %v3304
    %3347 = vmatprep.subr.mxu0 0.0
    %3348 = vmatpush1.msra.mxu0 %v3319
    %3349 = vmatprep.subr.mxu0 0.0
    %3350 = vmatpush1.msra.mxu0 0.0
    %3351 = vmatprep.subr.mxu0 0.0
    %3352 = vmatpush1.msra.mxu0 0.0
    %3353 = vmatprep.subr.mxu0 0.0
    %3354 = vmatpush1.msra.mxu0 0.0
    %3355 = vmatprep.subr.mxu0 0.0
    %3356 = vmatpush1.msra.mxu0 0.0
    %3357 = vmatprep.subr.mxu0 0.0
    %3358 = vmatpush1.msra.mxu0 0.0
    %3359 = vmatprep.subr.mxu0 0.0
    %3360 = vmatpush1.msra.mxu0 0.0
    %3361 = vmatprep.subr.mxu0 0.0
    %3362 = vmatpush1.msra.mxu0 0.0
    %3363 = vmatprep.subr.mxu0 0.0
    %3364 = vmatpush1.msra.mxu0 0.0
    %3365 = vmatprep.subr.mxu0 0.0
    %3366 = vmatpush1.msra.mxu0 0.0
    %3367 = vmatprep.subr.mxu0 0.0
    %3368 = vmatpush1.msra.mxu0 0.0
    %3369 = vmatprep.subr.mxu0 0.0
    %3370 = vmatpush1.msra.mxu0 0.0
    %3371 = vmatprep.subr.mxu0 0.0
    %3372 = vmatpush1.msra.mxu0 0.0
    %3373 = vmatprep.subr.mxu0 0.0
    %3374 = vmatpush1.msra.mxu0 0.0
    %3375 = vmatprep.subr.mxu0 0.0
    %3376 = vmatpush1.msra.mxu0 0.0
    %3377 = vmatprep.subr.mxu0 0.0
    %3378 = vmatpush1.msra.mxu0 0.0
    %3379 = vmatprep.subr.mxu0 0.0
    %3380 = vmatpush1.msra.mxu0 0.0
    %3381 = vmatprep.subr.mxu0 0.0
    %3382 = vmatpush1.msra.mxu0 0.0
    %3383 = vmatprep.subr.mxu0 0.0
    %3384 = vmatpush1.msra.mxu0 0.0
    %3385 = vmatprep.mubr.f32.mxu0 0.0
    %3386 = vmatmul.mubr.f32.gmra.mrb[0].mxu0 %v3315
    %v3387 = vpop.f32.mrb[0].mxu0
    %v3388 = vadd.f32 %v3311, %v3387
    %v3389 = vpop.f32.mrb[0].mxu0
    %3390 = vdwg.mxu0
    %v3391 = vmax.f32 %v3388, 0.0
    %v3392 = vld [vmem:[%s5] sm:$0xff]
    %v3393 = vld [vmem:[%s5 + $0x8] sm:$0xff]
    %v3394 = vld [vmem:[%s5 + $0x10] sm:$0xf]
    %v3395 = vld [vmem:[%s6] sm:$0x1]
    %v3397 = vlaneseq
    %v3398 = vshrl.u32 %v3397, 7
    %v3399 = vsub.s32 0, %v3398
    %v3400 = vrot.slane %v3395, %v3399
    %vm3402 = vcmask 162816
    %v3404 = vsel %vm3402, %v3391, 0
    %vm3406 = vcmask 1043456
    %v3408 = vsel %vm3406, %v3394, 0
    %3410 = vmatprep.subr.mxu0 0.0
    %3411 = vmatpush1.msra.mxu0 %v3392
    %3412 = vmatprep.subr.mxu0 0.0
    %3413 = vmatpush1.msra.mxu0 %v3393
    %3414 = vmatprep.subr.mxu0 0.0
    %3415 = vmatpush1.msra.mxu0 %v3408
    %3416 = vmatprep.subr.mxu0 0.0
    %3417 = vmatpush1.msra.mxu0 0.0
    %3418 = vmatprep.subr.mxu0 0.0
    %3419 = vmatpush1.msra.mxu0 0.0
    %3420 = vmatprep.subr.mxu0 0.0
    %3421 = vmatpush1.msra.mxu0 0.0
    %3422 = vmatprep.subr.mxu0 0.0
    %3423 = vmatpush1.msra.mxu0 0.0
    %3424 = vmatprep.subr.mxu0 0.0
    %3425 = vmatpush1.msra.mxu0 0.0
    %3426 = vmatprep.subr.mxu0 0.0
    %3427 = vmatpush1.msra.mxu0 0.0
    %3428 = vmatprep.subr.mxu0 0.0
    %3429 = vmatpush1.msra.mxu0 0.0
    %3430 = vmatprep.subr.mxu0 0.0
    %3431 = vmatpush1.msra.mxu0 0.0
    %3432 = vmatprep.subr.mxu0 0.0
    %3433 = vmatpush1.msra.mxu0 0.0
    %3434 = vmatprep.subr.mxu0 0.0
    %3435 = vmatpush1.msra.mxu0 0.0
    %3436 = vmatprep.subr.mxu0 0.0
    %3437 = vmatpush1.msra.mxu0 0.0
    %3438 = vmatprep.subr.mxu0 0.0
    %3439 = vmatpush1.msra.mxu0 0.0
    %3440 = vmatprep.subr.mxu0 0.0
    %3441 = vmatpush1.msra.mxu0 0.0
    %3442 = vmatprep.subr.mxu0 0.0
    %3443 = vmatpush1.msra.mxu0 0.0
    %3444 = vmatprep.subr.mxu0 0.0
    %3445 = vmatpush1.msra.mxu0 0.0
    %3446 = vmatprep.subr.mxu0 0.0
    %3447 = vmatpush1.msra.mxu0 0.0
    %3448 = vmatprep.subr.mxu0 0.0
    %3449 = vmatpush1.msra.mxu0 0.0
    %3450 = vmatprep.subr.mxu0 0.0
    %3451 = vmatpush1.msra.mxu0 0.0
    %3452 = vmatprep.subr.mxu0 0.0
    %3453 = vmatpush1.msra.mxu0 0.0
    %3454 = vmatprep.subr.mxu0 0.0
    %3455 = vmatpush1.msra.mxu0 0.0
    %3456 = vmatprep.subr.mxu0 0.0
    %3457 = vmatpush1.msra.mxu0 0.0
    %3458 = vmatprep.subr.mxu0 0.0
    %3459 = vmatpush1.msra.mxu0 0.0
    %3460 = vmatprep.subr.mxu0 0.0
    %3461 = vmatpush1.msra.mxu0 0.0
    %3462 = vmatprep.subr.mxu0 0.0
    %3463 = vmatpush1.msra.mxu0 0.0
    %3464 = vmatprep.subr.mxu0 0.0
    %3465 = vmatpush1.msra.mxu0 0.0
    %3466 = vmatprep.subr.mxu0 0.0
    %3467 = vmatpush1.msra.mxu0 0.0
    %3468 = vmatprep.subr.mxu0 0.0
    %3469 = vmatpush1.msra.mxu0 0.0
    %3470 = vmatprep.subr.mxu0 0.0
    %3471 = vmatpush1.msra.mxu0 0.0
    %3472 = vmatprep.subr.mxu0 0.0
    %3473 = vmatpush1.msra.mxu0 0.0
    %3474 = vmatprep.mubr.f32.mxu0 0.0
    %3475 = vmatmul.mubr.f32.gmra.mrb[0].mxu0 %v3404
    %v3476 = vpop.f32.mrb[0].mxu0
    %v3477 = vadd.f32 %v3400, %v3476
    %v3478 = vpop.f32.mrb[0].mxu0
    %3479 = vdwg.mxu0
    %v3480 = vmax.f32 %v3477, 0.0
    %v3481 = vld [vmem:[%s7] sm:$0xff]
    %v3482 = vld [vmem:[%s7 + $0x8] sm:$0x3]
    %v3483 = vld [vmem:[%s8] sm:$0x1]
    %v3485 = vlaneseq
    %v3486 = vshrl.u32 %v3485, 7
    %v3487 = vsub.s32 0, %v3486
    %v3488 = vrot.slane %v3483, %v3487
    %vm3490 = vcmask 80896
    %v3492 = vsel %vm3490, %v3480, 0
    %vm3494 = vcmask 1041408
    %v3496 = vsel %vm3494, %v3482, 0
    %3498 = vmatprep.subr.mxu0 0.0
    %3499 = vmatpush1.msra.mxu0 %v3481
    %3500 = vmatprep.subr.mxu0 0.0
    %3501 = vmatpush1.msra.mxu0 %v3496
    %3502 = vmatprep.subr.mxu0 0.0
    %3503 = vmatpush1.msra.mxu0 0.0
    %3504 = vmatprep.subr.mxu0 0.0
    %3505 = vmatpush1.msra.mxu0 0.0
    %3506 = vmatprep.subr.mxu0 0.0
    %3507 = vmatpush1.msra.mxu0 0.0
    %3508 = vmatprep.subr.mxu0 0.0
    %3509 = vmatpush1.msra.mxu0 0.0
    %3510 = vmatprep.subr.mxu0 0.0
    %3511 = vmatpush1.msra.mxu0 0.0
    %3512 = vmatprep.subr.mxu0 0.0
    %3513 = vmatpush1.msra.mxu0 0.0
    %3514 = vmatprep.subr.mxu0 0.0
    %3515 = vmatpush1.msra.mxu0 0.0
    %3516 = vmatprep.subr.mxu0 0.0
    %3517 = vmatpush1.msra.mxu0 0.0
    %3518 = vmatprep.subr.mxu0 0.0
    %3519 = vmatpush1.msra.mxu0 0.0
    %3520 = vmatprep.subr.mxu0 0.0
    %3521 = vmatpush1.msra.mxu0 0.0
    %3522 = vmatprep.subr.mxu0 0.0
    %3523 = vmatpush1.msra.mxu0 0.0
    %3524 = vmatprep.subr.mxu0 0.0
    %3525 = vmatpush1.msra.mxu0 0.0
    %3526 = vmatprep.subr.mxu0 0.0
    %3527 = vmatpush1.msra.mxu0 0.0
    %3528 = vmatprep.subr.mxu0 0.0
    %3529 = vmatpush1.msra.mxu0 0.0
    %3530 = vmatprep.subr.mxu0 0.0
    %3531 = vmatpush1.msra.mxu0 0.0
    %3532 = vmatprep.subr.mxu0 0.0
    %3533 = vmatpush1.msra.mxu0 0.0
    %3534 = vmatprep.subr.mxu0 0.0
    %3535 = vmatpush1.msra.mxu0 0.0
    %3536 = vmatprep.subr.mxu0 0.0
    %3537 = vmatpush1.msra.mxu0 0.0
    %3538 = vmatprep.subr.mxu0 0.0
    %3539 = vmatpush1.msra.mxu0 0.0
    %3540 = vmatprep.subr.mxu0 0.0
    %3541 = vmatpush1.msra.mxu0 0.0
    %3542 = vmatprep.subr.mxu0 0.0
    %3543 = vmatpush1.msra.mxu0 0.0
    %3544 = vmatprep.subr.mxu0 0.0
    %3545 = vmatpush1.msra.mxu0 0.0
    %3546 = vmatprep.subr.mxu0 0.0
    %3547 = vmatpush1.msra.mxu0 0.0
    %3548 = vmatprep.subr.mxu0 0.0
    %3549 = vmatpush1.msra.mxu0 0.0
    %3550 = vmatprep.subr.mxu0 0.0
    %3551 = vmatpush1.msra.mxu0 0.0
    %3552 = vmatprep.subr.mxu0 0.0
    %3553 = vmatpush1.msra.mxu0 0.0
    %3554 = vmatprep.subr.mxu0 0.0
    %3555 = vmatpush1.msra.mxu0 0.0
    %3556 = vmatprep.subr.mxu0 0.0
    %3557 = vmatpush1.msra.mxu0 0.0
    %3558 = vmatprep.subr.mxu0 0.0
    %3559 = vmatpush1.msra.mxu0 0.0
    %3560 = vmatprep.subr.mxu0 0.0
    %3561 = vmatpush1.msra.mxu0 0.0
    %3562 = vmatprep.mubr.f32.mxu0 0.0
    %3563 = vmatmul.mubr.f32.gmra.mrb[0].mxu0 %v3492
    %v3564 = vpop.f32.mrb[0].mxu0
    %v3565 = vadd.f32 %v3488, %v3564
    %v3566 = vpop.f32.mrb[0].mxu0
    %3567 = vdwg.mxu0
    %vm3568 = vcmask 9216
    %3569 = vst.msk [vmem:[#allocation2] sm:$0x3] %vm3568, %v3565
    // Predicated region
    $region38: #{iegm_forward.1} parent=1 // pred_check
      _
    $region39: #{iegm_forward.1} parent=1 // pred_check_branch
      %3571 = sbr.rel (0) target = $region41
    $region40: #{iegm_forward.1} parent=1 // pred_region
      %s3573 = ssub.s32 32, 32
      %3574 = vsyncadd [#allocation3], %s3573
      %s3576 = sshll.u32 [#allocation2], 4
      %s3577 = int_to_ptr.vmem [resolvable:$true] %s3576
      %3579 = dma.vmem_to_hbm [thread:$0]  %s3577, 32, %s9, [#allocation3]
    $region41: #{iegm_forward.1} parent=1 // pred_fallthru
      _
    // Predicated region
    $region42: #{iegm_forward.1} parent=1 // pred_check
      _
    $region43: #{iegm_forward.1} parent=1 // pred_check_branch
      %3581 = sbr.rel (0) target = $region45
    $region44: #{iegm_forward.1} parent=1 // pred_region
      %3582 = dma.done [#allocation3], 32
    $region45: #{iegm_forward.1} parent=1 // pred_fallthru
      _
    %3583 = vsyncpa [#allocation3], 1

</llo_original>
